<compile_context>
chip_gen: v7x
topology: tpu7x:2x2x1
jax: 0.10.0
libtpu: 0.0.40
codegen_flags: <defaults>
</compile_context>

<pallas_src>
import functools

import jax
import jax.numpy as jnp
from jax import lax
from jax.experimental import pallas as pl
from jax.experimental.pallas import tpu as pltpu


_SQRT_HALF = 0.7071067811865476


# ----------------------------------------------------------------------------
# In-kernel helpers (operate on values already resident in VMEM/vregs)
# ----------------------------------------------------------------------------
def _layernorm(x, gamma, beta, eps):
    """Row-wise LayerNorm in f32. gamma/beta have shape (1, D)."""
    x = x.astype(jnp.float32)
    mean = jnp.mean(x, axis=-1, keepdims=True)
    var = jnp.mean(jnp.square(x - mean), axis=-1, keepdims=True)
    return (x - mean) * lax.rsqrt(var + eps) * gamma + beta


def _gelu(x):
    # exact (erf) GELU, matching nn.GELU() default
    return 0.5 * x * (1.0 + lax.erf(x * _SQRT_HALF))


# ----------------------------------------------------------------------------
# Single fused Pallas kernel: whole ViT forward for one batch element
# ----------------------------------------------------------------------------
def _vit_forward_kernel(*refs, num_layers, seq_len, heads, dim_head, scale,
                        ff_eps):
    (x_ref, pg1_ref, pb1_ref, pw_ref, pwb_ref, pg2_ref, pb2_ref,
     cls_ref, pos_ref) = refs[0:9]
    n_layer_refs = 11 * num_layers
    layer_refs = refs[9:9 + n_layer_refs]
    fln_g_ref, fln_b_ref, hw_ref, hb_ref = refs[9 + n_layer_refs:
                                                13 + n_layer_refs]
    o_ref = refs[13 + n_layer_refs]

    inner = heads * dim_head
    dim = pw_ref.shape[1]
    s_pad = pos_ref.shape[1]

    # ---- patch embedding: LN(patch_dim) -> Linear -> LN(dim) --------------
    xp = x_ref[0]                                              # (N, patch_dim)
    h = _layernorm(xp, pg1_ref[...], pb1_ref[...], 1e-5)
    e = jnp.dot(h, pw_ref[...],
                preferred_element_type=jnp.float32) + pwb_ref[...]
    e = _layernorm(e, pg2_ref[...], pb2_ref[...], 1e-5)        # (N, dim)

    # ---- [cls | patches | zero-pad] + positional embedding ----------------
    parts = [cls_ref[...].astype(jnp.float32), e]
    if s_pad > seq_len:
        parts.append(jnp.zeros((s_pad - seq_len, dim), jnp.float32))
    x = jnp.concatenate(parts, axis=0) + pos_ref[0]            # (s_pad, dim)
    # emb dropout p=0.0 -> no-op

    # key-padding mask, reused by every layer
    key_idx = lax.broadcasted_iota(jnp.int32, (1, 1, s_pad), 2)
    key_mask = key_idx < seq_len

    # ---- transformer layers ------------------------------------------------
    for l in range(num_layers):
        (ag_ref, ab_ref, qkv_w_ref, ow_ref, ob_ref,
         fg_ref, fb_ref, w1_ref, b1_ref, w2_ref, b2_ref) = (
            layer_refs[11 * l:11 * l + 11])

        # Attention (NOTE: reference applies NO residual around attention)
        h = _layernorm(x, ag_ref[...], ab_ref[...], 1e-5)
        qkv = jnp.dot(h, qkv_w_ref[...],
                      preferred_element_type=jnp.float32)      # (s_pad, 3*inner)

        def head_stack(base):
            # (heads, s_pad, dim_head), no host-side transpose copies
            return jnp.stack(
                [qkv[:, base + hh * dim_head: base + (hh + 1) * dim_head]
                 for hh in range(heads)], axis=0)

        q = head_stack(0)
        k = head_stack(inner)
        v = head_stack(2 * inner)

        # contract on d directly (no explicit k transpose), all heads at once
        s = jnp.einsum('hqd,hkd->hqk', q, k,
                       preferred_element_type=jnp.float32) * scale
        s = jnp.where(key_mask, s, -1e30)      # mask padded key columns
        s = s - jnp.max(s, axis=-1, keepdims=True)
        p = jnp.exp(s)
        p = p * pl.reciprocal(jnp.sum(p, axis=-1, keepdims=True), approx=True)

        o = jnp.einsum('hqk,hkd->hqd', p, v,
                       preferred_element_type=jnp.float32)
        o = jnp.concatenate([o[hh] for hh in range(heads)], axis=-1)

        # output projection (to_out); no residual, matching the reference
        y = jnp.dot(o, ow_ref[...],
                    preferred_element_type=jnp.float32) + ob_ref[...]

        # FeedForward with residual; LN eps == mlp_size (reference quirk)
        f = _layernorm(y, fg_ref[...], fb_ref[...], ff_eps)
        f = jnp.dot(f, w1_ref[...],
                    preferred_element_type=jnp.float32) + b1_ref[...]
        f = _gelu(f)
        f = jnp.dot(f, w2_ref[...],
                    preferred_element_type=jnp.float32) + b2_ref[...]
        x = f + y

    # ---- final LayerNorm + cls pool + mlp_head -----------------------------
    # LN is row-wise, so applying it only to token 0 is exact.
    cls_tok = x[0:1, :]                                        # (1, dim)
    cls_tok = _layernorm(cls_tok, fln_g_ref[...], fln_b_ref[...], 1e-5)
    logits = jnp.dot(cls_tok, hw_ref[...],
                     preferred_element_type=jnp.float32) + hb_ref[...]
    o_ref[0] = logits.astype(o_ref.dtype)                      # (1, ncls)


# ----------------------------------------------------------------------------
# pallas_call wrapper
# ----------------------------------------------------------------------------
def _full_spec(shape):
    """Whole-array block (all weights fit VMEM easily at these sizes)."""
    nd = len(shape)
    return pl.BlockSpec(shape, lambda *_: (0,) * nd)


def vit_forward(img, params, cfg):
    B, C, H, W = img.shape
    ph = pw = cfg["patch_size"]
    dim, heads, dh = cfg["dim"], cfg["heads"], cfg["dim_head"]
    mlp, L, ncls = cfg["mlp_size"], cfg["layers"], cfg["num_classes"]
    inner = heads * dh

    # 'b c (h p1) (w p2) -> b (h w) (p1 p2 c)'  — pure layout glue (XLA)
    x = img.reshape(B, C, H // ph, ph, W // pw, pw)
    x = x.transpose(0, 2, 4, 3, 5, 1).reshape(
        B, (H // ph) * (W // pw), ph * pw * C)
    N, patch_dim = x.shape[1], x.shape[2]
    S = N + 1                                # +1 cls token
    s_pad = ((S + 7) // 8) * 8               # sublane-align the sequence axis

    pos = params["pos_emb"][:, :S]                             # (1, S, dim)
    pos_pad = jnp.zeros((1, s_pad, dim), jnp.float32).at[:, :S].set(pos)

    inputs = [
        x,
        params["patch_ln1_g"].reshape(1, patch_dim),
        params["patch_ln1_b"].reshape(1, patch_dim),
        params["patch_w"], params["patch_b"].reshape(1, dim),
        params["patch_ln2_g"].reshape(1, dim),
        params["patch_ln2_b"].reshape(1, dim),
        params["cls"].reshape(1, dim),
        pos_pad,
    ]
    in_specs = [
        pl.BlockSpec((1, N, patch_dim), lambda b: (b, 0, 0)),
        _full_spec((1, patch_dim)), _full_spec((1, patch_dim)),
        _full_spec((patch_dim, dim)), _full_spec((1, dim)),
        _full_spec((1, dim)), _full_spec((1, dim)),
        _full_spec((1, dim)),
        _full_spec((1, s_pad, dim)),
    ]
    for lp in params["layers"]:
        inputs += [
            lp["attn_ln_g"].reshape(1, dim), lp["attn_ln_b"].reshape(1, dim),
            lp["qkv_w"],
            lp["out_w"], lp["out_b"].reshape(1, dim),
            lp["ff_ln_g"].reshape(1, dim), lp["ff_ln_b"].reshape(1, dim),
            lp["ff_w1"], lp["ff_b1"].reshape(1, mlp),
            lp["ff_w2"], lp["ff_b2"].reshape(1, dim),
        ]
        in_specs += [
            _full_spec((1, dim)), _full_spec((1, dim)),
            _full_spec((dim, 3 * inner)),
            _full_spec((inner, dim)), _full_spec((1, dim)),
            _full_spec((1, dim)), _full_spec((1, dim)),
            _full_spec((dim, mlp)), _full_spec((1, mlp)),
            _full_spec((mlp, dim)), _full_spec((1, dim)),
        ]
    inputs += [
        params["final_ln_g"].reshape(1, dim),
        params["final_ln_b"].reshape(1, dim),
        params["head_w"], params["head_b"].reshape(1, ncls),
    ]
    in_specs += [
        _full_spec((1, dim)), _full_spec((1, dim)),
        _full_spec((dim, ncls)), _full_spec((1, ncls)),
    ]

    kernel = functools.partial(
        _vit_forward_kernel,
        num_layers=L, seq_len=S, heads=heads, dim_head=dh,
        scale=float(dh) ** -0.5,
        ff_eps=float(mlp))  # reference quirk: nn.LayerNorm(dim, hidden_dim)

    out = pl.pallas_call(
        kernel,
        out_shape=jax.ShapeDtypeStruct((B, 1, ncls), jnp.float32),
        grid=(B,),
        in_specs=in_specs,
        out_specs=pl.BlockSpec((1, 1, ncls), lambda b: (b, 0, 0)),
        compiler_params=pltpu.CompilerParams(
            dimension_semantics=("parallel",)),
    )(*inputs)
    # TODO(synk): cross-call / cross-layer weight prefetch is unnecessary here;
    # all weights live in VMEM for the whole (single) kernel launch.
    return out.reshape(B, ncls)


# ----------------------------------------------------------------------------
# Parameter init (deterministic, synthetic)
# ----------------------------------------------------------------------------
def init_params(key, cfg):
    C, p = cfg["channels"], cfg["patch_size"]
    dim, heads, dh = cfg["dim"], cfg["heads"], cfg["dim_head"]
    mlp, L = cfg["mlp_size"], cfg["layers"]
    ncls, npatch = cfg["num_classes"], cfg["num_patches"]
    inner = heads * dh
    patch_dim = C * p * p

    keys = jax.random.split(key, 8 + 8 * L)
    idx = iter(range(len(keys)))

    def rnd(shape, scale=0.02):
        return jax.random.normal(keys[next(idx)], shape, jnp.float32) * scale

    params = {
        "patch_ln1_g": jnp.ones((patch_dim,), jnp.float32),
        "patch_ln1_b": jnp.zeros((patch_dim,), jnp.float32),
        "patch_w": rnd((patch_dim, dim)),
        "patch_b": jnp.zeros((dim,), jnp.float32),
        "patch_ln2_g": jnp.ones((dim,), jnp.float32),
        "patch_ln2_b": jnp.zeros((dim,), jnp.float32),
        "pos_emb": rnd((1, npatch + 1, dim), 1.0),   # ~ torch.randn
        "cls": rnd((1, 1, dim), 1.0),                # ~ torch.randn
        "final_ln_g": jnp.ones((dim,), jnp.float32),
        "final_ln_b": jnp.zeros((dim,), jnp.float32),
        "head_w": rnd((dim, ncls)),
        "head_b": jnp.zeros((ncls,), jnp.float32),
        "layers": [],
    }
    for _ in range(L):
        params["layers"].append({
            "attn_ln_g": jnp.ones((dim,), jnp.float32),
            "attn_ln_b": jnp.zeros((dim,), jnp.float32),
            "qkv_w": rnd((dim, inner * 3)),          # to_qkv has no bias
            "out_w": rnd((inner, dim)),
            "out_b": jnp.zeros((dim,), jnp.float32),
            "ff_ln_g": jnp.ones((dim,), jnp.float32),
            "ff_ln_b": jnp.zeros((dim,), jnp.float32),
            "ff_w1": rnd((dim, mlp)),
            "ff_b1": jnp.zeros((mlp,), jnp.float32),
            "ff_w2": rnd((mlp, dim)),
            "ff_b2": jnp.zeros((dim,), jnp.float32),
        })
    return params


# ----------------------------------------------------------------------------
if __name__ == "__main__":
    cfg = dict(
        image_size=16,
        patch_size=4,
        channels=3,
        num_classes=10,
        dim=32,
        layers=2,
        heads=4,
        dim_head=8,     # 'hidden_size' in the ViT signature (per-head dim)
        mlp_size=64,
    )
    cfg["num_patches"] = (cfg["image_size"] // cfg["patch_size"]) ** 2

    key = jax.random.PRNGKey(0)
    k_img, k_par = jax.random.split(key)
    img = jax.random.normal(
        k_img, (2, cfg["channels"], cfg["image_size"], cfg["image_size"]),
        jnp.float32)
    params = init_params(k_par, cfg)

    fwd = jax.jit(lambda im, p: vit_forward(im, p, cfg))
    logits = jax.block_until_ready(fwd(img, params))
    assert logits.shape == (2, cfg["num_classes"]), logits.shape
    print("KERNEL_OK")
</pallas_src>

<mosaic_0001>
module attributes {stable_mosaic.version = 11 : i64} {
  func.func @_vit_forward_kernel(%arg0: i32, %arg1: memref<1x16x48xf32, #tpu.memory_space<vmem>>, %arg2: memref<1x48xf32, #tpu.memory_space<vmem>>, %arg3: memref<1x48xf32, #tpu.memory_space<vmem>>, %arg4: memref<48x32xf32, #tpu.memory_space<vmem>>, %arg5: memref<1x32xf32, #tpu.memory_space<vmem>>, %arg6: memref<1x32xf32, #tpu.memory_space<vmem>>, %arg7: memref<1x32xf32, #tpu.memory_space<vmem>>, %arg8: memref<1x32xf32, #tpu.memory_space<vmem>>, %arg9: memref<1x24x32xf32, #tpu.memory_space<vmem>>, %arg10: memref<1x32xf32, #tpu.memory_space<vmem>>, %arg11: memref<1x32xf32, #tpu.memory_space<vmem>>, %arg12: memref<32x96xf32, #tpu.memory_space<vmem>>, %arg13: memref<32x32xf32, #tpu.memory_space<vmem>>, %arg14: memref<1x32xf32, #tpu.memory_space<vmem>>, %arg15: memref<1x32xf32, #tpu.memory_space<vmem>>, %arg16: memref<1x32xf32, #tpu.memory_space<vmem>>, %arg17: memref<32x64xf32, #tpu.memory_space<vmem>>, %arg18: memref<1x64xf32, #tpu.memory_space<vmem>>, %arg19: memref<64x32xf32, #tpu.memory_space<vmem>>, %arg20: memref<1x32xf32, #tpu.memory_space<vmem>>, %arg21: memref<1x32xf32, #tpu.memory_space<vmem>>, %arg22: memref<1x32xf32, #tpu.memory_space<vmem>>, %arg23: memref<32x96xf32, #tpu.memory_space<vmem>>, %arg24: memref<32x32xf32, #tpu.memory_space<vmem>>, %arg25: memref<1x32xf32, #tpu.memory_space<vmem>>, %arg26: memref<1x32xf32, #tpu.memory_space<vmem>>, %arg27: memref<1x32xf32, #tpu.memory_space<vmem>>, %arg28: memref<32x64xf32, #tpu.memory_space<vmem>>, %arg29: memref<1x64xf32, #tpu.memory_space<vmem>>, %arg30: memref<64x32xf32, #tpu.memory_space<vmem>>, %arg31: memref<1x32xf32, #tpu.memory_space<vmem>>, %arg32: memref<1x32xf32, #tpu.memory_space<vmem>>, %arg33: memref<1x32xf32, #tpu.memory_space<vmem>>, %arg34: memref<32x10xf32, #tpu.memory_space<vmem>>, %arg35: memref<1x10xf32, #tpu.memory_space<vmem>>, %arg36: memref<1x1x10xf32, #tpu.memory_space<vmem>>) attributes {dimension_semantics = [#tpu.dimension_semantics<parallel>], iteration_bounds = array<i64: 2>, scalar_prefetch = 0 : i64, scratch_operands = 0 : i64, tpu.core_type = #tpu.core_type<tc>, window_params = [{transform_indices = @transform_0, window_bounds = array<i64: 1, 16, 48>}, {pipeline_mode = #tpu.pipeline_mode<synchronous>, transform_indices = @transform_1, window_bounds = array<i64: 1, 48>}, {pipeline_mode = #tpu.pipeline_mode<synchronous>, transform_indices = @transform_2, window_bounds = array<i64: 1, 48>}, {pipeline_mode = #tpu.pipeline_mode<synchronous>, transform_indices = @transform_3, window_bounds = array<i64: 48, 32>}, {pipeline_mode = #tpu.pipeline_mode<synchronous>, transform_indices = @transform_4, window_bounds = array<i64: 1, 32>}, {pipeline_mode = #tpu.pipeline_mode<synchronous>, transform_indices = @transform_5, window_bounds = array<i64: 1, 32>}, {pipeline_mode = #tpu.pipeline_mode<synchronous>, transform_indices = @transform_6, window_bounds = array<i64: 1, 32>}, {pipeline_mode = #tpu.pipeline_mode<synchronous>, transform_indices = @transform_7, window_bounds = array<i64: 1, 32>}, {pipeline_mode = #tpu.pipeline_mode<synchronous>, transform_indices = @transform_8, window_bounds = array<i64: 1, 24, 32>}, {pipeline_mode = #tpu.pipeline_mode<synchronous>, transform_indices = @transform_9, window_bounds = array<i64: 1, 32>}, {pipeline_mode = #tpu.pipeline_mode<synchronous>, transform_indices = @transform_10, window_bounds = array<i64: 1, 32>}, {pipeline_mode = #tpu.pipeline_mode<synchronous>, transform_indices = @transform_11, window_bounds = array<i64: 32, 96>}, {pipeline_mode = #tpu.pipeline_mode<synchronous>, transform_indices = @transform_12, window_bounds = array<i64: 32, 32>}, {pipeline_mode = #tpu.pipeline_mode<synchronous>, transform_indices = @transform_13, window_bounds = array<i64: 1, 32>}, {pipeline_mode = #tpu.pipeline_mode<synchronous>, transform_indices = @transform_14, window_bounds = array<i64: 1, 32>}, {pipeline_mode = #tpu.pipeline_mode<synchronous>, transform_indices = @transform_15, window_bounds = array<i64: 1, 32>}, {pipeline_mode = #tpu.pipeline_mode<synchronous>, transform_indices = @transform_16, window_bounds = array<i64: 32, 64>}, {pipeline_mode = #tpu.pipeline_mode<synchronous>, transform_indices = @transform_17, window_bounds = array<i64: 1, 64>}, {pipeline_mode = #tpu.pipeline_mode<synchronous>, transform_indices = @transform_18, window_bounds = array<i64: 64, 32>}, {pipeline_mode = #tpu.pipeline_mode<synchronous>, transform_indices = @transform_19, window_bounds = array<i64: 1, 32>}, {pipeline_mode = #tpu.pipeline_mode<synchronous>, transform_indices = @transform_20, window_bounds = array<i64: 1, 32>}, {pipeline_mode = #tpu.pipeline_mode<synchronous>, transform_indices = @transform_21, window_bounds = array<i64: 1, 32>}, {pipeline_mode = #tpu.pipeline_mode<synchronous>, transform_indices = @transform_22, window_bounds = array<i64: 32, 96>}, {pipeline_mode = #tpu.pipeline_mode<synchronous>, transform_indices = @transform_23, window_bounds = array<i64: 32, 32>}, {pipeline_mode = #tpu.pipeline_mode<synchronous>, transform_indices = @transform_24, window_bounds = array<i64: 1, 32>}, {pipeline_mode = #tpu.pipeline_mode<synchronous>, transform_indices = @transform_25, window_bounds = array<i64: 1, 32>}, {pipeline_mode = #tpu.pipeline_mode<synchronous>, transform_indices = @transform_26, window_bounds = array<i64: 1, 32>}, {pipeline_mode = #tpu.pipeline_mode<synchronous>, transform_indices = @transform_27, window_bounds = array<i64: 32, 64>}, {pipeline_mode = #tpu.pipeline_mode<synchronous>, transform_indices = @transform_28, window_bounds = array<i64: 1, 64>}, {pipeline_mode = #tpu.pipeline_mode<synchronous>, transform_indices = @transform_29, window_bounds = array<i64: 64, 32>}, {pipeline_mode = #tpu.pipeline_mode<synchronous>, transform_indices = @transform_30, window_bounds = array<i64: 1, 32>}, {pipeline_mode = #tpu.pipeline_mode<synchronous>, transform_indices = @transform_31, window_bounds = array<i64: 1, 32>}, {pipeline_mode = #tpu.pipeline_mode<synchronous>, transform_indices = @transform_32, window_bounds = array<i64: 1, 32>}, {pipeline_mode = #tpu.pipeline_mode<synchronous>, transform_indices = @transform_33, window_bounds = array<i64: 32, 10>}, {pipeline_mode = #tpu.pipeline_mode<synchronous>, transform_indices = @transform_34, window_bounds = array<i64: 1, 10>}, {transform_indices = @transform_35, window_bounds = array<i64: 1, 1, 10>}]} {
    %c0 = arith.constant 0 : index
    %c0_0 = arith.constant 0 : index
    %c0_1 = arith.constant 0 : index
    %0 = vector.load %arg1[%c0, %c0_0, %c0_1] : memref<1x16x48xf32, #tpu.memory_space<vmem>>, vector<1x16x48xf32>
    %1 = vector.shape_cast %0 : vector<1x16x48xf32> to vector<16x48xf32>
    %c0_2 = arith.constant 0 : index
    %c0_3 = arith.constant 0 : index
    %2 = vector.load %arg2[%c0_2, %c0_3] : memref<1x48xf32, #tpu.memory_space<vmem>>, vector<1x48xf32>
    %c0_4 = arith.constant 0 : index
    %c0_5 = arith.constant 0 : index
    %3 = vector.load %arg3[%c0_4, %c0_5] : memref<1x48xf32, #tpu.memory_space<vmem>>, vector<1x48xf32>
    %cst = arith.constant dense<0.000000e+00> : vector<16xf32>
    %4 = vector.multi_reduction <add>, %1, %cst [1] : vector<16x48xf32> to vector<16xf32>
    %5 = vector.shape_cast %4 : vector<16xf32> to vector<16x1xf32>
    %cst_6 = arith.constant 4.800000e+01 : f32
    %6 = vector.broadcast %cst_6 : f32 to vector<16x1xf32>
    %7 = arith.divf %5, %6 : vector<16x1xf32>
    %8 = vector.broadcast %7 : vector<16x1xf32> to vector<16x48xf32>
    %9 = arith.subf %1, %8 : vector<16x48xf32>
    %10 = arith.mulf %9, %9 : vector<16x48xf32>
    %cst_7 = arith.constant dense<0.000000e+00> : vector<16xf32>
    %11 = vector.multi_reduction <add>, %10, %cst_7 [1] : vector<16x48xf32> to vector<16xf32>
    %12 = vector.shape_cast %11 : vector<16xf32> to vector<16x1xf32>
    %cst_8 = arith.constant 4.800000e+01 : f32
    %13 = vector.broadcast %cst_8 : f32 to vector<16x1xf32>
    %14 = arith.divf %12, %13 : vector<16x1xf32>
    %15 = vector.broadcast %7 : vector<16x1xf32> to vector<16x48xf32>
    %16 = arith.subf %1, %15 : vector<16x48xf32>
    %cst_9 = arith.constant 9.99999974E-6 : f32
    %17 = vector.broadcast %cst_9 : f32 to vector<16x1xf32>
    %18 = arith.addf %14, %17 : vector<16x1xf32>
    %19 = math.rsqrt %18 : vector<16x1xf32>
    %20 = vector.broadcast %19 : vector<16x1xf32> to vector<16x48xf32>
    %21 = arith.mulf %16, %20 : vector<16x48xf32>
    %22 = vector.broadcast %2 : vector<1x48xf32> to vector<16x48xf32>
    %23 = arith.mulf %21, %22 : vector<16x48xf32>
    %24 = vector.broadcast %3 : vector<1x48xf32> to vector<16x48xf32>
    %25 = arith.addf %23, %24 : vector<16x48xf32>
    %c0_10 = arith.constant 0 : index
    %c0_11 = arith.constant 0 : index
    %26 = vector.load %arg4[%c0_10, %c0_11] : memref<48x32xf32, #tpu.memory_space<vmem>>, vector<48x32xf32>
    %cst_12 = arith.constant dense<0.000000e+00> : vector<16x32xf32>
    %27 = tpu.matmul %25, %26, %cst_12 {dimension_numbers = #tpu.dot_dimension_numbers<[1], [0], [0], [1], [0, 0, 1, 1], [], []>} : vector<16x48xf32>, vector<48x32xf32>, vector<16x32xf32> -> vector<16x32xf32>
    %c0_13 = arith.constant 0 : index
    %c0_14 = arith.constant 0 : index
    %28 = vector.load %arg5[%c0_13, %c0_14] : memref<1x32xf32, #tpu.memory_space<vmem>>, vector<1x32xf32>
    %29 = vector.broadcast %28 : vector<1x32xf32> to vector<16x32xf32>
    %30 = arith.addf %27, %29 : vector<16x32xf32>
    %c0_15 = arith.constant 0 : index
    %c0_16 = arith.constant 0 : index
    %31 = vector.load %arg6[%c0_15, %c0_16] : memref<1x32xf32, #tpu.memory_space<vmem>>, vector<1x32xf32>
    %c0_17 = arith.constant 0 : index
    %c0_18 = arith.constant 0 : index
    %32 = vector.load %arg7[%c0_17, %c0_18] : memref<1x32xf32, #tpu.memory_space<vmem>>, vector<1x32xf32>
    %cst_19 = arith.constant dense<0.000000e+00> : vector<16xf32>
    %33 = vector.multi_reduction <add>, %30, %cst_19 [1] : vector<16x32xf32> to vector<16xf32>
    %34 = vector.shape_cast %33 : vector<16xf32> to vector<16x1xf32>
    %cst_20 = arith.constant 3.200000e+01 : f32
    %35 = vector.broadcast %cst_20 : f32 to vector<16x1xf32>
    %36 = arith.divf %34, %35 : vector<16x1xf32>
    %37 = vector.broadcast %36 : vector<16x1xf32> to vector<16x32xf32>
    %38 = arith.subf %30, %37 : vector<16x32xf32>
    %39 = arith.mulf %38, %38 : vector<16x32xf32>
    %cst_21 = arith.constant dense<0.000000e+00> : vector<16xf32>
    %40 = vector.multi_reduction <add>, %39, %cst_21 [1] : vector<16x32xf32> to vector<16xf32>
    %41 = vector.shape_cast %40 : vector<16xf32> to vector<16x1xf32>
    %cst_22 = arith.constant 3.200000e+01 : f32
    %42 = vector.broadcast %cst_22 : f32 to vector<16x1xf32>
    %43 = arith.divf %41, %42 : vector<16x1xf32>
    %44 = vector.broadcast %36 : vector<16x1xf32> to vector<16x32xf32>
    %45 = arith.subf %30, %44 : vector<16x32xf32>
    %cst_23 = arith.constant 9.99999974E-6 : f32
    %46 = vector.broadcast %cst_23 : f32 to vector<16x1xf32>
    %47 = arith.addf %43, %46 : vector<16x1xf32>
    %48 = math.rsqrt %47 : vector<16x1xf32>
    %49 = vector.broadcast %48 : vector<16x1xf32> to vector<16x32xf32>
    %50 = arith.mulf %45, %49 : vector<16x32xf32>
    %51 = vector.broadcast %31 : vector<1x32xf32> to vector<16x32xf32>
    %52 = arith.mulf %50, %51 : vector<16x32xf32>
    %53 = vector.broadcast %32 : vector<1x32xf32> to vector<16x32xf32>
    %54 = arith.addf %52, %53 : vector<16x32xf32>
    %c0_24 = arith.constant 0 : index
    %c0_25 = arith.constant 0 : index
    %55 = vector.load %arg8[%c0_24, %c0_25] : memref<1x32xf32, #tpu.memory_space<vmem>>, vector<1x32xf32>
    %cst_26 = arith.constant 0.000000e+00 : f32
    %56 = vector.broadcast %cst_26 : f32 to vector<7x32xf32>
    %57 = tpu.concatenate %55, %54, %56 in 0 : vector<1x32xf32>, vector<16x32xf32>, vector<7x32xf32> -> vector<24x32xf32>
    %c0_27 = arith.constant 0 : index
    %c0_28 = arith.constant 0 : index
    %c0_29 = arith.constant 0 : index
    %58 = vector.load %arg9[%c0_27, %c0_28, %c0_29] : memref<1x24x32xf32, #tpu.memory_space<vmem>>, vector<1x24x32xf32>
    %59 = vector.shape_cast %58 : vector<1x24x32xf32> to vector<24x32xf32>
    %60 = arith.addf %57, %59 : vector<24x32xf32>
    %61 = tpu.iota {dimensions = array<i32: 2>} : vector<1x1x24xi32>
    %c17_i32 = arith.constant 17 : i32
    %62 = vector.broadcast %c17_i32 : i32 to vector<1x1x24xi32>
    %63 = arith.cmpi slt, %61, %62 : vector<1x1x24xi32>
    %c0_30 = arith.constant 0 : index
    %c0_31 = arith.constant 0 : index
    %64 = vector.load %arg10[%c0_30, %c0_31] : memref<1x32xf32, #tpu.memory_space<vmem>>, vector<1x32xf32>
    %c0_32 = arith.constant 0 : index
    %c0_33 = arith.constant 0 : index
    %65 = vector.load %arg11[%c0_32, %c0_33] : memref<1x32xf32, #tpu.memory_space<vmem>>, vector<1x32xf32>
    %cst_34 = arith.constant dense<0.000000e+00> : vector<24xf32>
    %66 = vector.multi_reduction <add>, %60, %cst_34 [1] : vector<24x32xf32> to vector<24xf32>
    %67 = vector.shape_cast %66 : vector<24xf32> to vector<24x1xf32>
    %cst_35 = arith.constant 3.200000e+01 : f32
    %68 = vector.broadcast %cst_35 : f32 to vector<24x1xf32>
    %69 = arith.divf %67, %68 : vector<24x1xf32>
    %70 = vector.broadcast %69 : vector<24x1xf32> to vector<24x32xf32>
    %71 = arith.subf %60, %70 : vector<24x32xf32>
    %72 = arith.mulf %71, %71 : vector<24x32xf32>
    %cst_36 = arith.constant dense<0.000000e+00> : vector<24xf32>
    %73 = vector.multi_reduction <add>, %72, %cst_36 [1] : vector<24x32xf32> to vector<24xf32>
    %74 = vector.shape_cast %73 : vector<24xf32> to vector<24x1xf32>
    %cst_37 = arith.constant 3.200000e+01 : f32
    %75 = vector.broadcast %cst_37 : f32 to vector<24x1xf32>
    %76 = arith.divf %74, %75 : vector<24x1xf32>
    %77 = vector.broadcast %69 : vector<24x1xf32> to vector<24x32xf32>
    %78 = arith.subf %60, %77 : vector<24x32xf32>
    %cst_38 = arith.constant 9.99999974E-6 : f32
    %79 = vector.broadcast %cst_38 : f32 to vector<24x1xf32>
    %80 = arith.addf %76, %79 : vector<24x1xf32>
    %81 = math.rsqrt %80 : vector<24x1xf32>
    %82 = vector.broadcast %81 : vector<24x1xf32> to vector<24x32xf32>
    %83 = arith.mulf %78, %82 : vector<24x32xf32>
    %84 = vector.broadcast %64 : vector<1x32xf32> to vector<24x32xf32>
    %85 = arith.mulf %83, %84 : vector<24x32xf32>
    %86 = vector.broadcast %65 : vector<1x32xf32> to vector<24x32xf32>
    %87 = arith.addf %85, %86 : vector<24x32xf32>
    %c0_39 = arith.constant 0 : index
    %c0_40 = arith.constant 0 : index
    %88 = vector.load %arg12[%c0_39, %c0_40] : memref<32x96xf32, #tpu.memory_space<vmem>>, vector<32x96xf32>
    %cst_41 = arith.constant dense<0.000000e+00> : vector<24x96xf32>
    %89 = tpu.matmul %87, %88, %cst_41 {dimension_numbers = #tpu.dot_dimension_numbers<[1], [0], [0], [1], [0, 0, 1, 1], [], []>} : vector<24x32xf32>, vector<32x96xf32>, vector<24x96xf32> -> vector<24x96xf32>
    %90 = vector.extract_strided_slice %89 {offsets = [0, 0], sizes = [24, 8], strides = [1, 1]} : vector<24x96xf32> to vector<24x8xf32>
    %91 = vector.extract_strided_slice %89 {offsets = [0, 8], sizes = [24, 8], strides = [1, 1]} : vector<24x96xf32> to vector<24x8xf32>
    %92 = vector.extract_strided_slice %89 {offsets = [0, 16], sizes = [24, 8], strides = [1, 1]} : vector<24x96xf32> to vector<24x8xf32>
    %93 = vector.extract_strided_slice %89 {offsets = [0, 24], sizes = [24, 8], strides = [1, 1]} : vector<24x96xf32> to vector<24x8xf32>
    %94 = vector.shape_cast %90 : vector<24x8xf32> to vector<1x24x8xf32>
    %95 = vector.shape_cast %91 : vector<24x8xf32> to vector<1x24x8xf32>
    %96 = vector.shape_cast %92 : vector<24x8xf32> to vector<1x24x8xf32>
    %97 = vector.shape_cast %93 : vector<24x8xf32> to vector<1x24x8xf32>
    %98 = tpu.concatenate %94, %95, %96, %97 in 0 : vector<1x24x8xf32>, vector<1x24x8xf32>, vector<1x24x8xf32>, vector<1x24x8xf32> -> vector<4x24x8xf32>
    %99 = vector.extract_strided_slice %89 {offsets = [0, 32], sizes = [24, 8], strides = [1, 1]} : vector<24x96xf32> to vector<24x8xf32>
    %100 = vector.extract_strided_slice %89 {offsets = [0, 40], sizes = [24, 8], strides = [1, 1]} : vector<24x96xf32> to vector<24x8xf32>
    %101 = vector.extract_strided_slice %89 {offsets = [0, 48], sizes = [24, 8], strides = [1, 1]} : vector<24x96xf32> to vector<24x8xf32>
    %102 = vector.extract_strided_slice %89 {offsets = [0, 56], sizes = [24, 8], strides = [1, 1]} : vector<24x96xf32> to vector<24x8xf32>
    %103 = vector.shape_cast %99 : vector<24x8xf32> to vector<1x24x8xf32>
    %104 = vector.shape_cast %100 : vector<24x8xf32> to vector<1x24x8xf32>
    %105 = vector.shape_cast %101 : vector<24x8xf32> to vector<1x24x8xf32>
    %106 = vector.shape_cast %102 : vector<24x8xf32> to vector<1x24x8xf32>
    %107 = tpu.concatenate %103, %104, %105, %106 in 0 : vector<1x24x8xf32>, vector<1x24x8xf32>, vector<1x24x8xf32>, vector<1x24x8xf32> -> vector<4x24x8xf32>
    %108 = vector.extract_strided_slice %89 {offsets = [0, 64], sizes = [24, 8], strides = [1, 1]} : vector<24x96xf32> to vector<24x8xf32>
    %109 = vector.extract_strided_slice %89 {offsets = [0, 72], sizes = [24, 8], strides = [1, 1]} : vector<24x96xf32> to vector<24x8xf32>
    %110 = vector.extract_strided_slice %89 {offsets = [0, 80], sizes = [24, 8], strides = [1, 1]} : vector<24x96xf32> to vector<24x8xf32>
    %111 = vector.extract_strided_slice %89 {offsets = [0, 88], sizes = [24, 8], strides = [1, 1]} : vector<24x96xf32> to vector<24x8xf32>
    %112 = vector.shape_cast %108 : vector<24x8xf32> to vector<1x24x8xf32>
    %113 = vector.shape_cast %109 : vector<24x8xf32> to vector<1x24x8xf32>
    %114 = vector.shape_cast %110 : vector<24x8xf32> to vector<1x24x8xf32>
    %115 = vector.shape_cast %111 : vector<24x8xf32> to vector<1x24x8xf32>
    %116 = tpu.concatenate %112, %113, %114, %115 in 0 : vector<1x24x8xf32>, vector<1x24x8xf32>, vector<1x24x8xf32>, vector<1x24x8xf32> -> vector<4x24x8xf32>
    "tpu.trace_start"() <{level = 10 : i32, message = "hqd,hkd->hqk"}> : () -> ()
    %cst_42 = arith.constant dense<0.000000e+00> : vector<4x24x24xf32>
    %117 = tpu.matmul %98, %107, %cst_42 {dimension_numbers = #tpu.dot_dimension_numbers<[2], [2], [1], [1], [0, 0, 0, 1, 1, 1], [0], [0]>} : vector<4x24x8xf32>, vector<4x24x8xf32>, vector<4x24x24xf32> -> vector<4x24x24xf32>
    "tpu.trace_stop"() : () -> ()
    %cst_43 = arith.constant 0.353553385 : f32
    %118 = vector.broadcast %cst_43 : f32 to vector<4x24x24xf32>
    %119 = arith.mulf %117, %118 : vector<4x24x24xf32>
    %cst_44 = arith.constant -1.000000e+30 : f32
    %120 = vector.shape_cast %63 : vector<1x1x24xi1> to vector<1x1x24xi1>
    %121 = vector.broadcast %120 : vector<1x1x24xi1> to vector<4x24x24xi1>
    %122 = vector.broadcast %cst_44 : f32 to vector<4x24x24xf32>
    %123 = arith.select %121, %119, %122 : vector<4x24x24xi1>, vector<4x24x24xf32>
    %cst_45 = arith.constant dense<0xFF800000> : vector<4x24xf32>
    %124 = vector.multi_reduction <maximumf>, %123, %cst_45 [2] : vector<4x24x24xf32> to vector<4x24xf32>
    %125 = vector.shape_cast %124 : vector<4x24xf32> to vector<4x24x1xf32>
    %126 = vector.broadcast %125 : vector<4x24x1xf32> to vector<4x24x24xf32>
    %127 = arith.subf %123, %126 : vector<4x24x24xf32>
    %128 = math.exp %127 : vector<4x24x24xf32>
    %cst_46 = arith.constant dense<0.000000e+00> : vector<4x24xf32>
    %129 = vector.multi_reduction <add>, %128, %cst_46 [2] : vector<4x24x24xf32> to vector<4x24xf32>
    %130 = vector.shape_cast %129 : vector<4x24xf32> to vector<4x24x1xf32>
    %131 = tpu.reciprocal %130 {approx = true} : vector<4x24x1xf32> -> vector<4x24x1xf32>
    %132 = vector.broadcast %131 : vector<4x24x1xf32> to vector<4x24x24xf32>
    %133 = arith.mulf %128, %132 : vector<4x24x24xf32>
    "tpu.trace_start"() <{level = 10 : i32, message = "hqk,hkd->hqd"}> : () -> ()
    %cst_47 = arith.constant dense<0.000000e+00> : vector<4x24x8xf32>
    %134 = tpu.matmul %133, %116, %cst_47 {dimension_numbers = #tpu.dot_dimension_numbers<[2], [1], [1], [2], [0, 0, 0, 1, 1, 2], [0], [0]>} : vector<4x24x24xf32>, vector<4x24x8xf32>, vector<4x24x8xf32> -> vector<4x24x8xf32>
    "tpu.trace_stop"() : () -> ()
    %135 = vector.extract_strided_slice %134 {offsets = [0, 0, 0], sizes = [1, 24, 8], strides = [1, 1, 1]} : vector<4x24x8xf32> to vector<1x24x8xf32>
    %136 = vector.shape_cast %135 : vector<1x24x8xf32> to vector<24x8xf32>
    %137 = vector.extract_strided_slice %134 {offsets = [1, 0, 0], sizes = [1, 24, 8], strides = [1, 1, 1]} : vector<4x24x8xf32> to vector<1x24x8xf32>
    %138 = vector.shape_cast %137 : vector<1x24x8xf32> to vector<24x8xf32>
    %139 = vector.extract_strided_slice %134 {offsets = [2, 0, 0], sizes = [1, 24, 8], strides = [1, 1, 1]} : vector<4x24x8xf32> to vector<1x24x8xf32>
    %140 = vector.shape_cast %139 : vector<1x24x8xf32> to vector<24x8xf32>
    %141 = vector.extract_strided_slice %134 {offsets = [3, 0, 0], sizes = [1, 24, 8], strides = [1, 1, 1]} : vector<4x24x8xf32> to vector<1x24x8xf32>
    %142 = vector.shape_cast %141 : vector<1x24x8xf32> to vector<24x8xf32>
    %143 = tpu.concatenate %136, %138, %140, %142 in 1 : vector<24x8xf32>, vector<24x8xf32>, vector<24x8xf32>, vector<24x8xf32> -> vector<24x32xf32>
    %c0_48 = arith.constant 0 : index
    %c0_49 = arith.constant 0 : index
    %144 = vector.load %arg13[%c0_48, %c0_49] : memref<32x32xf32, #tpu.memory_space<vmem>>, vector<32x32xf32>
    %cst_50 = arith.constant dense<0.000000e+00> : vector<24x32xf32>
    %145 = tpu.matmul %143, %144, %cst_50 {dimension_numbers = #tpu.dot_dimension_numbers<[1], [0], [0], [1], [0, 0, 1, 1], [], []>} : vector<24x32xf32>, vector<32x32xf32>, vector<24x32xf32> -> vector<24x32xf32>
    %c0_51 = arith.constant 0 : index
    %c0_52 = arith.constant 0 : index
    %146 = vector.load %arg14[%c0_51, %c0_52] : memref<1x32xf32, #tpu.memory_space<vmem>>, vector<1x32xf32>
    %147 = vector.broadcast %146 : vector<1x32xf32> to vector<24x32xf32>
    %148 = arith.addf %145, %147 : vector<24x32xf32>
    %c0_53 = arith.constant 0 : index
    %c0_54 = arith.constant 0 : index
    %149 = vector.load %arg15[%c0_53, %c0_54] : memref<1x32xf32, #tpu.memory_space<vmem>>, vector<1x32xf32>
    %c0_55 = arith.constant 0 : index
    %c0_56 = arith.constant 0 : index
    %150 = vector.load %arg16[%c0_55, %c0_56] : memref<1x32xf32, #tpu.memory_space<vmem>>, vector<1x32xf32>
    %cst_57 = arith.constant dense<0.000000e+00> : vector<24xf32>
    %151 = vector.multi_reduction <add>, %148, %cst_57 [1] : vector<24x32xf32> to vector<24xf32>
    %152 = vector.shape_cast %151 : vector<24xf32> to vector<24x1xf32>
    %cst_58 = arith.constant 3.200000e+01 : f32
    %153 = vector.broadcast %cst_58 : f32 to vector<24x1xf32>
    %154 = arith.divf %152, %153 : vector<24x1xf32>
    %155 = vector.broadcast %154 : vector<24x1xf32> to vector<24x32xf32>
    %156 = arith.subf %148, %155 : vector<24x32xf32>
    %157 = arith.mulf %156, %156 : vector<24x32xf32>
    %cst_59 = arith.constant dense<0.000000e+00> : vector<24xf32>
    %158 = vector.multi_reduction <add>, %157, %cst_59 [1] : vector<24x32xf32> to vector<24xf32>
    %159 = vector.shape_cast %158 : vector<24xf32> to vector<24x1xf32>
    %cst_60 = arith.constant 3.200000e+01 : f32
    %160 = vector.broadcast %cst_60 : f32 to vector<24x1xf32>
    %161 = arith.divf %159, %160 : vector<24x1xf32>
    %162 = vector.broadcast %154 : vector<24x1xf32> to vector<24x32xf32>
    %163 = arith.subf %148, %162 : vector<24x32xf32>
    %cst_61 = arith.constant 6.400000e+01 : f32
    %164 = vector.broadcast %cst_61 : f32 to vector<24x1xf32>
    %165 = arith.addf %161, %164 : vector<24x1xf32>
    %166 = math.rsqrt %165 : vector<24x1xf32>
    %167 = vector.broadcast %166 : vector<24x1xf32> to vector<24x32xf32>
    %168 = arith.mulf %163, %167 : vector<24x32xf32>
    %169 = vector.broadcast %149 : vector<1x32xf32> to vector<24x32xf32>
    %170 = arith.mulf %168, %169 : vector<24x32xf32>
    %171 = vector.broadcast %150 : vector<1x32xf32> to vector<24x32xf32>
    %172 = arith.addf %170, %171 : vector<24x32xf32>
    %c0_62 = arith.constant 0 : index
    %c0_63 = arith.constant 0 : index
    %173 = vector.load %arg17[%c0_62, %c0_63] : memref<32x64xf32, #tpu.memory_space<vmem>>, vector<32x64xf32>
    %cst_64 = arith.constant dense<0.000000e+00> : vector<24x64xf32>
    %174 = tpu.matmul %172, %173, %cst_64 {dimension_numbers = #tpu.dot_dimension_numbers<[1], [0], [0], [1], [0, 0, 1, 1], [], []>} : vector<24x32xf32>, vector<32x64xf32>, vector<24x64xf32> -> vector<24x64xf32>
    %c0_65 = arith.constant 0 : index
    %c0_66 = arith.constant 0 : index
    %175 = vector.load %arg18[%c0_65, %c0_66] : memref<1x64xf32, #tpu.memory_space<vmem>>, vector<1x64xf32>
    %176 = vector.broadcast %175 : vector<1x64xf32> to vector<24x64xf32>
    %177 = arith.addf %174, %176 : vector<24x64xf32>
    %cst_67 = arith.constant 5.000000e-01 : f32
    %178 = vector.broadcast %cst_67 : f32 to vector<24x64xf32>
    %179 = arith.mulf %178, %177 : vector<24x64xf32>
    %cst_68 = arith.constant 0.707106769 : f32
    %180 = vector.broadcast %cst_68 : f32 to vector<24x64xf32>
    %181 = arith.mulf %177, %180 : vector<24x64xf32>
    %182 = math.erf %181 : vector<24x64xf32>
    %cst_69 = arith.constant 1.000000e+00 : f32
    %183 = vector.broadcast %cst_69 : f32 to vector<24x64xf32>
    %184 = arith.addf %183, %182 : vector<24x64xf32>
    %185 = arith.mulf %179, %184 : vector<24x64xf32>
    %c0_70 = arith.constant 0 : index
    %c0_71 = arith.constant 0 : index
    %186 = vector.load %arg19[%c0_70, %c0_71] : memref<64x32xf32, #tpu.memory_space<vmem>>, vector<64x32xf32>
    %cst_72 = arith.constant dense<0.000000e+00> : vector<24x32xf32>
    %187 = tpu.matmul %185, %186, %cst_72 {dimension_numbers = #tpu.dot_dimension_numbers<[1], [0], [0], [1], [0, 0, 1, 1], [], []>} : vector<24x64xf32>, vector<64x32xf32>, vector<24x32xf32> -> vector<24x32xf32>
    %c0_73 = arith.constant 0 : index
    %c0_74 = arith.constant 0 : index
    %188 = vector.load %arg20[%c0_73, %c0_74] : memref<1x32xf32, #tpu.memory_space<vmem>>, vector<1x32xf32>
    %189 = vector.broadcast %188 : vector<1x32xf32> to vector<24x32xf32>
    %190 = arith.addf %187, %189 : vector<24x32xf32>
    %191 = arith.addf %190, %148 : vector<24x32xf32>
    %c0_75 = arith.constant 0 : index
    %c0_76 = arith.constant 0 : index
    %192 = vector.load %arg21[%c0_75, %c0_76] : memref<1x32xf32, #tpu.memory_space<vmem>>, vector<1x32xf32>
    %c0_77 = arith.constant 0 : index
    %c0_78 = arith.constant 0 : index
    %193 = vector.load %arg22[%c0_77, %c0_78] : memref<1x32xf32, #tpu.memory_space<vmem>>, vector<1x32xf32>
    %cst_79 = arith.constant dense<0.000000e+00> : vector<24xf32>
    %194 = vector.multi_reduction <add>, %191, %cst_79 [1] : vector<24x32xf32> to vector<24xf32>
    %195 = vector.shape_cast %194 : vector<24xf32> to vector<24x1xf32>
    %cst_80 = arith.constant 3.200000e+01 : f32
    %196 = vector.broadcast %cst_80 : f32 to vector<24x1xf32>
    %197 = arith.divf %195, %196 : vector<24x1xf32>
    %198 = vector.broadcast %197 : vector<24x1xf32> to vector<24x32xf32>
    %199 = arith.subf %191, %198 : vector<24x32xf32>
    %200 = arith.mulf %199, %199 : vector<24x32xf32>
    %cst_81 = arith.constant dense<0.000000e+00> : vector<24xf32>
    %201 = vector.multi_reduction <add>, %200, %cst_81 [1] : vector<24x32xf32> to vector<24xf32>
    %202 = vector.shape_cast %201 : vector<24xf32> to vector<24x1xf32>
    %cst_82 = arith.constant 3.200000e+01 : f32
    %203 = vector.broadcast %cst_82 : f32 to vector<24x1xf32>
    %204 = arith.divf %202, %203 : vector<24x1xf32>
    %205 = vector.broadcast %197 : vector<24x1xf32> to vector<24x32xf32>
    %206 = arith.subf %191, %205 : vector<24x32xf32>
    %cst_83 = arith.constant 9.99999974E-6 : f32
    %207 = vector.broadcast %cst_83 : f32 to vector<24x1xf32>
    %208 = arith.addf %204, %207 : vector<24x1xf32>
    %209 = math.rsqrt %208 : vector<24x1xf32>
    %210 = vector.broadcast %209 : vector<24x1xf32> to vector<24x32xf32>
    %211 = arith.mulf %206, %210 : vector<24x32xf32>
    %212 = vector.broadcast %192 : vector<1x32xf32> to vector<24x32xf32>
    %213 = arith.mulf %211, %212 : vector<24x32xf32>
    %214 = vector.broadcast %193 : vector<1x32xf32> to vector<24x32xf32>
    %215 = arith.addf %213, %214 : vector<24x32xf32>
    %c0_84 = arith.constant 0 : index
    %c0_85 = arith.constant 0 : index
    %216 = vector.load %arg23[%c0_84, %c0_85] : memref<32x96xf32, #tpu.memory_space<vmem>>, vector<32x96xf32>
    %cst_86 = arith.constant dense<0.000000e+00> : vector<24x96xf32>
    %217 = tpu.matmul %215, %216, %cst_86 {dimension_numbers = #tpu.dot_dimension_numbers<[1], [0], [0], [1], [0, 0, 1, 1], [], []>} : vector<24x32xf32>, vector<32x96xf32>, vector<24x96xf32> -> vector<24x96xf32>
    %218 = vector.extract_strided_slice %217 {offsets = [0, 0], sizes = [24, 8], strides = [1, 1]} : vector<24x96xf32> to vector<24x8xf32>
    %219 = vector.extract_strided_slice %217 {offsets = [0, 8], sizes = [24, 8], strides = [1, 1]} : vector<24x96xf32> to vector<24x8xf32>
    %220 = vector.extract_strided_slice %217 {offsets = [0, 16], sizes = [24, 8], strides = [1, 1]} : vector<24x96xf32> to vector<24x8xf32>
    %221 = vector.extract_strided_slice %217 {offsets = [0, 24], sizes = [24, 8], strides = [1, 1]} : vector<24x96xf32> to vector<24x8xf32>
    %222 = vector.shape_cast %218 : vector<24x8xf32> to vector<1x24x8xf32>
    %223 = vector.shape_cast %219 : vector<24x8xf32> to vector<1x24x8xf32>
    %224 = vector.shape_cast %220 : vector<24x8xf32> to vector<1x24x8xf32>
    %225 = vector.shape_cast %221 : vector<24x8xf32> to vector<1x24x8xf32>
    %226 = tpu.concatenate %222, %223, %224, %225 in 0 : vector<1x24x8xf32>, vector<1x24x8xf32>, vector<1x24x8xf32>, vector<1x24x8xf32> -> vector<4x24x8xf32>
    %227 = vector.extract_strided_slice %217 {offsets = [0, 32], sizes = [24, 8], strides = [1, 1]} : vector<24x96xf32> to vector<24x8xf32>
    %228 = vector.extract_strided_slice %217 {offsets = [0, 40], sizes = [24, 8], strides = [1, 1]} : vector<24x96xf32> to vector<24x8xf32>
    %229 = vector.extract_strided_slice %217 {offsets = [0, 48], sizes = [24, 8], strides = [1, 1]} : vector<24x96xf32> to vector<24x8xf32>
    %230 = vector.extract_strided_slice %217 {offsets = [0, 56], sizes = [24, 8], strides = [1, 1]} : vector<24x96xf32> to vector<24x8xf32>
    %231 = vector.shape_cast %227 : vector<24x8xf32> to vector<1x24x8xf32>
    %232 = vector.shape_cast %228 : vector<24x8xf32> to vector<1x24x8xf32>
    %233 = vector.shape_cast %229 : vector<24x8xf32> to vector<1x24x8xf32>
    %234 = vector.shape_cast %230 : vector<24x8xf32> to vector<1x24x8xf32>
    %235 = tpu.concatenate %231, %232, %233, %234 in 0 : vector<1x24x8xf32>, vector<1x24x8xf32>, vector<1x24x8xf32>, vector<1x24x8xf32> -> vector<4x24x8xf32>
    %236 = vector.extract_strided_slice %217 {offsets = [0, 64], sizes = [24, 8], strides = [1, 1]} : vector<24x96xf32> to vector<24x8xf32>
    %237 = vector.extract_strided_slice %217 {offsets = [0, 72], sizes = [24, 8], strides = [1, 1]} : vector<24x96xf32> to vector<24x8xf32>
    %238 = vector.extract_strided_slice %217 {offsets = [0, 80], sizes = [24, 8], strides = [1, 1]} : vector<24x96xf32> to vector<24x8xf32>
    %239 = vector.extract_strided_slice %217 {offsets = [0, 88], sizes = [24, 8], strides = [1, 1]} : vector<24x96xf32> to vector<24x8xf32>
    %240 = vector.shape_cast %236 : vector<24x8xf32> to vector<1x24x8xf32>
    %241 = vector.shape_cast %237 : vector<24x8xf32> to vector<1x24x8xf32>
    %242 = vector.shape_cast %238 : vector<24x8xf32> to vector<1x24x8xf32>
    %243 = vector.shape_cast %239 : vector<24x8xf32> to vector<1x24x8xf32>
    %244 = tpu.concatenate %240, %241, %242, %243 in 0 : vector<1x24x8xf32>, vector<1x24x8xf32>, vector<1x24x8xf32>, vector<1x24x8xf32> -> vector<4x24x8xf32>
    "tpu.trace_start"() <{level = 10 : i32, message = "hqd,hkd->hqk"}> : () -> ()
    %cst_87 = arith.constant dense<0.000000e+00> : vector<4x24x24xf32>
    %245 = tpu.matmul %226, %235, %cst_87 {dimension_numbers = #tpu.dot_dimension_numbers<[2], [2], [1], [1], [0, 0, 0, 1, 1, 1], [0], [0]>} : vector<4x24x8xf32>, vector<4x24x8xf32>, vector<4x24x24xf32> -> vector<4x24x24xf32>
    "tpu.trace_stop"() : () -> ()
    %cst_88 = arith.constant 0.353553385 : f32
    %246 = vector.broadcast %cst_88 : f32 to vector<4x24x24xf32>
    %247 = arith.mulf %245, %246 : vector<4x24x24xf32>
    %cst_89 = arith.constant -1.000000e+30 : f32
    %248 = vector.shape_cast %63 : vector<1x1x24xi1> to vector<1x1x24xi1>
    %249 = vector.broadcast %248 : vector<1x1x24xi1> to vector<4x24x24xi1>
    %250 = vector.broadcast %cst_89 : f32 to vector<4x24x24xf32>
    %251 = arith.select %249, %247, %250 : vector<4x24x24xi1>, vector<4x24x24xf32>
    %cst_90 = arith.constant dense<0xFF800000> : vector<4x24xf32>
    %252 = vector.multi_reduction <maximumf>, %251, %cst_90 [2] : vector<4x24x24xf32> to vector<4x24xf32>
    %253 = vector.shape_cast %252 : vector<4x24xf32> to vector<4x24x1xf32>
    %254 = vector.broadcast %253 : vector<4x24x1xf32> to vector<4x24x24xf32>
    %255 = arith.subf %251, %254 : vector<4x24x24xf32>
    %256 = math.exp %255 : vector<4x24x24xf32>
    %cst_91 = arith.constant dense<0.000000e+00> : vector<4x24xf32>
    %257 = vector.multi_reduction <add>, %256, %cst_91 [2] : vector<4x24x24xf32> to vector<4x24xf32>
    %258 = vector.shape_cast %257 : vector<4x24xf32> to vector<4x24x1xf32>
    %259 = tpu.reciprocal %258 {approx = true} : vector<4x24x1xf32> -> vector<4x24x1xf32>
    %260 = vector.broadcast %259 : vector<4x24x1xf32> to vector<4x24x24xf32>
    %261 = arith.mulf %256, %260 : vector<4x24x24xf32>
    "tpu.trace_start"() <{level = 10 : i32, message = "hqk,hkd->hqd"}> : () -> ()
    %cst_92 = arith.constant dense<0.000000e+00> : vector<4x24x8xf32>
    %262 = tpu.matmul %261, %244, %cst_92 {dimension_numbers = #tpu.dot_dimension_numbers<[2], [1], [1], [2], [0, 0, 0, 1, 1, 2], [0], [0]>} : vector<4x24x24xf32>, vector<4x24x8xf32>, vector<4x24x8xf32> -> vector<4x24x8xf32>
    "tpu.trace_stop"() : () -> ()
    %263 = vector.extract_strided_slice %262 {offsets = [0, 0, 0], sizes = [1, 24, 8], strides = [1, 1, 1]} : vector<4x24x8xf32> to vector<1x24x8xf32>
    %264 = vector.shape_cast %263 : vector<1x24x8xf32> to vector<24x8xf32>
    %265 = vector.extract_strided_slice %262 {offsets = [1, 0, 0], sizes = [1, 24, 8], strides = [1, 1, 1]} : vector<4x24x8xf32> to vector<1x24x8xf32>
    %266 = vector.shape_cast %265 : vector<1x24x8xf32> to vector<24x8xf32>
    %267 = vector.extract_strided_slice %262 {offsets = [2, 0, 0], sizes = [1, 24, 8], strides = [1, 1, 1]} : vector<4x24x8xf32> to vector<1x24x8xf32>
    %268 = vector.shape_cast %267 : vector<1x24x8xf32> to vector<24x8xf32>
    %269 = vector.extract_strided_slice %262 {offsets = [3, 0, 0], sizes = [1, 24, 8], strides = [1, 1, 1]} : vector<4x24x8xf32> to vector<1x24x8xf32>
    %270 = vector.shape_cast %269 : vector<1x24x8xf32> to vector<24x8xf32>
    %271 = tpu.concatenate %264, %266, %268, %270 in 1 : vector<24x8xf32>, vector<24x8xf32>, vector<24x8xf32>, vector<24x8xf32> -> vector<24x32xf32>
    %c0_93 = arith.constant 0 : index
    %c0_94 = arith.constant 0 : index
    %272 = vector.load %arg24[%c0_93, %c0_94] : memref<32x32xf32, #tpu.memory_space<vmem>>, vector<32x32xf32>
    %cst_95 = arith.constant dense<0.000000e+00> : vector<24x32xf32>
    %273 = tpu.matmul %271, %272, %cst_95 {dimension_numbers = #tpu.dot_dimension_numbers<[1], [0], [0], [1], [0, 0, 1, 1], [], []>} : vector<24x32xf32>, vector<32x32xf32>, vector<24x32xf32> -> vector<24x32xf32>
    %c0_96 = arith.constant 0 : index
    %c0_97 = arith.constant 0 : index
    %274 = vector.load %arg25[%c0_96, %c0_97] : memref<1x32xf32, #tpu.memory_space<vmem>>, vector<1x32xf32>
    %275 = vector.broadcast %274 : vector<1x32xf32> to vector<24x32xf32>
    %276 = arith.addf %273, %275 : vector<24x32xf32>
    %c0_98 = arith.constant 0 : index
    %c0_99 = arith.constant 0 : index
    %277 = vector.load %arg26[%c0_98, %c0_99] : memref<1x32xf32, #tpu.memory_space<vmem>>, vector<1x32xf32>
    %c0_100 = arith.constant 0 : index
    %c0_101 = arith.constant 0 : index
    %278 = vector.load %arg27[%c0_100, %c0_101] : memref<1x32xf32, #tpu.memory_space<vmem>>, vector<1x32xf32>
    %cst_102 = arith.constant dense<0.000000e+00> : vector<24xf32>
    %279 = vector.multi_reduction <add>, %276, %cst_102 [1] : vector<24x32xf32> to vector<24xf32>
    %280 = vector.shape_cast %279 : vector<24xf32> to vector<24x1xf32>
    %cst_103 = arith.constant 3.200000e+01 : f32
    %281 = vector.broadcast %cst_103 : f32 to vector<24x1xf32>
    %282 = arith.divf %280, %281 : vector<24x1xf32>
    %283 = vector.broadcast %282 : vector<24x1xf32> to vector<24x32xf32>
    %284 = arith.subf %276, %283 : vector<24x32xf32>
    %285 = arith.mulf %284, %284 : vector<24x32xf32>
    %cst_104 = arith.constant dense<0.000000e+00> : vector<24xf32>
    %286 = vector.multi_reduction <add>, %285, %cst_104 [1] : vector<24x32xf32> to vector<24xf32>
    %287 = vector.shape_cast %286 : vector<24xf32> to vector<24x1xf32>
    %cst_105 = arith.constant 3.200000e+01 : f32
    %288 = vector.broadcast %cst_105 : f32 to vector<24x1xf32>
    %289 = arith.divf %287, %288 : vector<24x1xf32>
    %290 = vector.broadcast %282 : vector<24x1xf32> to vector<24x32xf32>
    %291 = arith.subf %276, %290 : vector<24x32xf32>
    %cst_106 = arith.constant 6.400000e+01 : f32
    %292 = vector.broadcast %cst_106 : f32 to vector<24x1xf32>
    %293 = arith.addf %289, %292 : vector<24x1xf32>
    %294 = math.rsqrt %293 : vector<24x1xf32>
    %295 = vector.broadcast %294 : vector<24x1xf32> to vector<24x32xf32>
    %296 = arith.mulf %291, %295 : vector<24x32xf32>
    %297 = vector.broadcast %277 : vector<1x32xf32> to vector<24x32xf32>
    %298 = arith.mulf %296, %297 : vector<24x32xf32>
    %299 = vector.broadcast %278 : vector<1x32xf32> to vector<24x32xf32>
    %300 = arith.addf %298, %299 : vector<24x32xf32>
    %c0_107 = arith.constant 0 : index
    %c0_108 = arith.constant 0 : index
    %301 = vector.load %arg28[%c0_107, %c0_108] : memref<32x64xf32, #tpu.memory_space<vmem>>, vector<32x64xf32>
    %cst_109 = arith.constant dense<0.000000e+00> : vector<24x64xf32>
    %302 = tpu.matmul %300, %301, %cst_109 {dimension_numbers = #tpu.dot_dimension_numbers<[1], [0], [0], [1], [0, 0, 1, 1], [], []>} : vector<24x32xf32>, vector<32x64xf32>, vector<24x64xf32> -> vector<24x64xf32>
    %c0_110 = arith.constant 0 : index
    %c0_111 = arith.constant 0 : index
    %303 = vector.load %arg29[%c0_110, %c0_111] : memref<1x64xf32, #tpu.memory_space<vmem>>, vector<1x64xf32>
    %304 = vector.broadcast %303 : vector<1x64xf32> to vector<24x64xf32>
    %305 = arith.addf %302, %304 : vector<24x64xf32>
    %cst_112 = arith.constant 5.000000e-01 : f32
    %306 = vector.broadcast %cst_112 : f32 to vector<24x64xf32>
    %307 = arith.mulf %306, %305 : vector<24x64xf32>
    %cst_113 = arith.constant 0.707106769 : f32
    %308 = vector.broadcast %cst_113 : f32 to vector<24x64xf32>
    %309 = arith.mulf %305, %308 : vector<24x64xf32>
    %310 = math.erf %309 : vector<24x64xf32>
    %cst_114 = arith.constant 1.000000e+00 : f32
    %311 = vector.broadcast %cst_114 : f32 to vector<24x64xf32>
    %312 = arith.addf %311, %310 : vector<24x64xf32>
    %313 = arith.mulf %307, %312 : vector<24x64xf32>
    %c0_115 = arith.constant 0 : index
    %c0_116 = arith.constant 0 : index
    %314 = vector.load %arg30[%c0_115, %c0_116] : memref<64x32xf32, #tpu.memory_space<vmem>>, vector<64x32xf32>
    %cst_117 = arith.constant dense<0.000000e+00> : vector<24x32xf32>
    %315 = tpu.matmul %313, %314, %cst_117 {dimension_numbers = #tpu.dot_dimension_numbers<[1], [0], [0], [1], [0, 0, 1, 1], [], []>} : vector<24x64xf32>, vector<64x32xf32>, vector<24x32xf32> -> vector<24x32xf32>
    %c0_118 = arith.constant 0 : index
    %c0_119 = arith.constant 0 : index
    %316 = vector.load %arg31[%c0_118, %c0_119] : memref<1x32xf32, #tpu.memory_space<vmem>>, vector<1x32xf32>
    %317 = vector.broadcast %316 : vector<1x32xf32> to vector<24x32xf32>
    %318 = arith.addf %315, %317 : vector<24x32xf32>
    %319 = arith.addf %318, %276 : vector<24x32xf32>
    %320 = vector.extract_strided_slice %319 {offsets = [0, 0], sizes = [1, 32], strides = [1, 1]} : vector<24x32xf32> to vector<1x32xf32>
    %c0_120 = arith.constant 0 : index
    %c0_121 = arith.constant 0 : index
    %321 = vector.load %arg32[%c0_120, %c0_121] : memref<1x32xf32, #tpu.memory_space<vmem>>, vector<1x32xf32>
    %c0_122 = arith.constant 0 : index
    %c0_123 = arith.constant 0 : index
    %322 = vector.load %arg33[%c0_122, %c0_123] : memref<1x32xf32, #tpu.memory_space<vmem>>, vector<1x32xf32>
    %cst_124 = arith.constant dense<0.000000e+00> : vector<1xf32>
    %323 = vector.multi_reduction <add>, %320, %cst_124 [1] : vector<1x32xf32> to vector<1xf32>
    %324 = vector.shape_cast %323 : vector<1xf32> to vector<1x1xf32>
    %cst_125 = arith.constant 3.200000e+01 : f32
    %325 = vector.broadcast %cst_125 : f32 to vector<1x1xf32>
    %326 = arith.divf %324, %325 : vector<1x1xf32>
    %327 = vector.broadcast %326 : vector<1x1xf32> to vector<1x32xf32>
    %328 = arith.subf %320, %327 : vector<1x32xf32>
    %329 = arith.mulf %328, %328 : vector<1x32xf32>
    %cst_126 = arith.constant dense<0.000000e+00> : vector<1xf32>
    %330 = vector.multi_reduction <add>, %329, %cst_126 [1] : vector<1x32xf32> to vector<1xf32>
    %331 = vector.shape_cast %330 : vector<1xf32> to vector<1x1xf32>
    %cst_127 = arith.constant 3.200000e+01 : f32
    %332 = vector.broadcast %cst_127 : f32 to vector<1x1xf32>
    %333 = arith.divf %331, %332 : vector<1x1xf32>
    %334 = vector.broadcast %326 : vector<1x1xf32> to vector<1x32xf32>
    %335 = arith.subf %320, %334 : vector<1x32xf32>
    %cst_128 = arith.constant 9.99999974E-6 : f32
    %336 = vector.broadcast %cst_128 : f32 to vector<1x1xf32>
    %337 = arith.addf %333, %336 : vector<1x1xf32>
    %338 = math.rsqrt %337 : vector<1x1xf32>
    %339 = vector.broadcast %338 : vector<1x1xf32> to vector<1x32xf32>
    %340 = arith.mulf %335, %339 : vector<1x32xf32>
    %341 = arith.mulf %340, %321 : vector<1x32xf32>
    %342 = arith.addf %341, %322 : vector<1x32xf32>
    %c0_129 = arith.constant 0 : index
    %c0_130 = arith.constant 0 : index
    %343 = vector.load %arg34[%c0_129, %c0_130] : memref<32x10xf32, #tpu.memory_space<vmem>>, vector<32x10xf32>
    %cst_131 = arith.constant dense<0.000000e+00> : vector<1x10xf32>
    %344 = tpu.matmul %342, %343, %cst_131 {dimension_numbers = #tpu.dot_dimension_numbers<[1], [0], [0], [1], [0, 0, 1, 1], [], []>} : vector<1x32xf32>, vector<32x10xf32>, vector<1x10xf32> -> vector<1x10xf32>
    %c0_132 = arith.constant 0 : index
    %c0_133 = arith.constant 0 : index
    %345 = vector.load %arg35[%c0_132, %c0_133] : memref<1x10xf32, #tpu.memory_space<vmem>>, vector<1x10xf32>
    %346 = arith.addf %344, %345 : vector<1x10xf32>
    %c0_134 = arith.constant 0 : index
    %c0_135 = arith.constant 0 : index
    %c0_136 = arith.constant 0 : index
    %347 = vector.load %arg36[%c0_134, %c0_135, %c0_136] : memref<1x1x10xf32, #tpu.memory_space<vmem>>, vector<1x1x10xf32>
    %348 = vector.shape_cast %347 : vector<1x1x10xf32> to vector<1x10xf32>
    %349 = vector.shape_cast %346 : vector<1x10xf32> to vector<1x1x10xf32>
    tpu.vector_store %arg36[%c0_134, %c0_135, %c0_136], %349 {strides = array<i32>} : memref<1x1x10xf32, #tpu.memory_space<vmem>>, vector<1x1x10xf32>,
    return
  }
  func.func @transform_0(%arg0: i32) -> (i32, i32, i32) {
    %c0_i32 = arith.constant 0 : i32
    %c0_i32_0 = arith.constant 0 : i32
    %c0_i32_1 = arith.constant 0 : i32
    return %arg0, %c0_i32, %c0_i32_0 : i32, i32, i32
  }
  func.func @transform_1(%arg0: i32) -> (i32, i32) {
    %c0_i32 = arith.constant 0 : i32
    %c0_i32_0 = arith.constant 0 : i32
    %c0_i32_1 = arith.constant 0 : i32
    return %c0_i32, %c0_i32_0 : i32, i32
  }
  func.func @transform_2(%arg0: i32) -> (i32, i32) {
    %c0_i32 = arith.constant 0 : i32
    %c0_i32_0 = arith.constant 0 : i32
    %c0_i32_1 = arith.constant 0 : i32
    return %c0_i32, %c0_i32_0 : i32, i32
  }
  func.func @transform_3(%arg0: i32) -> (i32, i32) {
    %c0_i32 = arith.constant 0 : i32
    %c0_i32_0 = arith.constant 0 : i32
    %c0_i32_1 = arith.constant 0 : i32
    return %c0_i32, %c0_i32_0 : i32, i32
  }
  func.func @transform_4(%arg0: i32) -> (i32, i32) {
    %c0_i32 = arith.constant 0 : i32
    %c0_i32_0 = arith.constant 0 : i32
    %c0_i32_1 = arith.constant 0 : i32
    return %c0_i32, %c0_i32_0 : i32, i32
  }
  func.func @transform_5(%arg0: i32) -> (i32, i32) {
    %c0_i32 = arith.constant 0 : i32
    %c0_i32_0 = arith.constant 0 : i32
    %c0_i32_1 = arith.constant 0 : i32
    return %c0_i32, %c0_i32_0 : i32, i32
  }
  func.func @transform_6(%arg0: i32) -> (i32, i32) {
    %c0_i32 = arith.constant 0 : i32
    %c0_i32_0 = arith.constant 0 : i32
    %c0_i32_1 = arith.constant 0 : i32
    return %c0_i32, %c0_i32_0 : i32, i32
  }
  func.func @transform_7(%arg0: i32) -> (i32, i32) {
    %c0_i32 = arith.constant 0 : i32
    %c0_i32_0 = arith.constant 0 : i32
    %c0_i32_1 = arith.constant 0 : i32
    return %c0_i32, %c0_i32_0 : i32, i32
  }
  func.func @transform_8(%arg0: i32) -> (i32, i32, i32) {
    %c0_i32 = arith.constant 0 : i32
    %c0_i32_0 = arith.constant 0 : i32
    %c0_i32_1 = arith.constant 0 : i32
    %c0_i32_2 = arith.constant 0 : i32
    return %c0_i32, %c0_i32_0, %c0_i32_1 : i32, i32, i32
  }
  func.func @transform_9(%arg0: i32) -> (i32, i32) {
    %c0_i32 = arith.constant 0 : i32
    %c0_i32_0 = arith.constant 0 : i32
    %c0_i32_1 = arith.constant 0 : i32
    return %c0_i32, %c0_i32_0 : i32, i32
  }
  func.func @transform_10(%arg0: i32) -> (i32, i32) {
    %c0_i32 = arith.constant 0 : i32
    %c0_i32_0 = arith.constant 0 : i32
    %c0_i32_1 = arith.constant 0 : i32
    return %c0_i32, %c0_i32_0 : i32, i32
  }
  func.func @transform_11(%arg0: i32) -> (i32, i32) {
    %c0_i32 = arith.constant 0 : i32
    %c0_i32_0 = arith.constant 0 : i32
    %c0_i32_1 = arith.constant 0 : i32
    return %c0_i32, %c0_i32_0 : i32, i32
  }
  func.func @transform_12(%arg0: i32) -> (i32, i32) {
    %c0_i32 = arith.constant 0 : i32
    %c0_i32_0 = arith.constant 0 : i32
    %c0_i32_1 = arith.constant 0 : i32
    return %c0_i32, %c0_i32_0 : i32, i32
  }
  func.func @transform_13(%arg0: i32) -> (i32, i32) {
    %c0_i32 = arith.constant 0 : i32
    %c0_i32_0 = arith.constant 0 : i32
    %c0_i32_1 = arith.constant 0 : i32
    return %c0_i32, %c0_i32_0 : i32, i32
  }
  func.func @transform_14(%arg0: i32) -> (i32, i32) {
    %c0_i32 = arith.constant 0 : i32
    %c0_i32_0 = arith.constant 0 : i32
    %c0_i32_1 = arith.constant 0 : i32
    return %c0_i32, %c0_i32_0 : i32, i32
  }
  func.func @transform_15(%arg0: i32) -> (i32, i32) {
    %c0_i32 = arith.constant 0 : i32
    %c0_i32_0 = arith.constant 0 : i32
    %c0_i32_1 = arith.constant 0 : i32
    return %c0_i32, %c0_i32_0 : i32, i32
  }
  func.func @transform_16(%arg0: i32) -> (i32, i32) {
    %c0_i32 = arith.constant 0 : i32
    %c0_i32_0 = arith.constant 0 : i32
    %c0_i32_1 = arith.constant 0 : i32
    return %c0_i32, %c0_i32_0 : i32, i32
  }
  func.func @transform_17(%arg0: i32) -> (i32, i32) {
    %c0_i32 = arith.constant 0 : i32
    %c0_i32_0 = arith.constant 0 : i32
    %c0_i32_1 = arith.constant 0 : i32
    return %c0_i32, %c0_i32_0 : i32, i32
  }
  func.func @transform_18(%arg0: i32) -> (i32, i32) {
    %c0_i32 = arith.constant 0 : i32
    %c0_i32_0 = arith.constant 0 : i32
    %c0_i32_1 = arith.constant 0 : i32
    return %c0_i32, %c0_i32_0 : i32, i32
  }
  func.func @transform_19(%arg0: i32) -> (i32, i32) {
    %c0_i32 = arith.constant 0 : i32
    %c0_i32_0 = arith.constant 0 : i32
    %c0_i32_1 = arith.constant 0 : i32
    return %c0_i32, %c0_i32_0 : i32, i32
  }
  func.func @transform_20(%arg0: i32) -> (i32, i32) {
    %c0_i32 = arith.constant 0 : i32
    %c0_i32_0 = arith.constant 0 : i32
    %c0_i32_1 = arith.constant 0 : i32
    return %c0_i32, %c0_i32_0 : i32, i32
  }
  func.func @transform_21(%arg0: i32) -> (i32, i32) {
    %c0_i32 = arith.constant 0 : i32
    %c0_i32_0 = arith.constant 0 : i32
    %c0_i32_1 = arith.constant 0 : i32
    return %c0_i32, %c0_i32_0 : i32, i32
  }
  func.func @transform_22(%arg0: i32) -> (i32, i32) {
    %c0_i32 = arith.constant 0 : i32
    %c0_i32_0 = arith.constant 0 : i32
    %c0_i32_1 = arith.constant 0 : i32
    return %c0_i32, %c0_i32_0 : i32, i32
  }
  func.func @transform_23(%arg0: i32) -> (i32, i32) {
    %c0_i32 = arith.constant 0 : i32
    %c0_i32_0 = arith.constant 0 : i32
    %c0_i32_1 = arith.constant 0 : i32
    return %c0_i32, %c0_i32_0 : i32, i32
  }
  func.func @transform_24(%arg0: i32) -> (i32, i32) {
    %c0_i32 = arith.constant 0 : i32
    %c0_i32_0 = arith.constant 0 : i32
    %c0_i32_1 = arith.constant 0 : i32
    return %c0_i32, %c0_i32_0 : i32, i32
  }
  func.func @transform_25(%arg0: i32) -> (i32, i32) {
    %c0_i32 = arith.constant 0 : i32
    %c0_i32_0 = arith.constant 0 : i32
    %c0_i32_1 = arith.constant 0 : i32
    return %c0_i32, %c0_i32_0 : i32, i32
  }
  func.func @transform_26(%arg0: i32) -> (i32, i32) {
    %c0_i32 = arith.constant 0 : i32
    %c0_i32_0 = arith.constant 0 : i32
    %c0_i32_1 = arith.constant 0 : i32
    return %c0_i32, %c0_i32_0 : i32, i32
  }
  func.func @transform_27(%arg0: i32) -> (i32, i32) {
    %c0_i32 = arith.constant 0 : i32
    %c0_i32_0 = arith.constant 0 : i32
    %c0_i32_1 = arith.constant 0 : i32
    return %c0_i32, %c0_i32_0 : i32, i32
  }
  func.func @transform_28(%arg0: i32) -> (i32, i32) {
    %c0_i32 = arith.constant 0 : i32
    %c0_i32_0 = arith.constant 0 : i32
    %c0_i32_1 = arith.constant 0 : i32
    return %c0_i32, %c0_i32_0 : i32, i32
  }
  func.func @transform_29(%arg0: i32) -> (i32, i32) {
    %c0_i32 = arith.constant 0 : i32
    %c0_i32_0 = arith.constant 0 : i32
    %c0_i32_1 = arith.constant 0 : i32
    return %c0_i32, %c0_i32_0 : i32, i32
  }
  func.func @transform_30(%arg0: i32) -> (i32, i32) {
    %c0_i32 = arith.constant 0 : i32
    %c0_i32_0 = arith.constant 0 : i32
    %c0_i32_1 = arith.constant 0 : i32
    return %c0_i32, %c0_i32_0 : i32, i32
  }
  func.func @transform_31(%arg0: i32) -> (i32, i32) {
    %c0_i32 = arith.constant 0 : i32
    %c0_i32_0 = arith.constant 0 : i32
    %c0_i32_1 = arith.constant 0 : i32
    return %c0_i32, %c0_i32_0 : i32, i32
  }
  func.func @transform_32(%arg0: i32) -> (i32, i32) {
    %c0_i32 = arith.constant 0 : i32
    %c0_i32_0 = arith.constant 0 : i32
    %c0_i32_1 = arith.constant 0 : i32
    return %c0_i32, %c0_i32_0 : i32, i32
  }
  func.func @transform_33(%arg0: i32) -> (i32, i32) {
    %c0_i32 = arith.constant 0 : i32
    %c0_i32_0 = arith.constant 0 : i32
    %c0_i32_1 = arith.constant 0 : i32
    return %c0_i32, %c0_i32_0 : i32, i32
  }
  func.func @transform_34(%arg0: i32) -> (i32, i32) {
    %c0_i32 = arith.constant 0 : i32
    %c0_i32_0 = arith.constant 0 : i32
    %c0_i32_1 = arith.constant 0 : i32
    return %c0_i32, %c0_i32_0 : i32, i32
  }
  func.func @transform_35(%arg0: i32) -> (i32, i32, i32) {
    %c0_i32 = arith.constant 0 : i32
    %c0_i32_0 = arith.constant 0 : i32
    %c0_i32_1 = arith.constant 0 : i32
    return %arg0, %c0_i32, %c0_i32_0 : i32, i32, i32
  }
}

</mosaic_0001>

<llo_original>
// kernel: _lambda_.1
$region0: #{_lambda_.1}
  #allocation0 [shape = 'u32[]', space=smem, size = 0x4, offset = 0x4, fixed_abs, tag = 'smem constant byte address 0x4 - core index']
  #allocation1 [shape = 'u32[144,128]{1,0:T(1,128)}', space=vmem, size = 0x12000, scoped, tag = 'internal scratch']
  %s0 = inlined_call_operand.smem [shape: u32[36], index: -1, kind: input, shape index: {}]
  %s1 = sld [smem:[%s0]]
  %s2 = scalar_lea.smem %s0, 1
  %s3 = sld [smem:[%s2]]
  %s4 = scalar_lea.smem %s0, 2
  %s5 = sld [smem:[%s4]]
  %s6 = scalar_lea.smem %s0, 3
  %s7 = sld [smem:[%s6]]
  %s8 = scalar_lea.smem %s0, 4
  %s9 = sld [smem:[%s8]]
  %s10 = scalar_lea.smem %s0, 5
  %s11 = sld [smem:[%s10]]
  %s12 = scalar_lea.smem %s0, 6
  %s13 = sld [smem:[%s12]]
  %s14 = scalar_lea.smem %s0, 7
  %s15 = sld [smem:[%s14]]
  %s16 = scalar_lea.smem %s0, 8
  %s17 = sld [smem:[%s16]]
  %s18 = scalar_lea.smem %s0, 9
  %s19 = sld [smem:[%s18]]
  %s20 = scalar_lea.smem %s0, 10
  %s21 = sld [smem:[%s20]]
  %s22 = scalar_lea.smem %s0, 11
  %s23 = sld [smem:[%s22]]
  %s24 = scalar_lea.smem %s0, 12
  %s25 = sld [smem:[%s24]]
  %s26 = scalar_lea.smem %s0, 13
  %s27 = sld [smem:[%s26]]
  %s28 = scalar_lea.smem %s0, 14
  %s29 = sld [smem:[%s28]]
  %s30 = scalar_lea.smem %s0, 15
  %s31 = sld [smem:[%s30]]
  %s32 = scalar_lea.smem %s0, 16
  %s33 = sld [smem:[%s32]]
  %s34 = scalar_lea.smem %s0, 17
  %s35 = sld [smem:[%s34]]
  %s36 = scalar_lea.smem %s0, 18
  %s37 = sld [smem:[%s36]]
  %s38 = scalar_lea.smem %s0, 19
  %s39 = sld [smem:[%s38]]
  %s40 = scalar_lea.smem %s0, 20
  %s41 = sld [smem:[%s40]]
  %s42 = scalar_lea.smem %s0, 21
  %s43 = sld [smem:[%s42]]
  %s44 = scalar_lea.smem %s0, 22
  %s45 = sld [smem:[%s44]]
  %s46 = scalar_lea.smem %s0, 23
  %s47 = sld [smem:[%s46]]
  %s48 = scalar_lea.smem %s0, 24
  %s49 = sld [smem:[%s48]]
  %s50 = scalar_lea.smem %s0, 25
  %s51 = sld [smem:[%s50]]
  %s52 = scalar_lea.smem %s0, 26
  %s53 = sld [smem:[%s52]]
  %s54 = scalar_lea.smem %s0, 27
  %s55 = sld [smem:[%s54]]
  %s56 = scalar_lea.smem %s0, 28
  %s57 = sld [smem:[%s56]]
  %s58 = scalar_lea.smem %s0, 29
  %s59 = sld [smem:[%s58]]
  %s60 = scalar_lea.smem %s0, 30
  %s61 = sld [smem:[%s60]]
  %s62 = scalar_lea.smem %s0, 31
  %s63 = sld [smem:[%s62]]
  %s64 = scalar_lea.smem %s0, 32
  %s65 = sld [smem:[%s64]]
  %s66 = scalar_lea.smem %s0, 33
  %s67 = sld [smem:[%s66]]
  %s68 = scalar_lea.smem %s0, 34
  %s69 = sld [smem:[%s68]]
  %s70 = scalar_lea.smem %s0, 35
  %s71 = sld [smem:[%s70]]
  %s72 = sld [smem:[#allocation0]]
  $region173: #{_lambda_.1} parent=0
    _
  %s74 = ssub.s32 1, %s72
  %s75 = scalar_select 0, %s74, %s72
  $region1: #{_lambda_.1} parent=0
    #allocation2 [shape = 'u8[1024]{0}', space=vmem, size = 0x400, scoped, tag = 'output window, operand 0']
    #allocation3 [shape = 's32[2]{0}', space=sflag, size = 0x8, scoped, tag = 'scoped memory for _lambda_.1']
    %76 = vsyncpa [#allocation3], 0
    %s77 = scalar_lea.sflag [#allocation3], 1
    %78 = vsyncpa %s77, 0
    loop: start=0, step=1, limit=4
    $region2: #{_lambda_.1} parent=1 // loop_pre_header
      _
    $region3: #{_lambda_.1} parent=1 // loop_header
      %s80 = sphi 0, %s84
      %p81 = scmp.ge.s32.totalorder %s80, 4
      %s90 = sphi 0, %s92
      %s93 = sphi 0, %s90
      %s94 = sphi 0, %s93
      %s110 = sphi 0, %s94
      %s114 = sphi 0, %s114
      %s116 = sphi 0, %s114
      %s117 = sphi 0, %s116
      %s131 = sphi 0, %s117
      %s135 = sphi 0, %s135
      %s137 = sphi 0, %s135
      %s138 = sphi 0, %s137
      %s152 = sphi 0, %s138
      %s156 = sphi 0, %s156
      %s158 = sphi 0, %s156
      %s159 = sphi 0, %s158
      %s173 = sphi 0, %s159
      %s177 = sphi 0, %s177
      %s179 = sphi 0, %s177
      %s180 = sphi 0, %s179
      %s194 = sphi 0, %s180
      %s198 = sphi 0, %s198
      %s200 = sphi 0, %s198
      %s201 = sphi 0, %s200
      %s215 = sphi 0, %s201
      %s219 = sphi 0, %s219
      %s221 = sphi 0, %s219
      %s222 = sphi 0, %s221
      %s236 = sphi 0, %s222
      %s240 = sphi 0, %s240
      %s242 = sphi 0, %s240
      %s243 = sphi 0, %s242
      %s257 = sphi 0, %s243
      %s261 = sphi 0, %s261
      %s263 = sphi 0, %s261
      %s264 = sphi 0, %s263
      %s278 = sphi 0, %s264
      %s282 = sphi 0, %s282
      %s284 = sphi 0, %s282
      %s285 = sphi 0, %s284
      %s299 = sphi 0, %s285
      %s303 = sphi 0, %s303
      %s305 = sphi 0, %s303
      %s306 = sphi 0, %s305
      %s320 = sphi 0, %s306
      %s324 = sphi 0, %s324
      %s326 = sphi 0, %s324
      %s327 = sphi 0, %s326
      %s341 = sphi 0, %s327
      %s345 = sphi 0, %s345
      %s347 = sphi 0, %s345
      %s348 = sphi 0, %s347
      %s362 = sphi 0, %s348
      %s366 = sphi 0, %s366
      %s368 = sphi 0, %s366
      %s369 = sphi 0, %s368
      %s383 = sphi 0, %s369
      %s387 = sphi 0, %s387
      %s389 = sphi 0, %s387
      %s390 = sphi 0, %s389
      %s404 = sphi 0, %s390
      %s408 = sphi 0, %s408
      %s410 = sphi 0, %s408
      %s411 = sphi 0, %s410
      %s425 = sphi 0, %s411
      %s429 = sphi 0, %s429
      %s431 = sphi 0, %s429
      %s432 = sphi 0, %s431
      %s446 = sphi 0, %s432
      %s450 = sphi 0, %s450
      %s452 = sphi 0, %s450
      %s453 = sphi 0, %s452
      %s467 = sphi 0, %s453
      %s471 = sphi 0, %s471
      %s473 = sphi 0, %s471
      %s474 = sphi 0, %s473
      %s488 = sphi 0, %s474
      %s492 = sphi 0, %s492
      %s494 = sphi 0, %s492
      %s495 = sphi 0, %s494
      %s509 = sphi 0, %s495
      %s513 = sphi 0, %s513
      %s515 = sphi 0, %s513
      %s516 = sphi 0, %s515
      %s530 = sphi 0, %s516
      %s534 = sphi 0, %s534
      %s536 = sphi 0, %s534
      %s537 = sphi 0, %s536
      %s551 = sphi 0, %s537
      %s555 = sphi 0, %s555
      %s557 = sphi 0, %s555
      %s558 = sphi 0, %s557
      %s572 = sphi 0, %s558
      %s576 = sphi 0, %s576
      %s578 = sphi 0, %s576
      %s579 = sphi 0, %s578
      %s593 = sphi 0, %s579
      %s597 = sphi 0, %s597
      %s599 = sphi 0, %s597
      %s600 = sphi 0, %s599
      %s614 = sphi 0, %s600
      %s618 = sphi 0, %s618
      %s620 = sphi 0, %s618
      %s621 = sphi 0, %s620
      %s635 = sphi 0, %s621
      %s639 = sphi 0, %s639
      %s641 = sphi 0, %s639
      %s642 = sphi 0, %s641
      %s656 = sphi 0, %s642
      %s660 = sphi 0, %s660
      %s662 = sphi 0, %s660
      %s663 = sphi 0, %s662
      %s677 = sphi 0, %s663
      %s681 = sphi 0, %s681
      %s683 = sphi 0, %s681
      %s684 = sphi 0, %s683
      %s698 = sphi 0, %s684
      %s702 = sphi 0, %s702
      %s704 = sphi 0, %s702
      %s705 = sphi 0, %s704
      %s719 = sphi 0, %s705
      %s723 = sphi 0, %s723
      %s725 = sphi 0, %s723
      %s726 = sphi 0, %s725
      %s740 = sphi 0, %s726
      %s744 = sphi 0, %s744
      %s746 = sphi 0, %s744
      %s747 = sphi 0, %s746
      %s761 = sphi 0, %s747
      %s765 = sphi 0, %s765
      %s767 = sphi 0, %s765
      %s768 = sphi 0, %s767
      %s782 = sphi 0, %s768
      %s786 = sphi 0, %s786
      %s788 = sphi 0, %s786
      %s789 = sphi 0, %s788
      %s803 = sphi 0, %s789
      %s807 = sphi 0, %s807
      %s809 = sphi 0, %s807
      %s810 = sphi 0, %s809
      %s824 = sphi 0, %s810
      %s830 = sphi 0, %s832
      %s833 = sphi 0, %s830
      %s834 = sphi 0, %s833
      %s850 = sphi 0, %s834
    $region4: #{_lambda_.1} parent=1 // loop_header_branch
      %83 = sbr.rel (%p81) target = $region8
    $region5: #{_lambda_.1} parent=1 // loop_body
      %s85 = ssub.s32 %s80, 1
      %s86 = ssub.s32 %s80, 2
      %s87 = sadd.s32 %s80, 1
      %s88 = ssub.s32 %s80, %s87
      %p89 = scmp.eq.s32.totalorder %s88, 0
      %s91 = sadd.s32 %s90, 1
      %s92 = scalar_select %p89, %s90, %s91
      %p95 = pneg %p89
      %p96 = scmp.eq.s32.totalorder %s80, 1
      %p97 = por %p95, %p96
      %p98 = scmp.ne.s32.totalorder %s90, %s93
      %p99 = scmp.eq.s32.totalorder %s80, 0
      %p100 = por %p98, %p99
      %p101 = scmp.ne.s32.totalorder %s90, %s93
      %p102 = scmp.eq.s32.totalorder %s85, 1
      %p103 = por %p101, %p102
      %p104 = scmp.ne.s32.totalorder %s93, %s94
      %p105 = scmp.eq.s32.totalorder %s85, 0
      %p106 = por %p104, %p105
      %p107 = scmp.ne.s32.totalorder %s93, %s94
      %p108 = scmp.eq.s32.totalorder %s86, 1
      %p109 = por %p107, %p108
      %p111 = scmp.ne.s32.totalorder %s94, %s110
      %p112 = scmp.eq.s32.totalorder %s86, 0
      %p113 = por %p111, %p112
      %s115 = sadd.s32 %s114, 1
      %p118 = scmp.eq.s32.totalorder %s80, 1
      %p119 = scmp.ne.s32.totalorder %s114, %s116
      %p120 = scmp.eq.s32.totalorder %s80, 0
      %p121 = por %p119, %p120
      %p122 = scmp.ne.s32.totalorder %s114, %s116
      %p123 = scmp.eq.s32.totalorder %s85, 1
      %p124 = por %p122, %p123
      %p125 = scmp.ne.s32.totalorder %s116, %s117
      %p126 = scmp.eq.s32.totalorder %s85, 0
      %p127 = por %p125, %p126
      %p128 = scmp.ne.s32.totalorder %s116, %s117
      %p129 = scmp.eq.s32.totalorder %s86, 1
      %p130 = por %p128, %p129
      %p132 = scmp.ne.s32.totalorder %s117, %s131
      %p133 = scmp.eq.s32.totalorder %s86, 0
      %p134 = por %p132, %p133
      %s136 = sadd.s32 %s135, 1
      %p139 = scmp.eq.s32.totalorder %s80, 1
      %p140 = scmp.ne.s32.totalorder %s135, %s137
      %p141 = scmp.eq.s32.totalorder %s80, 0
      %p142 = por %p140, %p141
      %p143 = scmp.ne.s32.totalorder %s135, %s137
      %p144 = scmp.eq.s32.totalorder %s85, 1
      %p145 = por %p143, %p144
      %p146 = scmp.ne.s32.totalorder %s137, %s138
      %p147 = scmp.eq.s32.totalorder %s85, 0
      %p148 = por %p146, %p147
      %p149 = scmp.ne.s32.totalorder %s137, %s138
      %p150 = scmp.eq.s32.totalorder %s86, 1
      %p151 = por %p149, %p150
      %p153 = scmp.ne.s32.totalorder %s138, %s152
      %p154 = scmp.eq.s32.totalorder %s86, 0
      %p155 = por %p153, %p154
      %s157 = sadd.s32 %s156, 1
      %p160 = scmp.eq.s32.totalorder %s80, 1
      %p161 = scmp.ne.s32.totalorder %s156, %s158
      %p162 = scmp.eq.s32.totalorder %s80, 0
      %p163 = por %p161, %p162
      %p164 = scmp.ne.s32.totalorder %s156, %s158
      %p165 = scmp.eq.s32.totalorder %s85, 1
      %p166 = por %p164, %p165
      %p167 = scmp.ne.s32.totalorder %s158, %s159
      %p168 = scmp.eq.s32.totalorder %s85, 0
      %p169 = por %p167, %p168
      %p170 = scmp.ne.s32.totalorder %s158, %s159
      %p171 = scmp.eq.s32.totalorder %s86, 1
      %p172 = por %p170, %p171
      %p174 = scmp.ne.s32.totalorder %s159, %s173
      %p175 = scmp.eq.s32.totalorder %s86, 0
      %p176 = por %p174, %p175
      %s178 = sadd.s32 %s177, 1
      %p181 = scmp.eq.s32.totalorder %s80, 1
      %p182 = scmp.ne.s32.totalorder %s177, %s179
      %p183 = scmp.eq.s32.totalorder %s80, 0
      %p184 = por %p182, %p183
      %p185 = scmp.ne.s32.totalorder %s177, %s179
      %p186 = scmp.eq.s32.totalorder %s85, 1
      %p187 = por %p185, %p186
      %p188 = scmp.ne.s32.totalorder %s179, %s180
      %p189 = scmp.eq.s32.totalorder %s85, 0
      %p190 = por %p188, %p189
      %p191 = scmp.ne.s32.totalorder %s179, %s180
      %p192 = scmp.eq.s32.totalorder %s86, 1
      %p193 = por %p191, %p192
      %p195 = scmp.ne.s32.totalorder %s180, %s194
      %p196 = scmp.eq.s32.totalorder %s86, 0
      %p197 = por %p195, %p196
      %s199 = sadd.s32 %s198, 1
      %p202 = scmp.eq.s32.totalorder %s80, 1
      %p203 = scmp.ne.s32.totalorder %s198, %s200
      %p204 = scmp.eq.s32.totalorder %s80, 0
      %p205 = por %p203, %p204
      %p206 = scmp.ne.s32.totalorder %s198, %s200
      %p207 = scmp.eq.s32.totalorder %s85, 1
      %p208 = por %p206, %p207
      %p209 = scmp.ne.s32.totalorder %s200, %s201
      %p210 = scmp.eq.s32.totalorder %s85, 0
      %p211 = por %p209, %p210
      %p212 = scmp.ne.s32.totalorder %s200, %s201
      %p213 = scmp.eq.s32.totalorder %s86, 1
      %p214 = por %p212, %p213
      %p216 = scmp.ne.s32.totalorder %s201, %s215
      %p217 = scmp.eq.s32.totalorder %s86, 0
      %p218 = por %p216, %p217
      %s220 = sadd.s32 %s219, 1
      %p223 = scmp.eq.s32.totalorder %s80, 1
      %p224 = scmp.ne.s32.totalorder %s219, %s221
      %p225 = scmp.eq.s32.totalorder %s80, 0
      %p226 = por %p224, %p225
      %p227 = scmp.ne.s32.totalorder %s219, %s221
      %p228 = scmp.eq.s32.totalorder %s85, 1
      %p229 = por %p227, %p228
      %p230 = scmp.ne.s32.totalorder %s221, %s222
      %p231 = scmp.eq.s32.totalorder %s85, 0
      %p232 = por %p230, %p231
      %p233 = scmp.ne.s32.totalorder %s221, %s222
      %p234 = scmp.eq.s32.totalorder %s86, 1
      %p235 = por %p233, %p234
      %p237 = scmp.ne.s32.totalorder %s222, %s236
      %p238 = scmp.eq.s32.totalorder %s86, 0
      %p239 = por %p237, %p238
      %s241 = sadd.s32 %s240, 1
      %p244 = scmp.eq.s32.totalorder %s80, 1
      %p245 = scmp.ne.s32.totalorder %s240, %s242
      %p246 = scmp.eq.s32.totalorder %s80, 0
      %p247 = por %p245, %p246
      %p248 = scmp.ne.s32.totalorder %s240, %s242
      %p249 = scmp.eq.s32.totalorder %s85, 1
      %p250 = por %p248, %p249
      %p251 = scmp.ne.s32.totalorder %s242, %s243
      %p252 = scmp.eq.s32.totalorder %s85, 0
      %p253 = por %p251, %p252
      %p254 = scmp.ne.s32.totalorder %s242, %s243
      %p255 = scmp.eq.s32.totalorder %s86, 1
      %p256 = por %p254, %p255
      %p258 = scmp.ne.s32.totalorder %s243, %s257
      %p259 = scmp.eq.s32.totalorder %s86, 0
      %p260 = por %p258, %p259
      %s262 = sadd.s32 %s261, 1
      %p265 = scmp.eq.s32.totalorder %s80, 1
      %p266 = scmp.ne.s32.totalorder %s261, %s263
      %p267 = scmp.eq.s32.totalorder %s80, 0
      %p268 = por %p266, %p267
      %p269 = scmp.ne.s32.totalorder %s261, %s263
      %p270 = scmp.eq.s32.totalorder %s85, 1
      %p271 = por %p269, %p270
      %p272 = scmp.ne.s32.totalorder %s263, %s264
      %p273 = scmp.eq.s32.totalorder %s85, 0
      %p274 = por %p272, %p273
      %p275 = scmp.ne.s32.totalorder %s263, %s264
      %p276 = scmp.eq.s32.totalorder %s86, 1
      %p277 = por %p275, %p276
      %p279 = scmp.ne.s32.totalorder %s264, %s278
      %p280 = scmp.eq.s32.totalorder %s86, 0
      %p281 = por %p279, %p280
      %s283 = sadd.s32 %s282, 1
      %p286 = scmp.eq.s32.totalorder %s80, 1
      %p287 = scmp.ne.s32.totalorder %s282, %s284
      %p288 = scmp.eq.s32.totalorder %s80, 0
      %p289 = por %p287, %p288
      %p290 = scmp.ne.s32.totalorder %s282, %s284
      %p291 = scmp.eq.s32.totalorder %s85, 1
      %p292 = por %p290, %p291
      %p293 = scmp.ne.s32.totalorder %s284, %s285
      %p294 = scmp.eq.s32.totalorder %s85, 0
      %p295 = por %p293, %p294
      %p296 = scmp.ne.s32.totalorder %s284, %s285
      %p297 = scmp.eq.s32.totalorder %s86, 1
      %p298 = por %p296, %p297
      %p300 = scmp.ne.s32.totalorder %s285, %s299
      %p301 = scmp.eq.s32.totalorder %s86, 0
      %p302 = por %p300, %p301
      %s304 = sadd.s32 %s303, 1
      %p307 = scmp.eq.s32.totalorder %s80, 1
      %p308 = scmp.ne.s32.totalorder %s303, %s305
      %p309 = scmp.eq.s32.totalorder %s80, 0
      %p310 = por %p308, %p309
      %p311 = scmp.ne.s32.totalorder %s303, %s305
      %p312 = scmp.eq.s32.totalorder %s85, 1
      %p313 = por %p311, %p312
      %p314 = scmp.ne.s32.totalorder %s305, %s306
      %p315 = scmp.eq.s32.totalorder %s85, 0
      %p316 = por %p314, %p315
      %p317 = scmp.ne.s32.totalorder %s305, %s306
      %p318 = scmp.eq.s32.totalorder %s86, 1
      %p319 = por %p317, %p318
      %p321 = scmp.ne.s32.totalorder %s306, %s320
      %p322 = scmp.eq.s32.totalorder %s86, 0
      %p323 = por %p321, %p322
      %s325 = sadd.s32 %s324, 1
      %p328 = scmp.eq.s32.totalorder %s80, 1
      %p329 = scmp.ne.s32.totalorder %s324, %s326
      %p330 = scmp.eq.s32.totalorder %s80, 0
      %p331 = por %p329, %p330
      %p332 = scmp.ne.s32.totalorder %s324, %s326
      %p333 = scmp.eq.s32.totalorder %s85, 1
      %p334 = por %p332, %p333
      %p335 = scmp.ne.s32.totalorder %s326, %s327
      %p336 = scmp.eq.s32.totalorder %s85, 0
      %p337 = por %p335, %p336
      %p338 = scmp.ne.s32.totalorder %s326, %s327
      %p339 = scmp.eq.s32.totalorder %s86, 1
      %p340 = por %p338, %p339
      %p342 = scmp.ne.s32.totalorder %s327, %s341
      %p343 = scmp.eq.s32.totalorder %s86, 0
      %p344 = por %p342, %p343
      %s346 = sadd.s32 %s345, 1
      %p349 = scmp.eq.s32.totalorder %s80, 1
      %p350 = scmp.ne.s32.totalorder %s345, %s347
      %p351 = scmp.eq.s32.totalorder %s80, 0
      %p352 = por %p350, %p351
      %p353 = scmp.ne.s32.totalorder %s345, %s347
      %p354 = scmp.eq.s32.totalorder %s85, 1
      %p355 = por %p353, %p354
      %p356 = scmp.ne.s32.totalorder %s347, %s348
      %p357 = scmp.eq.s32.totalorder %s85, 0
      %p358 = por %p356, %p357
      %p359 = scmp.ne.s32.totalorder %s347, %s348
      %p360 = scmp.eq.s32.totalorder %s86, 1
      %p361 = por %p359, %p360
      %p363 = scmp.ne.s32.totalorder %s348, %s362
      %p364 = scmp.eq.s32.totalorder %s86, 0
      %p365 = por %p363, %p364
      %s367 = sadd.s32 %s366, 1
      %p370 = scmp.eq.s32.totalorder %s80, 1
      %p371 = scmp.ne.s32.totalorder %s366, %s368
      %p372 = scmp.eq.s32.totalorder %s80, 0
      %p373 = por %p371, %p372
      %p374 = scmp.ne.s32.totalorder %s366, %s368
      %p375 = scmp.eq.s32.totalorder %s85, 1
      %p376 = por %p374, %p375
      %p377 = scmp.ne.s32.totalorder %s368, %s369
      %p378 = scmp.eq.s32.totalorder %s85, 0
      %p379 = por %p377, %p378
      %p380 = scmp.ne.s32.totalorder %s368, %s369
      %p381 = scmp.eq.s32.totalorder %s86, 1
      %p382 = por %p380, %p381
      %p384 = scmp.ne.s32.totalorder %s369, %s383
      %p385 = scmp.eq.s32.totalorder %s86, 0
      %p386 = por %p384, %p385
      %s388 = sadd.s32 %s387, 1
      %p391 = scmp.eq.s32.totalorder %s80, 1
      %p392 = scmp.ne.s32.totalorder %s387, %s389
      %p393 = scmp.eq.s32.totalorder %s80, 0
      %p394 = por %p392, %p393
      %p395 = scmp.ne.s32.totalorder %s387, %s389
      %p396 = scmp.eq.s32.totalorder %s85, 1
      %p397 = por %p395, %p396
      %p398 = scmp.ne.s32.totalorder %s389, %s390
      %p399 = scmp.eq.s32.totalorder %s85, 0
      %p400 = por %p398, %p399
      %p401 = scmp.ne.s32.totalorder %s389, %s390
      %p402 = scmp.eq.s32.totalorder %s86, 1
      %p403 = por %p401, %p402
      %p405 = scmp.ne.s32.totalorder %s390, %s404
      %p406 = scmp.eq.s32.totalorder %s86, 0
      %p407 = por %p405, %p406
      %s409 = sadd.s32 %s408, 1
      %p412 = scmp.eq.s32.totalorder %s80, 1
      %p413 = scmp.ne.s32.totalorder %s408, %s410
      %p414 = scmp.eq.s32.totalorder %s80, 0
      %p415 = por %p413, %p414
      %p416 = scmp.ne.s32.totalorder %s408, %s410
      %p417 = scmp.eq.s32.totalorder %s85, 1
      %p418 = por %p416, %p417
      %p419 = scmp.ne.s32.totalorder %s410, %s411
      %p420 = scmp.eq.s32.totalorder %s85, 0
      %p421 = por %p419, %p420
      %p422 = scmp.ne.s32.totalorder %s410, %s411
      %p423 = scmp.eq.s32.totalorder %s86, 1
      %p424 = por %p422, %p423
      %p426 = scmp.ne.s32.totalorder %s411, %s425
      %p427 = scmp.eq.s32.totalorder %s86, 0
      %p428 = por %p426, %p427
      %s430 = sadd.s32 %s429, 1
      %p433 = scmp.eq.s32.totalorder %s80, 1
      %p434 = scmp.ne.s32.totalorder %s429, %s431
      %p435 = scmp.eq.s32.totalorder %s80, 0
      %p436 = por %p434, %p435
      %p437 = scmp.ne.s32.totalorder %s429, %s431
      %p438 = scmp.eq.s32.totalorder %s85, 1
      %p439 = por %p437, %p438
      %p440 = scmp.ne.s32.totalorder %s431, %s432
      %p441 = scmp.eq.s32.totalorder %s85, 0
      %p442 = por %p440, %p441
      %p443 = scmp.ne.s32.totalorder %s431, %s432
      %p444 = scmp.eq.s32.totalorder %s86, 1
      %p445 = por %p443, %p444
      %p447 = scmp.ne.s32.totalorder %s432, %s446
      %p448 = scmp.eq.s32.totalorder %s86, 0
      %p449 = por %p447, %p448
      %s451 = sadd.s32 %s450, 1
      %p454 = scmp.eq.s32.totalorder %s80, 1
      %p455 = scmp.ne.s32.totalorder %s450, %s452
      %p456 = scmp.eq.s32.totalorder %s80, 0
      %p457 = por %p455, %p456
      %p458 = scmp.ne.s32.totalorder %s450, %s452
      %p459 = scmp.eq.s32.totalorder %s85, 1
      %p460 = por %p458, %p459
      %p461 = scmp.ne.s32.totalorder %s452, %s453
      %p462 = scmp.eq.s32.totalorder %s85, 0
      %p463 = por %p461, %p462
      %p464 = scmp.ne.s32.totalorder %s452, %s453
      %p465 = scmp.eq.s32.totalorder %s86, 1
      %p466 = por %p464, %p465
      %p468 = scmp.ne.s32.totalorder %s453, %s467
      %p469 = scmp.eq.s32.totalorder %s86, 0
      %p470 = por %p468, %p469
      %s472 = sadd.s32 %s471, 1
      %p475 = scmp.eq.s32.totalorder %s80, 1
      %p476 = scmp.ne.s32.totalorder %s471, %s473
      %p477 = scmp.eq.s32.totalorder %s80, 0
      %p478 = por %p476, %p477
      %p479 = scmp.ne.s32.totalorder %s471, %s473
      %p480 = scmp.eq.s32.totalorder %s85, 1
      %p481 = por %p479, %p480
      %p482 = scmp.ne.s32.totalorder %s473, %s474
      %p483 = scmp.eq.s32.totalorder %s85, 0
      %p484 = por %p482, %p483
      %p485 = scmp.ne.s32.totalorder %s473, %s474
      %p486 = scmp.eq.s32.totalorder %s86, 1
      %p487 = por %p485, %p486
      %p489 = scmp.ne.s32.totalorder %s474, %s488
      %p490 = scmp.eq.s32.totalorder %s86, 0
      %p491 = por %p489, %p490
      %s493 = sadd.s32 %s492, 1
      %p496 = scmp.eq.s32.totalorder %s80, 1
      %p497 = scmp.ne.s32.totalorder %s492, %s494
      %p498 = scmp.eq.s32.totalorder %s80, 0
      %p499 = por %p497, %p498
      %p500 = scmp.ne.s32.totalorder %s492, %s494
      %p501 = scmp.eq.s32.totalorder %s85, 1
      %p502 = por %p500, %p501
      %p503 = scmp.ne.s32.totalorder %s494, %s495
      %p504 = scmp.eq.s32.totalorder %s85, 0
      %p505 = por %p503, %p504
      %p506 = scmp.ne.s32.totalorder %s494, %s495
      %p507 = scmp.eq.s32.totalorder %s86, 1
      %p508 = por %p506, %p507
      %p510 = scmp.ne.s32.totalorder %s495, %s509
      %p511 = scmp.eq.s32.totalorder %s86, 0
      %p512 = por %p510, %p511
      %s514 = sadd.s32 %s513, 1
      %p517 = scmp.eq.s32.totalorder %s80, 1
      %p518 = scmp.ne.s32.totalorder %s513, %s515
      %p519 = scmp.eq.s32.totalorder %s80, 0
      %p520 = por %p518, %p519
      %p521 = scmp.ne.s32.totalorder %s513, %s515
      %p522 = scmp.eq.s32.totalorder %s85, 1
      %p523 = por %p521, %p522
      %p524 = scmp.ne.s32.totalorder %s515, %s516
      %p525 = scmp.eq.s32.totalorder %s85, 0
      %p526 = por %p524, %p525
      %p527 = scmp.ne.s32.totalorder %s515, %s516
      %p528 = scmp.eq.s32.totalorder %s86, 1
      %p529 = por %p527, %p528
      %p531 = scmp.ne.s32.totalorder %s516, %s530
      %p532 = scmp.eq.s32.totalorder %s86, 0
      %p533 = por %p531, %p532
      %s535 = sadd.s32 %s534, 1
      %p538 = scmp.eq.s32.totalorder %s80, 1
      %p539 = scmp.ne.s32.totalorder %s534, %s536
      %p540 = scmp.eq.s32.totalorder %s80, 0
      %p541 = por %p539, %p540
      %p542 = scmp.ne.s32.totalorder %s534, %s536
      %p543 = scmp.eq.s32.totalorder %s85, 1
      %p544 = por %p542, %p543
      %p545 = scmp.ne.s32.totalorder %s536, %s537
      %p546 = scmp.eq.s32.totalorder %s85, 0
      %p547 = por %p545, %p546
      %p548 = scmp.ne.s32.totalorder %s536, %s537
      %p549 = scmp.eq.s32.totalorder %s86, 1
      %p550 = por %p548, %p549
      %p552 = scmp.ne.s32.totalorder %s537, %s551
      %p553 = scmp.eq.s32.totalorder %s86, 0
      %p554 = por %p552, %p553
      %s556 = sadd.s32 %s555, 1
      %p559 = scmp.eq.s32.totalorder %s80, 1
      %p560 = scmp.ne.s32.totalorder %s555, %s557
      %p561 = scmp.eq.s32.totalorder %s80, 0
      %p562 = por %p560, %p561
      %p563 = scmp.ne.s32.totalorder %s555, %s557
      %p564 = scmp.eq.s32.totalorder %s85, 1
      %p565 = por %p563, %p564
      %p566 = scmp.ne.s32.totalorder %s557, %s558
      %p567 = scmp.eq.s32.totalorder %s85, 0
      %p568 = por %p566, %p567
      %p569 = scmp.ne.s32.totalorder %s557, %s558
      %p570 = scmp.eq.s32.totalorder %s86, 1
      %p571 = por %p569, %p570
      %p573 = scmp.ne.s32.totalorder %s558, %s572
      %p574 = scmp.eq.s32.totalorder %s86, 0
      %p575 = por %p573, %p574
      %s577 = sadd.s32 %s576, 1
      %p580 = scmp.eq.s32.totalorder %s80, 1
      %p581 = scmp.ne.s32.totalorder %s576, %s578
      %p582 = scmp.eq.s32.totalorder %s80, 0
      %p583 = por %p581, %p582
      %p584 = scmp.ne.s32.totalorder %s576, %s578
      %p585 = scmp.eq.s32.totalorder %s85, 1
      %p586 = por %p584, %p585
      %p587 = scmp.ne.s32.totalorder %s578, %s579
      %p588 = scmp.eq.s32.totalorder %s85, 0
      %p589 = por %p587, %p588
      %p590 = scmp.ne.s32.totalorder %s578, %s579
      %p591 = scmp.eq.s32.totalorder %s86, 1
      %p592 = por %p590, %p591
      %p594 = scmp.ne.s32.totalorder %s579, %s593
      %p595 = scmp.eq.s32.totalorder %s86, 0
      %p596 = por %p594, %p595
      %s598 = sadd.s32 %s597, 1
      %p601 = scmp.eq.s32.totalorder %s80, 1
      %p602 = scmp.ne.s32.totalorder %s597, %s599
      %p603 = scmp.eq.s32.totalorder %s80, 0
      %p604 = por %p602, %p603
      %p605 = scmp.ne.s32.totalorder %s597, %s599
      %p606 = scmp.eq.s32.totalorder %s85, 1
      %p607 = por %p605, %p606
      %p608 = scmp.ne.s32.totalorder %s599, %s600
      %p609 = scmp.eq.s32.totalorder %s85, 0
      %p610 = por %p608, %p609
      %p611 = scmp.ne.s32.totalorder %s599, %s600
      %p612 = scmp.eq.s32.totalorder %s86, 1
      %p613 = por %p611, %p612
      %p615 = scmp.ne.s32.totalorder %s600, %s614
      %p616 = scmp.eq.s32.totalorder %s86, 0
      %p617 = por %p615, %p616
      %s619 = sadd.s32 %s618, 1
      %p622 = scmp.eq.s32.totalorder %s80, 1
      %p623 = scmp.ne.s32.totalorder %s618, %s620
      %p624 = scmp.eq.s32.totalorder %s80, 0
      %p625 = por %p623, %p624
      %p626 = scmp.ne.s32.totalorder %s618, %s620
      %p627 = scmp.eq.s32.totalorder %s85, 1
      %p628 = por %p626, %p627
      %p629 = scmp.ne.s32.totalorder %s620, %s621
      %p630 = scmp.eq.s32.totalorder %s85, 0
      %p631 = por %p629, %p630
      %p632 = scmp.ne.s32.totalorder %s620, %s621
      %p633 = scmp.eq.s32.totalorder %s86, 1
      %p634 = por %p632, %p633
      %p636 = scmp.ne.s32.totalorder %s621, %s635
      %p637 = scmp.eq.s32.totalorder %s86, 0
      %p638 = por %p636, %p637
      %s640 = sadd.s32 %s639, 1
      %p643 = scmp.eq.s32.totalorder %s80, 1
      %p644 = scmp.ne.s32.totalorder %s639, %s641
      %p645 = scmp.eq.s32.totalorder %s80, 0
      %p646 = por %p644, %p645
      %p647 = scmp.ne.s32.totalorder %s639, %s641
      %p648 = scmp.eq.s32.totalorder %s85, 1
      %p649 = por %p647, %p648
      %p650 = scmp.ne.s32.totalorder %s641, %s642
      %p651 = scmp.eq.s32.totalorder %s85, 0
      %p652 = por %p650, %p651
      %p653 = scmp.ne.s32.totalorder %s641, %s642
      %p654 = scmp.eq.s32.totalorder %s86, 1
      %p655 = por %p653, %p654
      %p657 = scmp.ne.s32.totalorder %s642, %s656
      %p658 = scmp.eq.s32.totalorder %s86, 0
      %p659 = por %p657, %p658
      %s661 = sadd.s32 %s660, 1
      %p664 = scmp.eq.s32.totalorder %s80, 1
      %p665 = scmp.ne.s32.totalorder %s660, %s662
      %p666 = scmp.eq.s32.totalorder %s80, 0
      %p667 = por %p665, %p666
      %p668 = scmp.ne.s32.totalorder %s660, %s662
      %p669 = scmp.eq.s32.totalorder %s85, 1
      %p670 = por %p668, %p669
      %p671 = scmp.ne.s32.totalorder %s662, %s663
      %p672 = scmp.eq.s32.totalorder %s85, 0
      %p673 = por %p671, %p672
      %p674 = scmp.ne.s32.totalorder %s662, %s663
      %p675 = scmp.eq.s32.totalorder %s86, 1
      %p676 = por %p674, %p675
      %p678 = scmp.ne.s32.totalorder %s663, %s677
      %p679 = scmp.eq.s32.totalorder %s86, 0
      %p680 = por %p678, %p679
      %s682 = sadd.s32 %s681, 1
      %p685 = scmp.eq.s32.totalorder %s80, 1
      %p686 = scmp.ne.s32.totalorder %s681, %s683
      %p687 = scmp.eq.s32.totalorder %s80, 0
      %p688 = por %p686, %p687
      %p689 = scmp.ne.s32.totalorder %s681, %s683
      %p690 = scmp.eq.s32.totalorder %s85, 1
      %p691 = por %p689, %p690
      %p692 = scmp.ne.s32.totalorder %s683, %s684
      %p693 = scmp.eq.s32.totalorder %s85, 0
      %p694 = por %p692, %p693
      %p695 = scmp.ne.s32.totalorder %s683, %s684
      %p696 = scmp.eq.s32.totalorder %s86, 1
      %p697 = por %p695, %p696
      %p699 = scmp.ne.s32.totalorder %s684, %s698
      %p700 = scmp.eq.s32.totalorder %s86, 0
      %p701 = por %p699, %p700
      %s703 = sadd.s32 %s702, 1
      %p706 = scmp.eq.s32.totalorder %s80, 1
      %p707 = scmp.ne.s32.totalorder %s702, %s704
      %p708 = scmp.eq.s32.totalorder %s80, 0
      %p709 = por %p707, %p708
      %p710 = scmp.ne.s32.totalorder %s702, %s704
      %p711 = scmp.eq.s32.totalorder %s85, 1
      %p712 = por %p710, %p711
      %p713 = scmp.ne.s32.totalorder %s704, %s705
      %p714 = scmp.eq.s32.totalorder %s85, 0
      %p715 = por %p713, %p714
      %p716 = scmp.ne.s32.totalorder %s704, %s705
      %p717 = scmp.eq.s32.totalorder %s86, 1
      %p718 = por %p716, %p717
      %p720 = scmp.ne.s32.totalorder %s705, %s719
      %p721 = scmp.eq.s32.totalorder %s86, 0
      %p722 = por %p720, %p721
      %s724 = sadd.s32 %s723, 1
      %p727 = scmp.eq.s32.totalorder %s80, 1
      %p728 = scmp.ne.s32.totalorder %s723, %s725
      %p729 = scmp.eq.s32.totalorder %s80, 0
      %p730 = por %p728, %p729
      %p731 = scmp.ne.s32.totalorder %s723, %s725
      %p732 = scmp.eq.s32.totalorder %s85, 1
      %p733 = por %p731, %p732
      %p734 = scmp.ne.s32.totalorder %s725, %s726
      %p735 = scmp.eq.s32.totalorder %s85, 0
      %p736 = por %p734, %p735
      %p737 = scmp.ne.s32.totalorder %s725, %s726
      %p738 = scmp.eq.s32.totalorder %s86, 1
      %p739 = por %p737, %p738
      %p741 = scmp.ne.s32.totalorder %s726, %s740
      %p742 = scmp.eq.s32.totalorder %s86, 0
      %p743 = por %p741, %p742
      %s745 = sadd.s32 %s744, 1
      %p748 = scmp.eq.s32.totalorder %s80, 1
      %p749 = scmp.ne.s32.totalorder %s744, %s746
      %p750 = scmp.eq.s32.totalorder %s80, 0
      %p751 = por %p749, %p750
      %p752 = scmp.ne.s32.totalorder %s744, %s746
      %p753 = scmp.eq.s32.totalorder %s85, 1
      %p754 = por %p752, %p753
      %p755 = scmp.ne.s32.totalorder %s746, %s747
      %p756 = scmp.eq.s32.totalorder %s85, 0
      %p757 = por %p755, %p756
      %p758 = scmp.ne.s32.totalorder %s746, %s747
      %p759 = scmp.eq.s32.totalorder %s86, 1
      %p760 = por %p758, %p759
      %p762 = scmp.ne.s32.totalorder %s747, %s761
      %p763 = scmp.eq.s32.totalorder %s86, 0
      %p764 = por %p762, %p763
      %s766 = sadd.s32 %s765, 1
      %p769 = scmp.eq.s32.totalorder %s80, 1
      %p770 = scmp.ne.s32.totalorder %s765, %s767
      %p771 = scmp.eq.s32.totalorder %s80, 0
      %p772 = por %p770, %p771
      %p773 = scmp.ne.s32.totalorder %s765, %s767
      %p774 = scmp.eq.s32.totalorder %s85, 1
      %p775 = por %p773, %p774
      %p776 = scmp.ne.s32.totalorder %s767, %s768
      %p777 = scmp.eq.s32.totalorder %s85, 0
      %p778 = por %p776, %p777
      %p779 = scmp.ne.s32.totalorder %s767, %s768
      %p780 = scmp.eq.s32.totalorder %s86, 1
      %p781 = por %p779, %p780
      %p783 = scmp.ne.s32.totalorder %s768, %s782
      %p784 = scmp.eq.s32.totalorder %s86, 0
      %p785 = por %p783, %p784
      %s787 = sadd.s32 %s786, 1
      %p790 = scmp.eq.s32.totalorder %s80, 1
      %p791 = scmp.ne.s32.totalorder %s786, %s788
      %p792 = scmp.eq.s32.totalorder %s80, 0
      %p793 = por %p791, %p792
      %p794 = scmp.ne.s32.totalorder %s786, %s788
      %p795 = scmp.eq.s32.totalorder %s85, 1
      %p796 = por %p794, %p795
      %p797 = scmp.ne.s32.totalorder %s788, %s789
      %p798 = scmp.eq.s32.totalorder %s85, 0
      %p799 = por %p797, %p798
      %p800 = scmp.ne.s32.totalorder %s788, %s789
      %p801 = scmp.eq.s32.totalorder %s86, 1
      %p802 = por %p800, %p801
      %p804 = scmp.ne.s32.totalorder %s789, %s803
      %p805 = scmp.eq.s32.totalorder %s86, 0
      %p806 = por %p804, %p805
      %s808 = sadd.s32 %s807, 1
      %p811 = scmp.eq.s32.totalorder %s80, 1
      %p812 = scmp.ne.s32.totalorder %s807, %s809
      %p813 = scmp.eq.s32.totalorder %s80, 0
      %p814 = por %p812, %p813
      %p815 = scmp.ne.s32.totalorder %s807, %s809
      %p816 = scmp.eq.s32.totalorder %s85, 1
      %p817 = por %p815, %p816
      %p818 = scmp.ne.s32.totalorder %s809, %s810
      %p819 = scmp.eq.s32.totalorder %s85, 0
      %p820 = por %p818, %p819
      %p821 = scmp.ne.s32.totalorder %s809, %s810
      %p822 = scmp.eq.s32.totalorder %s86, 1
      %p823 = por %p821, %p822
      %p825 = scmp.ne.s32.totalorder %s810, %s824
      %p826 = scmp.eq.s32.totalorder %s86, 0
      %p827 = por %p825, %p826
      %s828 = ssub.s32 %s80, %s87
      %p829 = scmp.eq.s32.totalorder %s828, 0
      %s831 = sadd.s32 %s830, 1
      %s832 = scalar_select %p829, %s830, %s831
      %p835 = pneg %p829
      %p836 = scmp.eq.s32.totalorder %s80, 1
      %p837 = por %p835, %p836
      %p838 = scmp.ne.s32.totalorder %s830, %s833
      %p839 = scmp.eq.s32.totalorder %s80, 0
      %p840 = por %p838, %p839
      %p841 = scmp.ne.s32.totalorder %s830, %s833
      %p842 = scmp.eq.s32.totalorder %s85, 1
      %p843 = por %p841, %p842
      %p844 = scmp.ne.s32.totalorder %s833, %s834
      %p845 = scmp.eq.s32.totalorder %s85, 0
      %p846 = por %p844, %p845
      %p847 = scmp.ne.s32.totalorder %s833, %s834
      %p848 = scmp.eq.s32.totalorder %s86, 1
      %p849 = por %p847, %p848
      %p851 = scmp.ne.s32.totalorder %s834, %s850
      %p852 = scmp.eq.s32.totalorder %s86, 0
      %p853 = por %p851, %p852
      %p854 = scmp.le.s32.totalorder 1, %s80
      %p855 = scmp.lt.s32.totalorder %s80, 3
      %p856 = pnand %p854, %p855
      %p857 = pneg %p856
      // Predicated region
      $region9: #{_lambda_.1} parent=5 // pred_check
        _
      $region10: #{_lambda_.1} parent=5 // pred_check_branch
        %859 = sbr.rel (%p856) target = $region12
      $region11: #{_lambda_.1} parent=5 // pred_region
        %s860 = ssub.s32 %s80, 1
        // Predicated region
        $region13: #{_lambda_.1} parent=11 // pred_check
          %p861 = pneg %p127
        $region14: #{_lambda_.1} parent=11 // pred_check_branch
          %863 = sbr.rel (%p861) target = $region16
        $region15: #{_lambda_.1} parent=11 // pred_region
          _
        $region16: #{_lambda_.1} parent=11 // pred_fallthru
          _
        // Predicated region
        $region17: #{_lambda_.1} parent=11 // pred_check
          %p864 = pneg %p148
        $region18: #{_lambda_.1} parent=11 // pred_check_branch
          %866 = sbr.rel (%p864) target = $region20
        $region19: #{_lambda_.1} parent=11 // pred_region
          _
        $region20: #{_lambda_.1} parent=11 // pred_fallthru
          _
        // Predicated region
        $region21: #{_lambda_.1} parent=11 // pred_check
          %p867 = pneg %p169
        $region22: #{_lambda_.1} parent=11 // pred_check_branch
          %869 = sbr.rel (%p867) target = $region24
        $region23: #{_lambda_.1} parent=11 // pred_region
          _
        $region24: #{_lambda_.1} parent=11 // pred_fallthru
          _
        // Predicated region
        $region25: #{_lambda_.1} parent=11 // pred_check
          %p870 = pneg %p190
        $region26: #{_lambda_.1} parent=11 // pred_check_branch
          %872 = sbr.rel (%p870) target = $region28
        $region27: #{_lambda_.1} parent=11 // pred_region
          _
        $region28: #{_lambda_.1} parent=11 // pred_fallthru
          _
        // Predicated region
        $region29: #{_lambda_.1} parent=11 // pred_check
          %p873 = pneg %p211
        $region30: #{_lambda_.1} parent=11 // pred_check_branch
          %875 = sbr.rel (%p873) target = $region32
        $region31: #{_lambda_.1} parent=11 // pred_region
          _
        $region32: #{_lambda_.1} parent=11 // pred_fallthru
          _
        // Predicated region
        $region33: #{_lambda_.1} parent=11 // pred_check
          %p876 = pneg %p232
        $region34: #{_lambda_.1} parent=11 // pred_check_branch
          %878 = sbr.rel (%p876) target = $region36
        $region35: #{_lambda_.1} parent=11 // pred_region
          _
        $region36: #{_lambda_.1} parent=11 // pred_fallthru
          _
        // Predicated region
        $region37: #{_lambda_.1} parent=11 // pred_check
          %p879 = pneg %p253
        $region38: #{_lambda_.1} parent=11 // pred_check_branch
          %881 = sbr.rel (%p879) target = $region40
        $region39: #{_lambda_.1} parent=11 // pred_region
          _
        $region40: #{_lambda_.1} parent=11 // pred_fallthru
          _
        // Predicated region
        $region41: #{_lambda_.1} parent=11 // pred_check
          %p882 = pneg %p274
        $region42: #{_lambda_.1} parent=11 // pred_check_branch
          %884 = sbr.rel (%p882) target = $region44
        $region43: #{_lambda_.1} parent=11 // pred_region
          _
        $region44: #{_lambda_.1} parent=11 // pred_fallthru
          _
        // Predicated region
        $region45: #{_lambda_.1} parent=11 // pred_check
          %p885 = pneg %p295
        $region46: #{_lambda_.1} parent=11 // pred_check_branch
          %887 = sbr.rel (%p885) target = $region48
        $region47: #{_lambda_.1} parent=11 // pred_region
          _
        $region48: #{_lambda_.1} parent=11 // pred_fallthru
          _
        // Predicated region
        $region49: #{_lambda_.1} parent=11 // pred_check
          %p888 = pneg %p316
        $region50: #{_lambda_.1} parent=11 // pred_check_branch
          %890 = sbr.rel (%p888) target = $region52
        $region51: #{_lambda_.1} parent=11 // pred_region
          _
        $region52: #{_lambda_.1} parent=11 // pred_fallthru
          _
        // Predicated region
        $region53: #{_lambda_.1} parent=11 // pred_check
          %p891 = pneg %p337
        $region54: #{_lambda_.1} parent=11 // pred_check_branch
          %893 = sbr.rel (%p891) target = $region56
        $region55: #{_lambda_.1} parent=11 // pred_region
          _
        $region56: #{_lambda_.1} parent=11 // pred_fallthru
          _
        // Predicated region
        $region57: #{_lambda_.1} parent=11 // pred_check
          %p894 = pneg %p358
        $region58: #{_lambda_.1} parent=11 // pred_check_branch
          %896 = sbr.rel (%p894) target = $region60
        $region59: #{_lambda_.1} parent=11 // pred_region
          _
        $region60: #{_lambda_.1} parent=11 // pred_fallthru
          _
        // Predicated region
        $region61: #{_lambda_.1} parent=11 // pred_check
          %p897 = pneg %p379
        $region62: #{_lambda_.1} parent=11 // pred_check_branch
          %899 = sbr.rel (%p897) target = $region64
        $region63: #{_lambda_.1} parent=11 // pred_region
          _
        $region64: #{_lambda_.1} parent=11 // pred_fallthru
          _
        // Predicated region
        $region65: #{_lambda_.1} parent=11 // pred_check
          %p900 = pneg %p400
        $region66: #{_lambda_.1} parent=11 // pred_check_branch
          %902 = sbr.rel (%p900) target = $region68
        $region67: #{_lambda_.1} parent=11 // pred_region
          _
        $region68: #{_lambda_.1} parent=11 // pred_fallthru
          _
        // Predicated region
        $region69: #{_lambda_.1} parent=11 // pred_check
          %p903 = pneg %p421
        $region70: #{_lambda_.1} parent=11 // pred_check_branch
          %905 = sbr.rel (%p903) target = $region72
        $region71: #{_lambda_.1} parent=11 // pred_region
          _
        $region72: #{_lambda_.1} parent=11 // pred_fallthru
          _
        // Predicated region
        $region73: #{_lambda_.1} parent=11 // pred_check
          %p906 = pneg %p442
        $region74: #{_lambda_.1} parent=11 // pred_check_branch
          %908 = sbr.rel (%p906) target = $region76
        $region75: #{_lambda_.1} parent=11 // pred_region
          _
        $region76: #{_lambda_.1} parent=11 // pred_fallthru
          _
        // Predicated region
        $region77: #{_lambda_.1} parent=11 // pred_check
          %p909 = pneg %p463
        $region78: #{_lambda_.1} parent=11 // pred_check_branch
          %911 = sbr.rel (%p909) target = $region80
        $region79: #{_lambda_.1} parent=11 // pred_region
          _
        $region80: #{_lambda_.1} parent=11 // pred_fallthru
          _
        // Predicated region
        $region81: #{_lambda_.1} parent=11 // pred_check
          %p912 = pneg %p484
        $region82: #{_lambda_.1} parent=11 // pred_check_branch
          %914 = sbr.rel (%p912) target = $region84
        $region83: #{_lambda_.1} parent=11 // pred_region
          _
        $region84: #{_lambda_.1} parent=11 // pred_fallthru
          _
        // Predicated region
        $region85: #{_lambda_.1} parent=11 // pred_check
          %p915 = pneg %p505
        $region86: #{_lambda_.1} parent=11 // pred_check_branch
          %917 = sbr.rel (%p915) target = $region88
        $region87: #{_lambda_.1} parent=11 // pred_region
          _
        $region88: #{_lambda_.1} parent=11 // pred_fallthru
          _
        // Predicated region
        $region89: #{_lambda_.1} parent=11 // pred_check
          %p918 = pneg %p526
        $region90: #{_lambda_.1} parent=11 // pred_check_branch
          %920 = sbr.rel (%p918) target = $region92
        $region91: #{_lambda_.1} parent=11 // pred_region
          _
        $region92: #{_lambda_.1} parent=11 // pred_fallthru
          _
        // Predicated region
        $region93: #{_lambda_.1} parent=11 // pred_check
          %p921 = pneg %p547
        $region94: #{_lambda_.1} parent=11 // pred_check_branch
          %923 = sbr.rel (%p921) target = $region96
        $region95: #{_lambda_.1} parent=11 // pred_region
          _
        $region96: #{_lambda_.1} parent=11 // pred_fallthru
          _
        // Predicated region
        $region97: #{_lambda_.1} parent=11 // pred_check
          %p924 = pneg %p568
        $region98: #{_lambda_.1} parent=11 // pred_check_branch
          %926 = sbr.rel (%p924) target = $region100
        $region99: #{_lambda_.1} parent=11 // pred_region
          _
        $region100: #{_lambda_.1} parent=11 // pred_fallthru
          _
        // Predicated region
        $region101: #{_lambda_.1} parent=11 // pred_check
          %p927 = pneg %p589
        $region102: #{_lambda_.1} parent=11 // pred_check_branch
          %929 = sbr.rel (%p927) target = $region104
        $region103: #{_lambda_.1} parent=11 // pred_region
          _
        $region104: #{_lambda_.1} parent=11 // pred_fallthru
          _
        // Predicated region
        $region105: #{_lambda_.1} parent=11 // pred_check
          %p930 = pneg %p610
        $region106: #{_lambda_.1} parent=11 // pred_check_branch
          %932 = sbr.rel (%p930) target = $region108
        $region107: #{_lambda_.1} parent=11 // pred_region
          _
        $region108: #{_lambda_.1} parent=11 // pred_fallthru
          _
        // Predicated region
        $region109: #{_lambda_.1} parent=11 // pred_check
          %p933 = pneg %p631
        $region110: #{_lambda_.1} parent=11 // pred_check_branch
          %935 = sbr.rel (%p933) target = $region112
        $region111: #{_lambda_.1} parent=11 // pred_region
          _
        $region112: #{_lambda_.1} parent=11 // pred_fallthru
          _
        // Predicated region
        $region113: #{_lambda_.1} parent=11 // pred_check
          %p936 = pneg %p652
        $region114: #{_lambda_.1} parent=11 // pred_check_branch
          %938 = sbr.rel (%p936) target = $region116
        $region115: #{_lambda_.1} parent=11 // pred_region
          _
        $region116: #{_lambda_.1} parent=11 // pred_fallthru
          _
        // Predicated region
        $region117: #{_lambda_.1} parent=11 // pred_check
          %p939 = pneg %p673
        $region118: #{_lambda_.1} parent=11 // pred_check_branch
          %941 = sbr.rel (%p939) target = $region120
        $region119: #{_lambda_.1} parent=11 // pred_region
          _
        $region120: #{_lambda_.1} parent=11 // pred_fallthru
          _
        // Predicated region
        $region121: #{_lambda_.1} parent=11 // pred_check
          %p942 = pneg %p694
        $region122: #{_lambda_.1} parent=11 // pred_check_branch
          %944 = sbr.rel (%p942) target = $region124
        $region123: #{_lambda_.1} parent=11 // pred_region
          _
        $region124: #{_lambda_.1} parent=11 // pred_fallthru
          _
        // Predicated region
        $region125: #{_lambda_.1} parent=11 // pred_check
          %p945 = pneg %p715
        $region126: #{_lambda_.1} parent=11 // pred_check_branch
          %947 = sbr.rel (%p945) target = $region128
        $region127: #{_lambda_.1} parent=11 // pred_region
          _
        $region128: #{_lambda_.1} parent=11 // pred_fallthru
          _
        // Predicated region
        $region129: #{_lambda_.1} parent=11 // pred_check
          %p948 = pneg %p736
        $region130: #{_lambda_.1} parent=11 // pred_check_branch
          %950 = sbr.rel (%p948) target = $region132
        $region131: #{_lambda_.1} parent=11 // pred_region
          _
        $region132: #{_lambda_.1} parent=11 // pred_fallthru
          _
        // Predicated region
        $region133: #{_lambda_.1} parent=11 // pred_check
          %p951 = pneg %p757
        $region134: #{_lambda_.1} parent=11 // pred_check_branch
          %953 = sbr.rel (%p951) target = $region136
        $region135: #{_lambda_.1} parent=11 // pred_region
          _
        $region136: #{_lambda_.1} parent=11 // pred_fallthru
          _
        // Predicated region
        $region137: #{_lambda_.1} parent=11 // pred_check
          %p954 = pneg %p778
        $region138: #{_lambda_.1} parent=11 // pred_check_branch
          %956 = sbr.rel (%p954) target = $region140
        $region139: #{_lambda_.1} parent=11 // pred_region
          _
        $region140: #{_lambda_.1} parent=11 // pred_fallthru
          _
        // Predicated region
        $region141: #{_lambda_.1} parent=11 // pred_check
          %p957 = pneg %p799
        $region142: #{_lambda_.1} parent=11 // pred_check_branch
          %959 = sbr.rel (%p957) target = $region144
        $region143: #{_lambda_.1} parent=11 // pred_region
          _
        $region144: #{_lambda_.1} parent=11 // pred_fallthru
          _
        // Predicated region
        $region145: #{_lambda_.1} parent=11 // pred_check
          %p960 = pneg %p820
        $region146: #{_lambda_.1} parent=11 // pred_check_branch
          %962 = sbr.rel (%p960) target = $region148
        $region147: #{_lambda_.1} parent=11 // pred_region
          _
        $region148: #{_lambda_.1} parent=11 // pred_fallthru
          _
      $region12: #{_lambda_.1} parent=5 // pred_fallthru
        _
      %p963 = scmp.lt.s32.totalorder %s80, 2
      // Predicated region
      $region149: #{_lambda_.1} parent=5 // pred_check
        %p964 = pneg %p963
      $region150: #{_lambda_.1} parent=5 // pred_check_branch
        %966 = sbr.rel (%p964) target = $region152
      $region151: #{_lambda_.1} parent=5 // pred_region
        // Predicated region
        $region153: #{_lambda_.1} parent=151 // pred_check
          %p967 = pneg %p100
        $region154: #{_lambda_.1} parent=151 // pred_check_branch
          %969 = sbr.rel (%p967) target = $region156
        $region155: #{_lambda_.1} parent=151 // pred_region
          %p970 = scmp.lt.s32.totalorder %s80, 1
          %s971 = scalar_select %p970, %s80, 1
          %s972 = smul.addr %s971, 2
          %s973 = smul.addr %s972, 8
          %s974 = scalar_lea.vmem %s1, %s973
        $region156: #{_lambda_.1} parent=151 // pred_fallthru
          _
      $region152: #{_lambda_.1} parent=5 // pred_fallthru
        _
      %p975 = scmp.le.s32.totalorder 1, %s80
      %p976 = scmp.lt.s32.totalorder %s80, 3
      %p977 = pnand %p975, %p976
      %p978 = pneg %p977
      // Predicated region
      $region157: #{_lambda_.1} parent=5 // pred_check
        _
      $region158: #{_lambda_.1} parent=5 // pred_check_branch
        %980 = sbr.rel (%p977) target = $region160
      $region159: #{_lambda_.1} parent=5 // pred_region
        %s981 = ssub.s32 %s80, 1
        %p982 = scmp.lt.s32.totalorder %s85, 1
        %s983 = scalar_select %p982, %s85, 1
        %s984 = smul.addr %s983, 2
        %s985 = smul.addr %s984, 8
        %s986 = scalar_lea.vmem %s1, %s985
        %p987 = pneg %p106
        %p988 = pneg %p103
        %p989 = pneg %p127
        %p990 = pneg %p124
        %p991 = pneg %p148
        %p992 = pneg %p145
        %p993 = pneg %p169
        %p994 = pneg %p166
        %p995 = pneg %p190
        %p996 = pneg %p187
        %p997 = pneg %p211
        %p998 = pneg %p208
        %p999 = pneg %p232
        %p1000 = pneg %p229
        %p1001 = pneg %p253
        %p1002 = pneg %p250
        %p1003 = pneg %p274
        %p1004 = pneg %p271
        %p1005 = pneg %p295
        %p1006 = pneg %p292
        %p1007 = pneg %p316
        %p1008 = pneg %p313
        %p1009 = pneg %p337
        %p1010 = pneg %p334
        %p1011 = pneg %p358
        %p1012 = pneg %p355
        %p1013 = pneg %p379
        %p1014 = pneg %p376
        %p1015 = pneg %p400
        %p1016 = pneg %p397
        %p1017 = pneg %p421
        %p1018 = pneg %p418
        %p1019 = pneg %p442
        %p1020 = pneg %p439
        %p1021 = pneg %p463
        %p1022 = pneg %p460
        %p1023 = pneg %p484
        %p1024 = pneg %p481
        %p1025 = pneg %p505
        %p1026 = pneg %p502
        %p1027 = pneg %p526
        %p1028 = pneg %p523
        %p1029 = pneg %p547
        %p1030 = pneg %p544
        %p1031 = pneg %p568
        %p1032 = pneg %p565
        %p1033 = pneg %p589
        %p1034 = pneg %p586
        %p1035 = pneg %p610
        %p1036 = pneg %p607
        %p1037 = pneg %p631
        %p1038 = pneg %p628
        %p1039 = pneg %p652
        %p1040 = pneg %p649
        %p1041 = pneg %p673
        %p1042 = pneg %p670
        %p1043 = pneg %p694
        %p1044 = pneg %p691
        %p1045 = pneg %p715
        %p1046 = pneg %p712
        %p1047 = pneg %p736
        %p1048 = pneg %p733
        %p1049 = pneg %p757
        %p1050 = pneg %p754
        %p1051 = pneg %p778
        %p1052 = pneg %p775
        %p1053 = pneg %p799
        %p1054 = pneg %p796
        %p1055 = pneg %p820
        %p1056 = pneg %p817
        %p1057 = pneg %p846
        %p1058 = pneg %p843
        %s1059 = sand.u32 %s833, 1
        %s1060 = scalar_lea.sflag [#allocation3], %s1059
        %s1061 = sand.u32 %s833, 1
        %s1062 = scalar_lea.vmem [#allocation2], %s1061
        %p1063 = scmp.lt.s32.totalorder %s85, 1
        %s1064 = scalar_select %p1063, %s85, 1
        %s1065 = smul.addr %s1064, 2
        %s1066 = smul.addr %s1065, 8
        %s1067 = scalar_lea.vmem %s1, %s1066
        %v1068 = vld [vmem:[%s1067] sm:$0xff]
        %v1069 = vld [vmem:[%s1067 + $0x8] sm:$0xff]
        %v1070 = vld [vmem:[%s3] sm:$0x1]
        %v1071 = vld [vmem:[%s5] sm:$0x1]
        %vm1072 = vcmask 392192
        %v1073 = vsel %vm1072, %v1068, 0.0
        %1074 = vadd.xlane.f32.xlu0 %v1073
        %v1075 = vpop.xlane.xlu0 %1074
        %v1076 = vsel %vm1072, %v1069, 0.0
        %1077 = vadd.xlane.f32.xlu0 %v1076
        %v1078 = vpop.xlane.xlu0 %1077
        %v1079 = vrcp.pop 48.0
        %v1080 = vmul.f32 %v1075, %v1079
        %v1081 = vmul.f32 %v1078, %v1079
        %v1082 = vsub.f32 %v1068, %v1080
        %v1083 = vsub.f32 %v1069, %v1081
        %v1084 = vmul.f32 %v1082, %v1082
        %v1085 = vmul.f32 %v1083, %v1083
        %v1086 = vsel %vm1072, %v1084, 0.0
        %1087 = vadd.xlane.f32.xlu0 %v1086
        %v1088 = vpop.xlane.xlu0 %1087
        %v1089 = vsel %vm1072, %v1085, 0.0
        %1090 = vadd.xlane.f32.xlu0 %v1089
        %v1091 = vpop.xlane.xlu0 %1090
        %v1092 = vmul.f32 %v1088, %v1079
        %v1093 = vmul.f32 %v1091, %v1079
        %v1094 = vadd.f32 %v1092, 1e-05
        %v1095 = vadd.f32 %v1093, 1e-05
        %v1096 = vrsqrt.pop %v1094
        %v1097 = vrsqrt.pop %v1095
        %v1098 = vmul.f32 %v1082, %v1096
        %v1099 = vmul.f32 %v1083, %v1097
        %v1101 = vlaneseq
        %v1102 = vshrl.u32 %v1101, 7
        %v1103 = vsub.s32 0, %v1102
        %v1104 = vrot.slane %v1070, %v1103
        %v1106 = vmul.f32 %v1098, %v1104
        %v1107 = vmul.f32 %v1099, %v1104
        %v1109 = vlaneseq
        %v1110 = vshrl.u32 %v1109, 7
        %v1111 = vsub.s32 0, %v1110
        %v1112 = vrot.slane %v1071, %v1111
        %v1114 = vadd.f32 %v1106, %v1112
        %v1115 = vadd.f32 %v1107, %v1112
        %v1116 = vld [vmem:[%s7] sm:$0xff]
        %v1117 = vld [vmem:[%s7 + $0x8] sm:$0xff]
        %v1118 = vld [vmem:[%s7 + $0x10] sm:$0xff]
        %v1119 = vld [vmem:[%s7 + $0x18] sm:$0xff]
        %v1120 = vld [vmem:[%s7 + $0x20] sm:$0xff]
        %v1121 = vld [vmem:[%s7 + $0x28] sm:$0xff]
        %v1122 = vld [vmem:[%s9] sm:$0x1]
        %v1124 = vlaneseq
        %v1125 = vshrl.u32 %v1124, 7
        %v1126 = vsub.s32 0, %v1125
        %v1127 = vrot.slane %v1122, %v1126
        %v1130 = vsel %vm1072, %v1114, 0
        %v1133 = vsel %vm1072, %v1115, 0
        %1135 = vmatprep.subr.mxu0 0.0
        %1136 = vmatpush1.msra.mxu0 %v1116
        %1137 = vmatprep.subr.mxu0 0.0
        %1138 = vmatpush1.msra.mxu0 %v1117
        %1139 = vmatprep.subr.mxu0 0.0
        %1140 = vmatpush1.msra.mxu0 %v1118
        %1141 = vmatprep.subr.mxu0 0.0
        %1142 = vmatpush1.msra.mxu0 %v1119
        %1143 = vmatprep.subr.mxu0 0.0
        %1144 = vmatpush1.msra.mxu0 %v1120
        %1145 = vmatprep.subr.mxu0 0.0
        %1146 = vmatpush1.msra.mxu0 %v1121
        %1147 = vmatprep.subr.mxu0 0.0
        %1148 = vmatpush1.msra.mxu0 0.0
        %1149 = vmatprep.subr.mxu0 0.0
        %1150 = vmatpush1.msra.mxu0 0.0
        %1151 = vmatprep.subr.mxu0 0.0
        %1152 = vmatpush1.msra.mxu0 0.0
        %1153 = vmatprep.subr.mxu0 0.0
        %1154 = vmatpush1.msra.mxu0 0.0
        %1155 = vmatprep.subr.mxu0 0.0
        %1156 = vmatpush1.msra.mxu0 0.0
        %1157 = vmatprep.subr.mxu0 0.0
        %1158 = vmatpush1.msra.mxu0 0.0
        %1159 = vmatprep.subr.mxu0 0.0
        %1160 = vmatpush1.msra.mxu0 0.0
        %1161 = vmatprep.subr.mxu0 0.0
        %1162 = vmatpush1.msra.mxu0 0.0
        %1163 = vmatprep.subr.mxu0 0.0
        %1164 = vmatpush1.msra.mxu0 0.0
        %1165 = vmatprep.subr.mxu0 0.0
        %1166 = vmatpush1.msra.mxu0 0.0
        %1167 = vmatprep.subr.mxu0 0.0
        %1168 = vmatpush1.msra.mxu0 0.0
        %1169 = vmatprep.subr.mxu0 0.0
        %1170 = vmatpush1.msra.mxu0 0.0
        %1171 = vmatprep.subr.mxu0 0.0
        %1172 = vmatpush1.msra.mxu0 0.0
        %1173 = vmatprep.subr.mxu0 0.0
        %1174 = vmatpush1.msra.mxu0 0.0
        %1175 = vmatprep.subr.mxu0 0.0
        %1176 = vmatpush1.msra.mxu0 0.0
        %1177 = vmatprep.subr.mxu0 0.0
        %1178 = vmatpush1.msra.mxu0 0.0
        %1179 = vmatprep.subr.mxu0 0.0
        %1180 = vmatpush1.msra.mxu0 0.0
        %1181 = vmatprep.subr.mxu0 0.0
        %1182 = vmatpush1.msra.mxu0 0.0
        %1183 = vmatprep.subr.mxu0 0.0
        %1184 = vmatpush1.msra.mxu0 0.0
        %1185 = vmatprep.subr.mxu0 0.0
        %1186 = vmatpush1.msra.mxu0 0.0
        %1187 = vmatprep.subr.mxu0 0.0
        %1188 = vmatpush1.msra.mxu0 0.0
        %1189 = vmatprep.subr.mxu0 0.0
        %1190 = vmatpush1.msra.mxu0 0.0
        %1191 = vmatprep.subr.mxu0 0.0
        %1192 = vmatpush1.msra.mxu0 0.0
        %1193 = vmatprep.subr.mxu0 0.0
        %1194 = vmatpush1.msra.mxu0 0.0
        %1195 = vmatprep.subr.mxu0 0.0
        %1196 = vmatpush1.msra.mxu0 0.0
        %1197 = vmatprep.subr.mxu0 0.0
        %1198 = vmatpush1.msra.mxu0 0.0
        %1199 = vmatprep.mubr.f32.mxu0 0.0
        %1200 = vmatmul.mubr.f32.gmra.mrb[0].mxu0 %v1130
        %v1201 = vpop.f32.mrb[0].mxu0
        %v1202 = vadd.f32 %v1127, %v1201
        %v1203 = vpop.f32.mrb[0].mxu0
        %1204 = vmatprep.mubr.f32.mxu0 0.0
        %1205 = vmatmul.mubr.f32.gmra.mrb[0].mxu0 %v1133
        %v1206 = vpop.f32.mrb[0].mxu0
        %v1207 = vadd.f32 %v1127, %v1206
        %v1208 = vpop.f32.mrb[0].mxu0
        %1209 = vdwg.mxu0
        %v1210 = vld [vmem:[%s11] sm:$0x1]
        %v1211 = vld [vmem:[%s13] sm:$0x1]
        %vm1212 = vcmask 261120
        %v1213 = vsel %vm1212, %v1202, 0.0
        %1214 = vadd.xlane.f32.xlu0 %v1213
        %v1215 = vpop.xlane.xlu0 %1214
        %v1216 = vsel %vm1212, %v1207, 0.0
        %1217 = vadd.xlane.f32.xlu0 %v1216
        %v1218 = vpop.xlane.xlu0 %1217
        %v1219 = vrcp.pop 32.0
        %v1220 = vmul.f32 %v1215, %v1219
        %v1221 = vmul.f32 %v1218, %v1219
        %v1222 = vsub.f32 %v1202, %v1220
        %v1223 = vsub.f32 %v1207, %v1221
        %v1224 = vmul.f32 %v1222, %v1222
        %v1225 = vmul.f32 %v1223, %v1223
        %v1226 = vsel %vm1212, %v1224, 0.0
        %1227 = vadd.xlane.f32.xlu0 %v1226
        %v1228 = vpop.xlane.xlu0 %1227
        %v1229 = vsel %vm1212, %v1225, 0.0
        %1230 = vadd.xlane.f32.xlu0 %v1229
        %v1231 = vpop.xlane.xlu0 %1230
        %v1232 = vmul.f32 %v1228, %v1219
        %v1233 = vmul.f32 %v1231, %v1219
        %v1234 = vadd.f32 %v1232, 1e-05
        %v1235 = vadd.f32 %v1233, 1e-05
        %v1236 = vrsqrt.pop %v1234
        %v1237 = vrsqrt.pop %v1235
        %v1238 = vmul.f32 %v1222, %v1236
        %v1239 = vmul.f32 %v1223, %v1237
        %v1241 = vlaneseq
        %v1242 = vshrl.u32 %v1241, 7
        %v1243 = vsub.s32 0, %v1242
        %v1244 = vrot.slane %v1210, %v1243
        %v1246 = vmul.f32 %v1238, %v1244
        %v1247 = vmul.f32 %v1239, %v1244
        %v1249 = vlaneseq
        %v1250 = vshrl.u32 %v1249, 7
        %v1251 = vsub.s32 0, %v1250
        %v1252 = vrot.slane %v1211, %v1251
        %v1254 = vadd.f32 %v1246, %v1252
        %v1255 = vadd.f32 %v1247, %v1252
        %v1256 = vld [vmem:[%s15] sm:$0x1]
        %vm1259 = vcmask 1040384
        %v1260 = vrot.slane %v1254, 7
        %v1261 = vrot.slane %v1255, 7
        %v1262 = vsel %vm1259, %v1260, %v1261
        %v1266 = vsel %vm1259, %v1256, %v1260
        %v1267 = vsel %vm1259, %v1261, 0.0
        %v1268 = vld [vmem:[%s17] sm:$0xff]
        %v1269 = vld [vmem:[%s17 + $0x8] sm:$0xff]
        %v1270 = vld [vmem:[%s17 + $0x10] sm:$0xff]
        %v1271 = vadd.f32 %v1266, %v1268
        %v1272 = vadd.f32 %v1262, %v1269
        %v1273 = vadd.f32 %v1267, %v1270
        %v1274 = vlaneseq
        %v1275 = vand.u32 %v1274, 127
        %vm1276 = vcmp.lt.s32.totalorder %v1275, 17
        %v1277 = vld [vmem:[%s19] sm:$0x1]
        %v1278 = vld [vmem:[%s21] sm:$0x1]
        %v1279 = vsel %vm1212, %v1271, 0.0
        %1280 = vadd.xlane.f32.xlu0 %v1279
        %v1281 = vpop.xlane.xlu0 %1280
        %v1282 = vsel %vm1212, %v1272, 0.0
        %1283 = vadd.xlane.f32.xlu0 %v1282
        %v1284 = vpop.xlane.xlu0 %1283
        %v1285 = vsel %vm1212, %v1273, 0.0
        %1286 = vadd.xlane.f32.xlu0 %v1285
        %v1287 = vpop.xlane.xlu0 %1286
        %v1288 = vmul.f32 %v1281, %v1219
        %v1289 = vmul.f32 %v1284, %v1219
        %v1290 = vmul.f32 %v1287, %v1219
        %v1291 = vsub.f32 %v1271, %v1288
        %v1292 = vsub.f32 %v1272, %v1289
        %v1293 = vsub.f32 %v1273, %v1290
        %v1294 = vmul.f32 %v1291, %v1291
        %v1295 = vmul.f32 %v1292, %v1292
        %v1296 = vmul.f32 %v1293, %v1293
        %v1297 = vsel %vm1212, %v1294, 0.0
        %1298 = vadd.xlane.f32.xlu0 %v1297
        %v1299 = vpop.xlane.xlu0 %1298
        %v1300 = vsel %vm1212, %v1295, 0.0
        %1301 = vadd.xlane.f32.xlu0 %v1300
        %v1302 = vpop.xlane.xlu0 %1301
        %v1303 = vsel %vm1212, %v1296, 0.0
        %1304 = vadd.xlane.f32.xlu0 %v1303
        %v1305 = vpop.xlane.xlu0 %1304
        %v1306 = vmul.f32 %v1299, %v1219
        %v1307 = vmul.f32 %v1302, %v1219
        %v1308 = vmul.f32 %v1305, %v1219
        %v1309 = vadd.f32 %v1306, 1e-05
        %v1310 = vadd.f32 %v1307, 1e-05
        %v1311 = vadd.f32 %v1308, 1e-05
        %v1312 = vrsqrt.pop %v1309
        %v1313 = vrsqrt.pop %v1310
        %v1314 = vrsqrt.pop %v1311
        %v1315 = vmul.f32 %v1291, %v1312
        %v1316 = vmul.f32 %v1292, %v1313
        %v1317 = vmul.f32 %v1293, %v1314
        %v1319 = vlaneseq
        %v1320 = vshrl.u32 %v1319, 7
        %v1321 = vsub.s32 0, %v1320
        %v1322 = vrot.slane %v1277, %v1321
        %v1324 = vmul.f32 %v1315, %v1322
        %v1325 = vmul.f32 %v1316, %v1322
        %v1326 = vmul.f32 %v1317, %v1322
        %v1328 = vlaneseq
        %v1329 = vshrl.u32 %v1328, 7
        %v1330 = vsub.s32 0, %v1329
        %v1331 = vrot.slane %v1278, %v1330
        %v1333 = vadd.f32 %v1324, %v1331
        %v1334 = vadd.f32 %v1325, %v1331
        %v1335 = vadd.f32 %v1326, %v1331
        %v1336 = vld [vmem:[%s23] sm:$0xff]
        %v1337 = vld [vmem:[%s23 + $0x8] sm:$0xff]
        %v1338 = vld [vmem:[%s23 + $0x10] sm:$0xff]
        %v1339 = vld [vmem:[%s23 + $0x18] sm:$0xff]
        %v1341 = vsel %vm1212, %v1333, 0
        %v1344 = vsel %vm1212, %v1334, 0
        %v1347 = vsel %vm1212, %v1335, 0
        %1349 = vmatprep.subr.mxu0 0.0
        %1350 = vmatpush1.msra.mxu0 %v1336
        %1351 = vmatprep.subr.mxu0 0.0
        %1352 = vmatpush1.msra.mxu0 %v1337
        %1353 = vmatprep.subr.mxu0 0.0
        %1354 = vmatpush1.msra.mxu0 %v1338
        %1355 = vmatprep.subr.mxu0 0.0
        %1356 = vmatpush1.msra.mxu0 %v1339
        %1357 = vmatprep.subr.mxu0 0.0
        %1358 = vmatpush1.msra.mxu0 0.0
        %1359 = vmatprep.subr.mxu0 0.0
        %1360 = vmatpush1.msra.mxu0 0.0
        %1361 = vmatprep.subr.mxu0 0.0
        %1362 = vmatpush1.msra.mxu0 0.0
        %1363 = vmatprep.subr.mxu0 0.0
        %1364 = vmatpush1.msra.mxu0 0.0
        %1365 = vmatprep.subr.mxu0 0.0
        %1366 = vmatpush1.msra.mxu0 0.0
        %1367 = vmatprep.subr.mxu0 0.0
        %1368 = vmatpush1.msra.mxu0 0.0
        %1369 = vmatprep.subr.mxu0 0.0
        %1370 = vmatpush1.msra.mxu0 0.0
        %1371 = vmatprep.subr.mxu0 0.0
        %1372 = vmatpush1.msra.mxu0 0.0
        %1373 = vmatprep.subr.mxu0 0.0
        %1374 = vmatpush1.msra.mxu0 0.0
        %1375 = vmatprep.subr.mxu0 0.0
        %1376 = vmatpush1.msra.mxu0 0.0
        %1377 = vmatprep.subr.mxu0 0.0
        %1378 = vmatpush1.msra.mxu0 0.0
        %1379 = vmatprep.subr.mxu0 0.0
        %1380 = vmatpush1.msra.mxu0 0.0
        %1381 = vmatprep.subr.mxu0 0.0
        %1382 = vmatpush1.msra.mxu0 0.0
        %1383 = vmatprep.subr.mxu0 0.0
        %1384 = vmatpush1.msra.mxu0 0.0
        %1385 = vmatprep.subr.mxu0 0.0
        %1386 = vmatpush1.msra.mxu0 0.0
        %1387 = vmatprep.subr.mxu0 0.0
        %1388 = vmatpush1.msra.mxu0 0.0
        %1389 = vmatprep.subr.mxu0 0.0
        %1390 = vmatpush1.msra.mxu0 0.0
        %1391 = vmatprep.subr.mxu0 0.0
        %1392 = vmatpush1.msra.mxu0 0.0
        %1393 = vmatprep.subr.mxu0 0.0
        %1394 = vmatpush1.msra.mxu0 0.0
        %1395 = vmatprep.subr.mxu0 0.0
        %1396 = vmatpush1.msra.mxu0 0.0
        %1397 = vmatprep.subr.mxu0 0.0
        %1398 = vmatpush1.msra.mxu0 0.0
        %1399 = vmatprep.subr.mxu0 0.0
        %1400 = vmatpush1.msra.mxu0 0.0
        %1401 = vmatprep.subr.mxu0 0.0
        %1402 = vmatpush1.msra.mxu0 0.0
        %1403 = vmatprep.subr.mxu0 0.0
        %1404 = vmatpush1.msra.mxu0 0.0
        %1405 = vmatprep.subr.mxu0 0.0
        %1406 = vmatpush1.msra.mxu0 0.0
        %1407 = vmatprep.subr.mxu0 0.0
        %1408 = vmatpush1.msra.mxu0 0.0
        %1409 = vmatprep.subr.mxu0 0.0
        %1410 = vmatpush1.msra.mxu0 0.0
        %1411 = vmatprep.subr.mxu0 0.0
        %1412 = vmatpush1.msra.mxu0 0.0
        %1413 = vmatprep.mubr.f32.mxu0 0.0
        %1414 = vmatmul.mubr.f32.gmra.mrb[0].mxu0 %v1341
        %v1415 = vpop.f32.mrb[0].mxu0
        %v1416 = vadd.f32 0.0, %v1415
        %v1417 = vpop.f32.mrb[0].mxu0
        %1418 = vmatprep.mubr.f32.mxu0 0.0
        %1419 = vmatmul.mubr.f32.gmra.mrb[0].mxu0 %v1344
        %v1420 = vpop.f32.mrb[0].mxu0
        %v1421 = vadd.f32 0.0, %v1420
        %v1422 = vpop.f32.mrb[0].mxu0
        %1423 = vmatprep.mubr.f32.mxu0 0.0
        %1424 = vmatmul.mubr.f32.gmra.mrb[0].mxu0 %v1347
        %v1425 = vpop.f32.mrb[0].mxu0
        %v1426 = vadd.f32 0.0, %v1425
        %v1427 = vpop.f32.mrb[0].mxu0
        %1428 = vdwg.mxu0
        %1432 = vrot.lane.b32.xlu0 %v1416, 120
        %v1433 = vpop.permute.xlu0 %1432
        %1434 = vrot.lane.b32.xlu0 %v1421, 120
        %v1435 = vpop.permute.xlu0 %1434
        %1436 = vrot.lane.b32.xlu0 %v1426, 120
        %v1437 = vpop.permute.xlu0 %1436
        %1438 = vrot.lane.b32.xlu0 %v1416, 112
        %v1439 = vpop.permute.xlu0 %1438
        %1440 = vrot.lane.b32.xlu0 %v1421, 112
        %v1441 = vpop.permute.xlu0 %1440
        %1442 = vrot.lane.b32.xlu0 %v1426, 112
        %v1443 = vpop.permute.xlu0 %1442
        %1444 = vrot.lane.b32.xlu0 %v1416, 104
        %v1445 = vpop.permute.xlu0 %1444
        %1446 = vrot.lane.b32.xlu0 %v1421, 104
        %v1447 = vpop.permute.xlu0 %1446
        %1448 = vrot.lane.b32.xlu0 %v1426, 104
        %v1449 = vpop.permute.xlu0 %1448
        %1450 = vrot.lane.b32.xlu0 %v1416, 96
        %v1451 = vpop.permute.xlu0 %1450
        %1452 = vrot.lane.b32.xlu0 %v1421, 96
        %v1453 = vpop.permute.xlu0 %1452
        %1454 = vrot.lane.b32.xlu0 %v1426, 96
        %v1455 = vpop.permute.xlu0 %1454
        %vm1456 = vcmask 64512
        %v1457 = vsel %vm1456, %v1416, 0
        %v1459 = vsel %vm1456, %v1421, 0
        %v1461 = vsel %vm1456, %v1426, 0
        %v1463 = vsel %vm1456, %v1451, 0
        %v1465 = vsel %vm1456, %v1453, 0
        %v1467 = vsel %vm1456, %v1455, 0
        %1469 = vmatprep.subr.mxu0 0.0
        %1470 = vmatpush1.xpose.msra.mxu0 %v1463
        %1471 = vmatprep.subr.mxu0 0.0
        %1472 = vmatpush1.xpose.msra.mxu0 %v1465
        %1473 = vmatprep.subr.mxu0 0.0
        %1474 = vmatpush1.xpose.msra.mxu0 %v1467
        %1475 = vmatprep.subr.mxu0 0.0
        %1476 = vmatpush1.xpose.msra.mxu0 0.0
        %1477 = vmatprep.subr.mxu0 0.0
        %1478 = vmatpush1.xpose.msra.mxu0 0.0
        %1479 = vmatprep.subr.mxu0 0.0
        %1480 = vmatpush1.xpose.msra.mxu0 0.0
        %1481 = vmatprep.subr.mxu0 0.0
        %1482 = vmatpush1.xpose.msra.mxu0 0.0
        %1483 = vmatprep.subr.mxu0 0.0
        %1484 = vmatpush1.xpose.msra.mxu0 0.0
        %1485 = vmatprep.subr.mxu0 0.0
        %1486 = vmatpush1.xpose.msra.mxu0 0.0
        %1487 = vmatprep.subr.mxu0 0.0
        %1488 = vmatpush1.xpose.msra.mxu0 0.0
        %1489 = vmatprep.subr.mxu0 0.0
        %1490 = vmatpush1.xpose.msra.mxu0 0.0
        %1491 = vmatprep.subr.mxu0 0.0
        %1492 = vmatpush1.xpose.msra.mxu0 0.0
        %1493 = vmatprep.subr.mxu0 0.0
        %1494 = vmatpush1.xpose.msra.mxu0 0.0
        %1495 = vmatprep.subr.mxu0 0.0
        %1496 = vmatpush1.xpose.msra.mxu0 0.0
        %1497 = vmatprep.subr.mxu0 0.0
        %1498 = vmatpush1.xpose.msra.mxu0 0.0
        %1499 = vmatprep.subr.mxu0 0.0
        %1500 = vmatpush1.xpose.msra.mxu0 0.0
        %1501 = vmatprep.subr.mxu0 0.0
        %1502 = vmatpush1.xpose.msra.mxu0 0.0
        %1503 = vmatprep.subr.mxu0 0.0
        %1504 = vmatpush1.xpose.msra.mxu0 0.0
        %1505 = vmatprep.subr.mxu0 0.0
        %1506 = vmatpush1.xpose.msra.mxu0 0.0
        %1507 = vmatprep.subr.mxu0 0.0
        %1508 = vmatpush1.xpose.msra.mxu0 0.0
        %1509 = vmatprep.subr.mxu0 0.0
        %1510 = vmatpush1.xpose.msra.mxu0 0.0
        %1511 = vmatprep.subr.mxu0 0.0
        %1512 = vmatpush1.xpose.msra.mxu0 0.0
        %1513 = vmatprep.subr.mxu0 0.0
        %1514 = vmatpush1.xpose.msra.mxu0 0.0
        %1515 = vmatprep.subr.mxu0 0.0
        %1516 = vmatpush1.xpose.msra.mxu0 0.0
        %1517 = vmatprep.subr.mxu0 0.0
        %1518 = vmatpush1.xpose.msra.mxu0 0.0
        %1519 = vmatprep.subr.mxu0 0.0
        %1520 = vmatpush1.xpose.msra.mxu0 0.0
        %1521 = vmatprep.subr.mxu0 0.0
        %1522 = vmatpush1.xpose.msra.mxu0 0.0
        %1523 = vmatprep.subr.mxu0 0.0
        %1524 = vmatpush1.xpose.msra.mxu0 0.0
        %1525 = vmatprep.subr.mxu0 0.0
        %1526 = vmatpush1.xpose.msra.mxu0 0.0
        %1527 = vmatprep.subr.mxu0 0.0
        %1528 = vmatpush1.xpose.msra.mxu0 0.0
        %1529 = vmatprep.subr.mxu0 0.0
        %1530 = vmatpush1.xpose.msra.mxu0 0.0
        %1531 = vmatprep.subr.mxu0 0.0
        %1532 = vmatpush1.xpose.msra.mxu0 0.0
        %1533 = vmatprep.mubr.f32.mxu0 0.0
        %1534 = vmatmul.mubr.f32.gmra.mrb[0].mxu0 %v1457
        %v1535 = vpop.f32.mrb[0].mxu0
        %v1536 = vadd.f32 0.0, %v1535
        %v1537 = vpop.f32.mrb[0].mxu0
        %1538 = vmatprep.mubr.f32.mxu0 0.0
        %1539 = vmatmul.mubr.f32.gmra.mrb[0].mxu0 %v1459
        %v1540 = vpop.f32.mrb[0].mxu0
        %v1541 = vadd.f32 0.0, %v1540
        %v1542 = vpop.f32.mrb[0].mxu0
        %1543 = vmatprep.mubr.f32.mxu0 0.0
        %1544 = vmatmul.mubr.f32.gmra.mrb[0].mxu0 %v1461
        %v1545 = vpop.f32.mrb[0].mxu0
        %v1546 = vadd.f32 0.0, %v1545
        %v1547 = vpop.f32.mrb[0].mxu0
        %1548 = vdwg.mxu0
        %1549 = vrot.lane.b32.xlu0 %v1433, 96
        %v1550 = vpop.permute.xlu0 %1549
        %1551 = vrot.lane.b32.xlu0 %v1435, 96
        %v1552 = vpop.permute.xlu0 %1551
        %1553 = vrot.lane.b32.xlu0 %v1437, 96
        %v1554 = vpop.permute.xlu0 %1553
        %v1555 = vsel %vm1456, %v1433, 0
        %v1557 = vsel %vm1456, %v1435, 0
        %v1559 = vsel %vm1456, %v1437, 0
        %v1561 = vsel %vm1456, %v1550, 0
        %v1563 = vsel %vm1456, %v1552, 0
        %v1565 = vsel %vm1456, %v1554, 0
        %1567 = vmatprep.subr.mxu0 0.0
        %1568 = vmatpush1.xpose.msra.mxu0 %v1561
        %1569 = vmatprep.subr.mxu0 0.0
        %1570 = vmatpush1.xpose.msra.mxu0 %v1563
        %1571 = vmatprep.subr.mxu0 0.0
        %1572 = vmatpush1.xpose.msra.mxu0 %v1565
        %1573 = vmatprep.subr.mxu0 0.0
        %1574 = vmatpush1.xpose.msra.mxu0 0.0
        %1575 = vmatprep.subr.mxu0 0.0
        %1576 = vmatpush1.xpose.msra.mxu0 0.0
        %1577 = vmatprep.subr.mxu0 0.0
        %1578 = vmatpush1.xpose.msra.mxu0 0.0
        %1579 = vmatprep.subr.mxu0 0.0
        %1580 = vmatpush1.xpose.msra.mxu0 0.0
        %1581 = vmatprep.subr.mxu0 0.0
        %1582 = vmatpush1.xpose.msra.mxu0 0.0
        %1583 = vmatprep.subr.mxu0 0.0
        %1584 = vmatpush1.xpose.msra.mxu0 0.0
        %1585 = vmatprep.subr.mxu0 0.0
        %1586 = vmatpush1.xpose.msra.mxu0 0.0
        %1587 = vmatprep.subr.mxu0 0.0
        %1588 = vmatpush1.xpose.msra.mxu0 0.0
        %1589 = vmatprep.subr.mxu0 0.0
        %1590 = vmatpush1.xpose.msra.mxu0 0.0
        %1591 = vmatprep.subr.mxu0 0.0
        %1592 = vmatpush1.xpose.msra.mxu0 0.0
        %1593 = vmatprep.subr.mxu0 0.0
        %1594 = vmatpush1.xpose.msra.mxu0 0.0
        %1595 = vmatprep.subr.mxu0 0.0
        %1596 = vmatpush1.xpose.msra.mxu0 0.0
        %1597 = vmatprep.subr.mxu0 0.0
        %1598 = vmatpush1.xpose.msra.mxu0 0.0
        %1599 = vmatprep.subr.mxu0 0.0
        %1600 = vmatpush1.xpose.msra.mxu0 0.0
        %1601 = vmatprep.subr.mxu0 0.0
        %1602 = vmatpush1.xpose.msra.mxu0 0.0
        %1603 = vmatprep.subr.mxu0 0.0
        %1604 = vmatpush1.xpose.msra.mxu0 0.0
        %1605 = vmatprep.subr.mxu0 0.0
        %1606 = vmatpush1.xpose.msra.mxu0 0.0
        %1607 = vmatprep.subr.mxu0 0.0
        %1608 = vmatpush1.xpose.msra.mxu0 0.0
        %1609 = vmatprep.subr.mxu0 0.0
        %1610 = vmatpush1.xpose.msra.mxu0 0.0
        %1611 = vmatprep.subr.mxu0 0.0
        %1612 = vmatpush1.xpose.msra.mxu0 0.0
        %1613 = vmatprep.subr.mxu0 0.0
        %1614 = vmatpush1.xpose.msra.mxu0 0.0
        %1615 = vmatprep.subr.mxu0 0.0
        %1616 = vmatpush1.xpose.msra.mxu0 0.0
        %1617 = vmatprep.subr.mxu0 0.0
        %1618 = vmatpush1.xpose.msra.mxu0 0.0
        %1619 = vmatprep.subr.mxu0 0.0
        %1620 = vmatpush1.xpose.msra.mxu0 0.0
        %1621 = vmatprep.subr.mxu0 0.0
        %1622 = vmatpush1.xpose.msra.mxu0 0.0
        %1623 = vmatprep.subr.mxu0 0.0
        %1624 = vmatpush1.xpose.msra.mxu0 0.0
        %1625 = vmatprep.subr.mxu0 0.0
        %1626 = vmatpush1.xpose.msra.mxu0 0.0
        %1627 = vmatprep.subr.mxu0 0.0
        %1628 = vmatpush1.xpose.msra.mxu0 0.0
        %1629 = vmatprep.subr.mxu0 0.0
        %1630 = vmatpush1.xpose.msra.mxu0 0.0
        %1631 = vmatprep.mubr.f32.mxu0 0.0
        %1632 = vmatmul.mubr.f32.gmra.mrb[0].mxu0 %v1555
        %v1633 = vpop.f32.mrb[0].mxu0
        %v1634 = vadd.f32 0.0, %v1633
        %v1635 = vpop.f32.mrb[0].mxu0
        %1636 = vmatprep.mubr.f32.mxu0 0.0
        %1637 = vmatmul.mubr.f32.gmra.mrb[0].mxu0 %v1557
        %v1638 = vpop.f32.mrb[0].mxu0
        %v1639 = vadd.f32 0.0, %v1638
        %v1640 = vpop.f32.mrb[0].mxu0
        %1641 = vmatprep.mubr.f32.mxu0 0.0
        %1642 = vmatmul.mubr.f32.gmra.mrb[0].mxu0 %v1559
        %v1643 = vpop.f32.mrb[0].mxu0
        %v1644 = vadd.f32 0.0, %v1643
        %v1645 = vpop.f32.mrb[0].mxu0
        %1646 = vdwg.mxu0
        %1647 = vrot.lane.b32.xlu0 %v1439, 96
        %v1648 = vpop.permute.xlu0 %1647
        %1649 = vrot.lane.b32.xlu0 %v1441, 96
        %v1650 = vpop.permute.xlu0 %1649
        %1651 = vrot.lane.b32.xlu0 %v1443, 96
        %v1652 = vpop.permute.xlu0 %1651
        %v1653 = vsel %vm1456, %v1439, 0
        %v1655 = vsel %vm1456, %v1441, 0
        %v1657 = vsel %vm1456, %v1443, 0
        %v1659 = vsel %vm1456, %v1648, 0
        %v1661 = vsel %vm1456, %v1650, 0
        %v1663 = vsel %vm1456, %v1652, 0
        %1665 = vmatprep.subr.mxu0 0.0
        %1666 = vmatpush1.xpose.msra.mxu0 %v1659
        %1667 = vmatprep.subr.mxu0 0.0
        %1668 = vmatpush1.xpose.msra.mxu0 %v1661
        %1669 = vmatprep.subr.mxu0 0.0
        %1670 = vmatpush1.xpose.msra.mxu0 %v1663
        %1671 = vmatprep.subr.mxu0 0.0
        %1672 = vmatpush1.xpose.msra.mxu0 0.0
        %1673 = vmatprep.subr.mxu0 0.0
        %1674 = vmatpush1.xpose.msra.mxu0 0.0
        %1675 = vmatprep.subr.mxu0 0.0
        %1676 = vmatpush1.xpose.msra.mxu0 0.0
        %1677 = vmatprep.subr.mxu0 0.0
        %1678 = vmatpush1.xpose.msra.mxu0 0.0
        %1679 = vmatprep.subr.mxu0 0.0
        %1680 = vmatpush1.xpose.msra.mxu0 0.0
        %1681 = vmatprep.subr.mxu0 0.0
        %1682 = vmatpush1.xpose.msra.mxu0 0.0
        %1683 = vmatprep.subr.mxu0 0.0
        %1684 = vmatpush1.xpose.msra.mxu0 0.0
        %1685 = vmatprep.subr.mxu0 0.0
        %1686 = vmatpush1.xpose.msra.mxu0 0.0
        %1687 = vmatprep.subr.mxu0 0.0
        %1688 = vmatpush1.xpose.msra.mxu0 0.0
        %1689 = vmatprep.subr.mxu0 0.0
        %1690 = vmatpush1.xpose.msra.mxu0 0.0
        %1691 = vmatprep.subr.mxu0 0.0
        %1692 = vmatpush1.xpose.msra.mxu0 0.0
        %1693 = vmatprep.subr.mxu0 0.0
        %1694 = vmatpush1.xpose.msra.mxu0 0.0
        %1695 = vmatprep.subr.mxu0 0.0
        %1696 = vmatpush1.xpose.msra.mxu0 0.0
        %1697 = vmatprep.subr.mxu0 0.0
        %1698 = vmatpush1.xpose.msra.mxu0 0.0
        %1699 = vmatprep.subr.mxu0 0.0
        %1700 = vmatpush1.xpose.msra.mxu0 0.0
        %1701 = vmatprep.subr.mxu0 0.0
        %1702 = vmatpush1.xpose.msra.mxu0 0.0
        %1703 = vmatprep.subr.mxu0 0.0
        %1704 = vmatpush1.xpose.msra.mxu0 0.0
        %1705 = vmatprep.subr.mxu0 0.0
        %1706 = vmatpush1.xpose.msra.mxu0 0.0
        %1707 = vmatprep.subr.mxu0 0.0
        %1708 = vmatpush1.xpose.msra.mxu0 0.0
        %1709 = vmatprep.subr.mxu0 0.0
        %1710 = vmatpush1.xpose.msra.mxu0 0.0
        %1711 = vmatprep.subr.mxu0 0.0
        %1712 = vmatpush1.xpose.msra.mxu0 0.0
        %1713 = vmatprep.subr.mxu0 0.0
        %1714 = vmatpush1.xpose.msra.mxu0 0.0
        %1715 = vmatprep.subr.mxu0 0.0
        %1716 = vmatpush1.xpose.msra.mxu0 0.0
        %1717 = vmatprep.subr.mxu0 0.0
        %1718 = vmatpush1.xpose.msra.mxu0 0.0
        %1719 = vmatprep.subr.mxu0 0.0
        %1720 = vmatpush1.xpose.msra.mxu0 0.0
        %1721 = vmatprep.subr.mxu0 0.0
        %1722 = vmatpush1.xpose.msra.mxu0 0.0
        %1723 = vmatprep.subr.mxu0 0.0
        %1724 = vmatpush1.xpose.msra.mxu0 0.0
        %1725 = vmatprep.subr.mxu0 0.0
        %1726 = vmatpush1.xpose.msra.mxu0 0.0
        %1727 = vmatprep.subr.mxu0 0.0
        %1728 = vmatpush1.xpose.msra.mxu0 0.0
        %1729 = vmatprep.mubr.f32.mxu0 0.0
        %1730 = vmatmul.mubr.f32.gmra.mrb[0].mxu0 %v1653
        %v1731 = vpop.f32.mrb[0].mxu0
        %v1732 = vadd.f32 0.0, %v1731
        %v1733 = vpop.f32.mrb[0].mxu0
        %1734 = vmatprep.mubr.f32.mxu0 0.0
        %1735 = vmatmul.mubr.f32.gmra.mrb[0].mxu0 %v1655
        %v1736 = vpop.f32.mrb[0].mxu0
        %v1737 = vadd.f32 0.0, %v1736
        %v1738 = vpop.f32.mrb[0].mxu0
        %1739 = vmatprep.mubr.f32.mxu0 0.0
        %1740 = vmatmul.mubr.f32.gmra.mrb[0].mxu0 %v1657
        %v1741 = vpop.f32.mrb[0].mxu0
        %v1742 = vadd.f32 0.0, %v1741
        %v1743 = vpop.f32.mrb[0].mxu0
        %1744 = vdwg.mxu0
        %1745 = vrot.lane.b32.xlu0 %v1445, 96
        %v1746 = vpop.permute.xlu0 %1745
        %1747 = vrot.lane.b32.xlu0 %v1447, 96
        %v1748 = vpop.permute.xlu0 %1747
        %1749 = vrot.lane.b32.xlu0 %v1449, 96
        %v1750 = vpop.permute.xlu0 %1749
        %v1751 = vsel %vm1456, %v1445, 0
        %v1753 = vsel %vm1456, %v1447, 0
        %v1755 = vsel %vm1456, %v1449, 0
        %v1757 = vsel %vm1456, %v1746, 0
        %v1759 = vsel %vm1456, %v1748, 0
        %v1761 = vsel %vm1456, %v1750, 0
        %1763 = vmatprep.subr.mxu0 0.0
        %1764 = vmatpush1.xpose.msra.mxu0 %v1757
        %1765 = vmatprep.subr.mxu0 0.0
        %1766 = vmatpush1.xpose.msra.mxu0 %v1759
        %1767 = vmatprep.subr.mxu0 0.0
        %1768 = vmatpush1.xpose.msra.mxu0 %v1761
        %1769 = vmatprep.subr.mxu0 0.0
        %1770 = vmatpush1.xpose.msra.mxu0 0.0
        %1771 = vmatprep.subr.mxu0 0.0
        %1772 = vmatpush1.xpose.msra.mxu0 0.0
        %1773 = vmatprep.subr.mxu0 0.0
        %1774 = vmatpush1.xpose.msra.mxu0 0.0
        %1775 = vmatprep.subr.mxu0 0.0
        %1776 = vmatpush1.xpose.msra.mxu0 0.0
        %1777 = vmatprep.subr.mxu0 0.0
        %1778 = vmatpush1.xpose.msra.mxu0 0.0
        %1779 = vmatprep.subr.mxu0 0.0
        %1780 = vmatpush1.xpose.msra.mxu0 0.0
        %1781 = vmatprep.subr.mxu0 0.0
        %1782 = vmatpush1.xpose.msra.mxu0 0.0
        %1783 = vmatprep.subr.mxu0 0.0
        %1784 = vmatpush1.xpose.msra.mxu0 0.0
        %1785 = vmatprep.subr.mxu0 0.0
        %1786 = vmatpush1.xpose.msra.mxu0 0.0
        %1787 = vmatprep.subr.mxu0 0.0
        %1788 = vmatpush1.xpose.msra.mxu0 0.0
        %1789 = vmatprep.subr.mxu0 0.0
        %1790 = vmatpush1.xpose.msra.mxu0 0.0
        %1791 = vmatprep.subr.mxu0 0.0
        %1792 = vmatpush1.xpose.msra.mxu0 0.0
        %1793 = vmatprep.subr.mxu0 0.0
        %1794 = vmatpush1.xpose.msra.mxu0 0.0
        %1795 = vmatprep.subr.mxu0 0.0
        %1796 = vmatpush1.xpose.msra.mxu0 0.0
        %1797 = vmatprep.subr.mxu0 0.0
        %1798 = vmatpush1.xpose.msra.mxu0 0.0
        %1799 = vmatprep.subr.mxu0 0.0
        %1800 = vmatpush1.xpose.msra.mxu0 0.0
        %1801 = vmatprep.subr.mxu0 0.0
        %1802 = vmatpush1.xpose.msra.mxu0 0.0
        %1803 = vmatprep.subr.mxu0 0.0
        %1804 = vmatpush1.xpose.msra.mxu0 0.0
        %1805 = vmatprep.subr.mxu0 0.0
        %1806 = vmatpush1.xpose.msra.mxu0 0.0
        %1807 = vmatprep.subr.mxu0 0.0
        %1808 = vmatpush1.xpose.msra.mxu0 0.0
        %1809 = vmatprep.subr.mxu0 0.0
        %1810 = vmatpush1.xpose.msra.mxu0 0.0
        %1811 = vmatprep.subr.mxu0 0.0
        %1812 = vmatpush1.xpose.msra.mxu0 0.0
        %1813 = vmatprep.subr.mxu0 0.0
        %1814 = vmatpush1.xpose.msra.mxu0 0.0
        %1815 = vmatprep.subr.mxu0 0.0
        %1816 = vmatpush1.xpose.msra.mxu0 0.0
        %1817 = vmatprep.subr.mxu0 0.0
        %1818 = vmatpush1.xpose.msra.mxu0 0.0
        %1819 = vmatprep.subr.mxu0 0.0
        %1820 = vmatpush1.xpose.msra.mxu0 0.0
        %1821 = vmatprep.subr.mxu0 0.0
        %1822 = vmatpush1.xpose.msra.mxu0 0.0
        %1823 = vmatprep.subr.mxu0 0.0
        %1824 = vmatpush1.xpose.msra.mxu0 0.0
        %1825 = vmatprep.subr.mxu0 0.0
        %1826 = vmatpush1.xpose.msra.mxu0 0.0
        %1827 = vmatprep.mubr.f32.mxu0 0.0
        %1828 = vmatmul.mubr.f32.gmra.mrb[0].mxu0 %v1751
        %v1829 = vpop.f32.mrb[0].mxu0
        %v1830 = vadd.f32 0.0, %v1829
        %v1831 = vpop.f32.mrb[0].mxu0
        %1832 = vmatprep.mubr.f32.mxu0 0.0
        %1833 = vmatmul.mubr.f32.gmra.mrb[0].mxu0 %v1753
        %v1834 = vpop.f32.mrb[0].mxu0
        %v1835 = vadd.f32 0.0, %v1834
        %v1836 = vpop.f32.mrb[0].mxu0
        %1837 = vmatprep.mubr.f32.mxu0 0.0
        %1838 = vmatmul.mubr.f32.gmra.mrb[0].mxu0 %v1755
        %v1839 = vpop.f32.mrb[0].mxu0
        %v1840 = vadd.f32 0.0, %v1839
        %v1841 = vpop.f32.mrb[0].mxu0
        %1842 = vdwg.mxu0
        %v1843 = vmul.f32 %v1536, 0.35355338
        %v1844 = vmul.f32 %v1541, 0.35355338
        %v1845 = vmul.f32 %v1546, 0.35355338
        %v1846 = vmul.f32 %v1634, 0.35355338
        %v1847 = vmul.f32 %v1639, 0.35355338
        %v1848 = vmul.f32 %v1644, 0.35355338
        %v1849 = vmul.f32 %v1732, 0.35355338
        %v1850 = vmul.f32 %v1737, 0.35355338
        %v1851 = vmul.f32 %v1742, 0.35355338
        %v1852 = vmul.f32 %v1830, 0.35355338
        %v1853 = vmul.f32 %v1835, 0.35355338
        %v1854 = vmul.f32 %v1840, 0.35355338
        %v1855 = vsel %vm1276, 1, 0
        %vm1856 = vcmp.eq.s32.totalorder %v1855, 1
        %v1857 = vsel %vm1856, %v1843, -1e+30
        %v1858 = vsel %vm1856, %v1844, -1e+30
        %v1859 = vsel %vm1856, %v1845, -1e+30
        %v1860 = vsel %vm1856, %v1846, -1e+30
        %v1861 = vsel %vm1856, %v1847, -1e+30
        %v1862 = vsel %vm1856, %v1848, -1e+30
        %v1863 = vsel %vm1856, %v1849, -1e+30
        %v1864 = vsel %vm1856, %v1850, -1e+30
        %v1865 = vsel %vm1856, %v1851, -1e+30
        %v1866 = vsel %vm1856, %v1852, -1e+30
        %v1867 = vsel %vm1856, %v1853, -1e+30
        %v1868 = vsel %vm1856, %v1854, -1e+30
        %vm1869 = vcmask 195584
        %v1870 = vsel %vm1869, %v1857, -inf
        %1871 = vmax.xlane.f32.xlu0 %v1870
        %v1872 = vpop.xlane.xlu0 %1871
        %v1873 = vsel %vm1869, %v1858, -inf
        %1874 = vmax.xlane.f32.xlu0 %v1873
        %v1875 = vpop.xlane.xlu0 %1874
        %v1876 = vsel %vm1869, %v1859, -inf
        %1877 = vmax.xlane.f32.xlu0 %v1876
        %v1878 = vpop.xlane.xlu0 %1877
        %v1879 = vsel %vm1869, %v1860, -inf
        %1880 = vmax.xlane.f32.xlu0 %v1879
        %v1881 = vpop.xlane.xlu0 %1880
        %v1882 = vsel %vm1869, %v1861, -inf
        %1883 = vmax.xlane.f32.xlu0 %v1882
        %v1884 = vpop.xlane.xlu0 %1883
        %v1885 = vsel %vm1869, %v1862, -inf
        %1886 = vmax.xlane.f32.xlu0 %v1885
        %v1887 = vpop.xlane.xlu0 %1886
        %v1888 = vsel %vm1869, %v1863, -inf
        %1889 = vmax.xlane.f32.xlu0 %v1888
        %v1890 = vpop.xlane.xlu0 %1889
        %v1891 = vsel %vm1869, %v1864, -inf
        %1892 = vmax.xlane.f32.xlu0 %v1891
        %v1893 = vpop.xlane.xlu0 %1892
        %v1894 = vsel %vm1869, %v1865, -inf
        %1895 = vmax.xlane.f32.xlu0 %v1894
        %v1896 = vpop.xlane.xlu0 %1895
        %v1897 = vsel %vm1869, %v1866, -inf
        %1898 = vmax.xlane.f32.xlu0 %v1897
        %v1899 = vpop.xlane.xlu0 %1898
        %v1900 = vsel %vm1869, %v1867, -inf
        %1901 = vmax.xlane.f32.xlu0 %v1900
        %v1902 = vpop.xlane.xlu0 %1901
        %v1903 = vsel %vm1869, %v1868, -inf
        %1904 = vmax.xlane.f32.xlu0 %v1903
        %v1905 = vpop.xlane.xlu0 %1904
        %v1906 = vsub.f32 %v1857, %v1872
        %v1907 = vsub.f32 %v1858, %v1875
        %v1908 = vsub.f32 %v1859, %v1878
        %v1909 = vsub.f32 %v1860, %v1881
        %v1910 = vsub.f32 %v1861, %v1884
        %v1911 = vsub.f32 %v1862, %v1887
        %v1912 = vsub.f32 %v1863, %v1890
        %v1913 = vsub.f32 %v1864, %v1893
        %v1914 = vsub.f32 %v1865, %v1896
        %v1915 = vsub.f32 %v1866, %v1899
        %v1916 = vsub.f32 %v1867, %v1902
        %v1917 = vsub.f32 %v1868, %v1905
        %v1918 = vmul.f32 %v1906, 1.442695
        %v1919 = vpow.pop %v1918
        %v1920 = vmul.f32 %v1907, 1.442695
        %v1921 = vpow.pop %v1920
        %v1922 = vmul.f32 %v1908, 1.442695
        %v1923 = vpow.pop %v1922
        %v1924 = vmul.f32 %v1909, 1.442695
        %v1925 = vpow.pop %v1924
        %v1926 = vmul.f32 %v1910, 1.442695
        %v1927 = vpow.pop %v1926
        %v1928 = vmul.f32 %v1911, 1.442695
        %v1929 = vpow.pop %v1928
        %v1930 = vmul.f32 %v1912, 1.442695
        %v1931 = vpow.pop %v1930
        %v1932 = vmul.f32 %v1913, 1.442695
        %v1933 = vpow.pop %v1932
        %v1934 = vmul.f32 %v1914, 1.442695
        %v1935 = vpow.pop %v1934
        %v1936 = vmul.f32 %v1915, 1.442695
        %v1937 = vpow.pop %v1936
        %v1938 = vmul.f32 %v1916, 1.442695
        %v1939 = vpow.pop %v1938
        %v1940 = vmul.f32 %v1917, 1.442695
        %v1941 = vpow.pop %v1940
        %v1942 = vsel %vm1869, %v1919, 0.0
        %1943 = vadd.xlane.f32.xlu0 %v1942
        %v1944 = vpop.xlane.xlu0 %1943
        %v1945 = vsel %vm1869, %v1921, 0.0
        %1946 = vadd.xlane.f32.xlu0 %v1945
        %v1947 = vpop.xlane.xlu0 %1946
        %v1948 = vsel %vm1869, %v1923, 0.0
        %1949 = vadd.xlane.f32.xlu0 %v1948
        %v1950 = vpop.xlane.xlu0 %1949
        %v1951 = vsel %vm1869, %v1925, 0.0
        %1952 = vadd.xlane.f32.xlu0 %v1951
        %v1953 = vpop.xlane.xlu0 %1952
        %v1954 = vsel %vm1869, %v1927, 0.0
        %1955 = vadd.xlane.f32.xlu0 %v1954
        %v1956 = vpop.xlane.xlu0 %1955
        %v1957 = vsel %vm1869, %v1929, 0.0
        %1958 = vadd.xlane.f32.xlu0 %v1957
        %v1959 = vpop.xlane.xlu0 %1958
        %v1960 = vsel %vm1869, %v1931, 0.0
        %1961 = vadd.xlane.f32.xlu0 %v1960
        %v1962 = vpop.xlane.xlu0 %1961
        %v1963 = vsel %vm1869, %v1933, 0.0
        %1964 = vadd.xlane.f32.xlu0 %v1963
        %v1965 = vpop.xlane.xlu0 %1964
        %v1966 = vsel %vm1869, %v1935, 0.0
        %1967 = vadd.xlane.f32.xlu0 %v1966
        %v1968 = vpop.xlane.xlu0 %1967
        %v1969 = vsel %vm1869, %v1937, 0.0
        %1970 = vadd.xlane.f32.xlu0 %v1969
        %v1971 = vpop.xlane.xlu0 %1970
        %v1972 = vsel %vm1869, %v1939, 0.0
        %1973 = vadd.xlane.f32.xlu0 %v1972
        %v1974 = vpop.xlane.xlu0 %1973
        %v1975 = vsel %vm1869, %v1941, 0.0
        %1976 = vadd.xlane.f32.xlu0 %v1975
        %v1977 = vpop.xlane.xlu0 %1976
        %v1978 = vrcp.pop %v1944
        %v1979 = vrcp.pop %v1947
        %v1980 = vrcp.pop %v1950
        %v1981 = vrcp.pop %v1953
        %v1982 = vrcp.pop %v1956
        %v1983 = vrcp.pop %v1959
        %v1984 = vrcp.pop %v1962
        %v1985 = vrcp.pop %v1965
        %v1986 = vrcp.pop %v1968
        %v1987 = vrcp.pop %v1971
        %v1988 = vrcp.pop %v1974
        %v1989 = vrcp.pop %v1977
        %v1990 = vmul.f32 %v1919, %v1978
        %v1991 = vmul.f32 %v1921, %v1979
        %v1992 = vmul.f32 %v1923, %v1980
        %v1993 = vmul.f32 %v1925, %v1981
        %v1994 = vmul.f32 %v1927, %v1982
        %v1995 = vmul.f32 %v1929, %v1983
        %v1996 = vmul.f32 %v1931, %v1984
        %v1997 = vmul.f32 %v1933, %v1985
        %v1998 = vmul.f32 %v1935, %v1986
        %v1999 = vmul.f32 %v1937, %v1987
        %v2000 = vmul.f32 %v1939, %v1988
        %v2001 = vmul.f32 %v1941, %v1989
        %2002 = vrot.lane.b32.xlu0 %v1416, 64
        %v2003 = vpop.permute.xlu0 %2002
        %2004 = vrot.lane.b32.xlu0 %v1421, 64
        %v2005 = vpop.permute.xlu0 %2004
        %2006 = vrot.lane.b32.xlu0 %v1426, 64
        %v2007 = vpop.permute.xlu0 %2006
        %v2012 = vsel %vm1869, %v1990, 0
        %v2015 = vsel %vm1869, %v1991, 0
        %v2018 = vsel %vm1869, %v1992, 0
        %2020 = vmatprep.subr.mxu0 0.0
        %2021 = vmatpush1.msra.mxu0 %v2003
        %2022 = vmatprep.subr.mxu0 0.0
        %2023 = vmatpush1.msra.mxu0 %v2005
        %2024 = vmatprep.subr.mxu0 0.0
        %2025 = vmatpush1.msra.mxu0 %v2007
        %2026 = vmatprep.subr.mxu0 0.0
        %2027 = vmatpush1.msra.mxu0 0.0
        %2028 = vmatprep.subr.mxu0 0.0
        %2029 = vmatpush1.msra.mxu0 0.0
        %2030 = vmatprep.subr.mxu0 0.0
        %2031 = vmatpush1.msra.mxu0 0.0
        %2032 = vmatprep.subr.mxu0 0.0
        %2033 = vmatpush1.msra.mxu0 0.0
        %2034 = vmatprep.subr.mxu0 0.0
        %2035 = vmatpush1.msra.mxu0 0.0
        %2036 = vmatprep.subr.mxu0 0.0
        %2037 = vmatpush1.msra.mxu0 0.0
        %2038 = vmatprep.subr.mxu0 0.0
        %2039 = vmatpush1.msra.mxu0 0.0
        %2040 = vmatprep.subr.mxu0 0.0
        %2041 = vmatpush1.msra.mxu0 0.0
        %2042 = vmatprep.subr.mxu0 0.0
        %2043 = vmatpush1.msra.mxu0 0.0
        %2044 = vmatprep.subr.mxu0 0.0
        %2045 = vmatpush1.msra.mxu0 0.0
        %2046 = vmatprep.subr.mxu0 0.0
        %2047 = vmatpush1.msra.mxu0 0.0
        %2048 = vmatprep.subr.mxu0 0.0
        %2049 = vmatpush1.msra.mxu0 0.0
        %2050 = vmatprep.subr.mxu0 0.0
        %2051 = vmatpush1.msra.mxu0 0.0
        %2052 = vmatprep.subr.mxu0 0.0
        %2053 = vmatpush1.msra.mxu0 0.0
        %2054 = vmatprep.subr.mxu0 0.0
        %2055 = vmatpush1.msra.mxu0 0.0
        %2056 = vmatprep.subr.mxu0 0.0
        %2057 = vmatpush1.msra.mxu0 0.0
        %2058 = vmatprep.subr.mxu0 0.0
        %2059 = vmatpush1.msra.mxu0 0.0
        %2060 = vmatprep.subr.mxu0 0.0
        %2061 = vmatpush1.msra.mxu0 0.0
        %2062 = vmatprep.subr.mxu0 0.0
        %2063 = vmatpush1.msra.mxu0 0.0
        %2064 = vmatprep.subr.mxu0 0.0
        %2065 = vmatpush1.msra.mxu0 0.0
        %2066 = vmatprep.subr.mxu0 0.0
        %2067 = vmatpush1.msra.mxu0 0.0
        %2068 = vmatprep.subr.mxu0 0.0
        %2069 = vmatpush1.msra.mxu0 0.0
        %2070 = vmatprep.subr.mxu0 0.0
        %2071 = vmatpush1.msra.mxu0 0.0
        %2072 = vmatprep.subr.mxu0 0.0
        %2073 = vmatpush1.msra.mxu0 0.0
        %2074 = vmatprep.subr.mxu0 0.0
        %2075 = vmatpush1.msra.mxu0 0.0
        %2076 = vmatprep.subr.mxu0 0.0
        %2077 = vmatpush1.msra.mxu0 0.0
        %2078 = vmatprep.subr.mxu0 0.0
        %2079 = vmatpush1.msra.mxu0 0.0
        %2080 = vmatprep.subr.mxu0 0.0
        %2081 = vmatpush1.msra.mxu0 0.0
        %2082 = vmatprep.subr.mxu0 0.0
        %2083 = vmatpush1.msra.mxu0 0.0
        %2084 = vmatprep.mubr.f32.mxu0 0.0
        %2085 = vmatmul.mubr.f32.gmra.mrb[0].mxu0 %v2012
        %v2086 = vpop.f32.mrb[0].mxu0
        %v2087 = vadd.f32 0.0, %v2086
        %v2088 = vpop.f32.mrb[0].mxu0
        %2089 = vmatprep.mubr.f32.mxu0 0.0
        %2090 = vmatmul.mubr.f32.gmra.mrb[0].mxu0 %v2015
        %v2091 = vpop.f32.mrb[0].mxu0
        %v2092 = vadd.f32 0.0, %v2091
        %v2093 = vpop.f32.mrb[0].mxu0
        %2094 = vmatprep.mubr.f32.mxu0 0.0
        %2095 = vmatmul.mubr.f32.gmra.mrb[0].mxu0 %v2018
        %v2096 = vpop.f32.mrb[0].mxu0
        %v2097 = vadd.f32 0.0, %v2096
        %v2098 = vpop.f32.mrb[0].mxu0
        %2099 = vdwg.mxu0
        %2100 = vrot.lane.b32.xlu0 %v1433, 64
        %v2101 = vpop.permute.xlu0 %2100
        %2102 = vrot.lane.b32.xlu0 %v1435, 64
        %v2103 = vpop.permute.xlu0 %2102
        %2104 = vrot.lane.b32.xlu0 %v1437, 64
        %v2105 = vpop.permute.xlu0 %2104
        %v2110 = vsel %vm1869, %v1993, 0
        %v2113 = vsel %vm1869, %v1994, 0
        %v2116 = vsel %vm1869, %v1995, 0
        %2118 = vmatprep.subr.mxu0 0.0
        %2119 = vmatpush1.msra.mxu0 %v2101
        %2120 = vmatprep.subr.mxu0 0.0
        %2121 = vmatpush1.msra.mxu0 %v2103
        %2122 = vmatprep.subr.mxu0 0.0
        %2123 = vmatpush1.msra.mxu0 %v2105
        %2124 = vmatprep.subr.mxu0 0.0
        %2125 = vmatpush1.msra.mxu0 0.0
        %2126 = vmatprep.subr.mxu0 0.0
        %2127 = vmatpush1.msra.mxu0 0.0
        %2128 = vmatprep.subr.mxu0 0.0
        %2129 = vmatpush1.msra.mxu0 0.0
        %2130 = vmatprep.subr.mxu0 0.0
        %2131 = vmatpush1.msra.mxu0 0.0
        %2132 = vmatprep.subr.mxu0 0.0
        %2133 = vmatpush1.msra.mxu0 0.0
        %2134 = vmatprep.subr.mxu0 0.0
        %2135 = vmatpush1.msra.mxu0 0.0
        %2136 = vmatprep.subr.mxu0 0.0
        %2137 = vmatpush1.msra.mxu0 0.0
        %2138 = vmatprep.subr.mxu0 0.0
        %2139 = vmatpush1.msra.mxu0 0.0
        %2140 = vmatprep.subr.mxu0 0.0
        %2141 = vmatpush1.msra.mxu0 0.0
        %2142 = vmatprep.subr.mxu0 0.0
        %2143 = vmatpush1.msra.mxu0 0.0
        %2144 = vmatprep.subr.mxu0 0.0
        %2145 = vmatpush1.msra.mxu0 0.0
        %2146 = vmatprep.subr.mxu0 0.0
        %2147 = vmatpush1.msra.mxu0 0.0
        %2148 = vmatprep.subr.mxu0 0.0
        %2149 = vmatpush1.msra.mxu0 0.0
        %2150 = vmatprep.subr.mxu0 0.0
        %2151 = vmatpush1.msra.mxu0 0.0
        %2152 = vmatprep.subr.mxu0 0.0
        %2153 = vmatpush1.msra.mxu0 0.0
        %2154 = vmatprep.subr.mxu0 0.0
        %2155 = vmatpush1.msra.mxu0 0.0
        %2156 = vmatprep.subr.mxu0 0.0
        %2157 = vmatpush1.msra.mxu0 0.0
        %2158 = vmatprep.subr.mxu0 0.0
        %2159 = vmatpush1.msra.mxu0 0.0
        %2160 = vmatprep.subr.mxu0 0.0
        %2161 = vmatpush1.msra.mxu0 0.0
        %2162 = vmatprep.subr.mxu0 0.0
        %2163 = vmatpush1.msra.mxu0 0.0
        %2164 = vmatprep.subr.mxu0 0.0
        %2165 = vmatpush1.msra.mxu0 0.0
        %2166 = vmatprep.subr.mxu0 0.0
        %2167 = vmatpush1.msra.mxu0 0.0
        %2168 = vmatprep.subr.mxu0 0.0
        %2169 = vmatpush1.msra.mxu0 0.0
        %2170 = vmatprep.subr.mxu0 0.0
        %2171 = vmatpush1.msra.mxu0 0.0
        %2172 = vmatprep.subr.mxu0 0.0
        %2173 = vmatpush1.msra.mxu0 0.0
        %2174 = vmatprep.subr.mxu0 0.0
        %2175 = vmatpush1.msra.mxu0 0.0
        %2176 = vmatprep.subr.mxu0 0.0
        %2177 = vmatpush1.msra.mxu0 0.0
        %2178 = vmatprep.subr.mxu0 0.0
        %2179 = vmatpush1.msra.mxu0 0.0
        %2180 = vmatprep.subr.mxu0 0.0
        %2181 = vmatpush1.msra.mxu0 0.0
        %2182 = vmatprep.mubr.f32.mxu0 0.0
        %2183 = vmatmul.mubr.f32.gmra.mrb[0].mxu0 %v2110
        %v2184 = vpop.f32.mrb[0].mxu0
        %v2185 = vadd.f32 0.0, %v2184
        %v2186 = vpop.f32.mrb[0].mxu0
        %2187 = vmatprep.mubr.f32.mxu0 0.0
        %2188 = vmatmul.mubr.f32.gmra.mrb[0].mxu0 %v2113
        %v2189 = vpop.f32.mrb[0].mxu0
        %v2190 = vadd.f32 0.0, %v2189
        %v2191 = vpop.f32.mrb[0].mxu0
        %2192 = vmatprep.mubr.f32.mxu0 0.0
        %2193 = vmatmul.mubr.f32.gmra.mrb[0].mxu0 %v2116
        %v2194 = vpop.f32.mrb[0].mxu0
        %v2195 = vadd.f32 0.0, %v2194
        %v2196 = vpop.f32.mrb[0].mxu0
        %2197 = vdwg.mxu0
        %2198 = vrot.lane.b32.xlu0 %v1439, 64
        %v2199 = vpop.permute.xlu0 %2198
        %2200 = vrot.lane.b32.xlu0 %v1441, 64
        %v2201 = vpop.permute.xlu0 %2200
        %2202 = vrot.lane.b32.xlu0 %v1443, 64
        %v2203 = vpop.permute.xlu0 %2202
        %v2208 = vsel %vm1869, %v1996, 0
        %v2211 = vsel %vm1869, %v1997, 0
        %v2214 = vsel %vm1869, %v1998, 0
        %2216 = vmatprep.subr.mxu0 0.0
        %2217 = vmatpush1.msra.mxu0 %v2199
        %2218 = vmatprep.subr.mxu0 0.0
        %2219 = vmatpush1.msra.mxu0 %v2201
        %2220 = vmatprep.subr.mxu0 0.0
        %2221 = vmatpush1.msra.mxu0 %v2203
        %2222 = vmatprep.subr.mxu0 0.0
        %2223 = vmatpush1.msra.mxu0 0.0
        %2224 = vmatprep.subr.mxu0 0.0
        %2225 = vmatpush1.msra.mxu0 0.0
        %2226 = vmatprep.subr.mxu0 0.0
        %2227 = vmatpush1.msra.mxu0 0.0
        %2228 = vmatprep.subr.mxu0 0.0
        %2229 = vmatpush1.msra.mxu0 0.0
        %2230 = vmatprep.subr.mxu0 0.0
        %2231 = vmatpush1.msra.mxu0 0.0
        %2232 = vmatprep.subr.mxu0 0.0
        %2233 = vmatpush1.msra.mxu0 0.0
        %2234 = vmatprep.subr.mxu0 0.0
        %2235 = vmatpush1.msra.mxu0 0.0
        %2236 = vmatprep.subr.mxu0 0.0
        %2237 = vmatpush1.msra.mxu0 0.0
        %2238 = vmatprep.subr.mxu0 0.0
        %2239 = vmatpush1.msra.mxu0 0.0
        %2240 = vmatprep.subr.mxu0 0.0
        %2241 = vmatpush1.msra.mxu0 0.0
        %2242 = vmatprep.subr.mxu0 0.0
        %2243 = vmatpush1.msra.mxu0 0.0
        %2244 = vmatprep.subr.mxu0 0.0
        %2245 = vmatpush1.msra.mxu0 0.0
        %2246 = vmatprep.subr.mxu0 0.0
        %2247 = vmatpush1.msra.mxu0 0.0
        %2248 = vmatprep.subr.mxu0 0.0
        %2249 = vmatpush1.msra.mxu0 0.0
        %2250 = vmatprep.subr.mxu0 0.0
        %2251 = vmatpush1.msra.mxu0 0.0
        %2252 = vmatprep.subr.mxu0 0.0
        %2253 = vmatpush1.msra.mxu0 0.0
        %2254 = vmatprep.subr.mxu0 0.0
        %2255 = vmatpush1.msra.mxu0 0.0
        %2256 = vmatprep.subr.mxu0 0.0
        %2257 = vmatpush1.msra.mxu0 0.0
        %2258 = vmatprep.subr.mxu0 0.0
        %2259 = vmatpush1.msra.mxu0 0.0
        %2260 = vmatprep.subr.mxu0 0.0
        %2261 = vmatpush1.msra.mxu0 0.0
        %2262 = vmatprep.subr.mxu0 0.0
        %2263 = vmatpush1.msra.mxu0 0.0
        %2264 = vmatprep.subr.mxu0 0.0
        %2265 = vmatpush1.msra.mxu0 0.0
        %2266 = vmatprep.subr.mxu0 0.0
        %2267 = vmatpush1.msra.mxu0 0.0
        %2268 = vmatprep.subr.mxu0 0.0
        %2269 = vmatpush1.msra.mxu0 0.0
        %2270 = vmatprep.subr.mxu0 0.0
        %2271 = vmatpush1.msra.mxu0 0.0
        %2272 = vmatprep.subr.mxu0 0.0
        %2273 = vmatpush1.msra.mxu0 0.0
        %2274 = vmatprep.subr.mxu0 0.0
        %2275 = vmatpush1.msra.mxu0 0.0
        %2276 = vmatprep.subr.mxu0 0.0
        %2277 = vmatpush1.msra.mxu0 0.0
        %2278 = vmatprep.subr.mxu0 0.0
        %2279 = vmatpush1.msra.mxu0 0.0
        %2280 = vmatprep.mubr.f32.mxu0 0.0
        %2281 = vmatmul.mubr.f32.gmra.mrb[0].mxu0 %v2208
        %v2282 = vpop.f32.mrb[0].mxu0
        %v2283 = vadd.f32 0.0, %v2282
        %v2284 = vpop.f32.mrb[0].mxu0
        %2285 = vmatprep.mubr.f32.mxu0 0.0
        %2286 = vmatmul.mubr.f32.gmra.mrb[0].mxu0 %v2211
        %v2287 = vpop.f32.mrb[0].mxu0
        %v2288 = vadd.f32 0.0, %v2287
        %v2289 = vpop.f32.mrb[0].mxu0
        %2290 = vmatprep.mubr.f32.mxu0 0.0
        %2291 = vmatmul.mubr.f32.gmra.mrb[0].mxu0 %v2214
        %v2292 = vpop.f32.mrb[0].mxu0
        %v2293 = vadd.f32 0.0, %v2292
        %v2294 = vpop.f32.mrb[0].mxu0
        %2295 = vdwg.mxu0
        %2296 = vrot.lane.b32.xlu0 %v1445, 64
        %v2297 = vpop.permute.xlu0 %2296
        %2298 = vrot.lane.b32.xlu0 %v1447, 64
        %v2299 = vpop.permute.xlu0 %2298
        %2300 = vrot.lane.b32.xlu0 %v1449, 64
        %v2301 = vpop.permute.xlu0 %2300
        %v2306 = vsel %vm1869, %v1999, 0
        %v2309 = vsel %vm1869, %v2000, 0
        %v2312 = vsel %vm1869, %v2001, 0
        %2314 = vmatprep.subr.mxu0 0.0
        %2315 = vmatpush1.msra.mxu0 %v2297
        %2316 = vmatprep.subr.mxu0 0.0
        %2317 = vmatpush1.msra.mxu0 %v2299
        %2318 = vmatprep.subr.mxu0 0.0
        %2319 = vmatpush1.msra.mxu0 %v2301
        %2320 = vmatprep.subr.mxu0 0.0
        %2321 = vmatpush1.msra.mxu0 0.0
        %2322 = vmatprep.subr.mxu0 0.0
        %2323 = vmatpush1.msra.mxu0 0.0
        %2324 = vmatprep.subr.mxu0 0.0
        %2325 = vmatpush1.msra.mxu0 0.0
        %2326 = vmatprep.subr.mxu0 0.0
        %2327 = vmatpush1.msra.mxu0 0.0
        %2328 = vmatprep.subr.mxu0 0.0
        %2329 = vmatpush1.msra.mxu0 0.0
        %2330 = vmatprep.subr.mxu0 0.0
        %2331 = vmatpush1.msra.mxu0 0.0
        %2332 = vmatprep.subr.mxu0 0.0
        %2333 = vmatpush1.msra.mxu0 0.0
        %2334 = vmatprep.subr.mxu0 0.0
        %2335 = vmatpush1.msra.mxu0 0.0
        %2336 = vmatprep.subr.mxu0 0.0
        %2337 = vmatpush1.msra.mxu0 0.0
        %2338 = vmatprep.subr.mxu0 0.0
        %2339 = vmatpush1.msra.mxu0 0.0
        %2340 = vmatprep.subr.mxu0 0.0
        %2341 = vmatpush1.msra.mxu0 0.0
        %2342 = vmatprep.subr.mxu0 0.0
        %2343 = vmatpush1.msra.mxu0 0.0
        %2344 = vmatprep.subr.mxu0 0.0
        %2345 = vmatpush1.msra.mxu0 0.0
        %2346 = vmatprep.subr.mxu0 0.0
        %2347 = vmatpush1.msra.mxu0 0.0
        %2348 = vmatprep.subr.mxu0 0.0
        %2349 = vmatpush1.msra.mxu0 0.0
        %2350 = vmatprep.subr.mxu0 0.0
        %2351 = vmatpush1.msra.mxu0 0.0
        %2352 = vmatprep.subr.mxu0 0.0
        %2353 = vmatpush1.msra.mxu0 0.0
        %2354 = vmatprep.subr.mxu0 0.0
        %2355 = vmatpush1.msra.mxu0 0.0
        %2356 = vmatprep.subr.mxu0 0.0
        %2357 = vmatpush1.msra.mxu0 0.0
        %2358 = vmatprep.subr.mxu0 0.0
        %2359 = vmatpush1.msra.mxu0 0.0
        %2360 = vmatprep.subr.mxu0 0.0
        %2361 = vmatpush1.msra.mxu0 0.0
        %2362 = vmatprep.subr.mxu0 0.0
        %2363 = vmatpush1.msra.mxu0 0.0
        %2364 = vmatprep.subr.mxu0 0.0
        %2365 = vmatpush1.msra.mxu0 0.0
        %2366 = vmatprep.subr.mxu0 0.0
        %2367 = vmatpush1.msra.mxu0 0.0
        %2368 = vmatprep.subr.mxu0 0.0
        %2369 = vmatpush1.msra.mxu0 0.0
        %2370 = vmatprep.subr.mxu0 0.0
        %2371 = vmatpush1.msra.mxu0 0.0
        %2372 = vmatprep.subr.mxu0 0.0
        %2373 = vmatpush1.msra.mxu0 0.0
        %2374 = vmatprep.subr.mxu0 0.0
        %2375 = vmatpush1.msra.mxu0 0.0
        %2376 = vmatprep.subr.mxu0 0.0
        %2377 = vmatpush1.msra.mxu0 0.0
        %2378 = vmatprep.mubr.f32.mxu0 0.0
        %2379 = vmatmul.mubr.f32.gmra.mrb[0].mxu0 %v2306
        %v2380 = vpop.f32.mrb[0].mxu0
        %v2381 = vadd.f32 0.0, %v2380
        %v2382 = vpop.f32.mrb[0].mxu0
        %2383 = vmatprep.mubr.f32.mxu0 0.0
        %2384 = vmatmul.mubr.f32.gmra.mrb[0].mxu0 %v2309
        %v2385 = vpop.f32.mrb[0].mxu0
        %v2386 = vadd.f32 0.0, %v2385
        %v2387 = vpop.f32.mrb[0].mxu0
        %2388 = vmatprep.mubr.f32.mxu0 0.0
        %2389 = vmatmul.mubr.f32.gmra.mrb[0].mxu0 %v2312
        %v2390 = vpop.f32.mrb[0].mxu0
        %v2391 = vadd.f32 0.0, %v2390
        %v2392 = vpop.f32.mrb[0].mxu0
        %2393 = vdwg.mxu0
        %2397 = vrot.lane.b32.xlu0 %v2185, 8
        %v2398 = vpop.permute.xlu0 %2397
        %2399 = vrot.lane.b32.xlu0 %v2190, 8
        %v2400 = vpop.permute.xlu0 %2399
        %2401 = vrot.lane.b32.xlu0 %v2195, 8
        %v2402 = vpop.permute.xlu0 %2401
        %2409 = vrot.lane.b32.xlu0 %v2283, 16
        %v2410 = vpop.permute.xlu0 %2409
        %2411 = vrot.lane.b32.xlu0 %v2288, 16
        %v2412 = vpop.permute.xlu0 %2411
        %2413 = vrot.lane.b32.xlu0 %v2293, 16
        %v2414 = vpop.permute.xlu0 %2413
        %2421 = vrot.lane.b32.xlu0 %v2381, 24
        %v2422 = vpop.permute.xlu0 %2421
        %2423 = vrot.lane.b32.xlu0 %v2386, 24
        %v2424 = vpop.permute.xlu0 %2423
        %2425 = vrot.lane.b32.xlu0 %v2391, 24
        %v2426 = vpop.permute.xlu0 %2425
        %v2430 = vsel %vm1456, %v2087, %v2398
        %v2431 = vsel %vm1456, %v2092, %v2400
        %v2432 = vsel %vm1456, %v2097, %v2402
        %vm2433 = vcmask 130048
        %v2434 = vsel %vm2433, %v2430, %v2410
        %v2435 = vsel %vm2433, %v2431, %v2412
        %v2436 = vsel %vm2433, %v2432, %v2414
        %v2437 = vsel %vm1869, %v2434, %v2422
        %v2438 = vsel %vm1869, %v2435, %v2424
        %v2439 = vsel %vm1869, %v2436, %v2426
        %v2440 = vld [vmem:[%s25] sm:$0xff]
        %v2441 = vld [vmem:[%s25 + $0x8] sm:$0xff]
        %v2442 = vld [vmem:[%s25 + $0x10] sm:$0xff]
        %v2443 = vld [vmem:[%s25 + $0x18] sm:$0xff]
        %v2444 = vld [vmem:[%s27] sm:$0x1]
        %v2446 = vlaneseq
        %v2447 = vshrl.u32 %v2446, 7
        %v2448 = vsub.s32 0, %v2447
        %v2449 = vrot.slane %v2444, %v2448
        %v2452 = vsel %vm1212, %v2437, 0
        %v2455 = vsel %vm1212, %v2438, 0
        %v2458 = vsel %vm1212, %v2439, 0
        %2460 = vmatprep.subr.mxu0 0.0
        %2461 = vmatpush1.msra.mxu0 %v2440
        %2462 = vmatprep.subr.mxu0 0.0
        %2463 = vmatpush1.msra.mxu0 %v2441
        %2464 = vmatprep.subr.mxu0 0.0
        %2465 = vmatpush1.msra.mxu0 %v2442
        %2466 = vmatprep.subr.mxu0 0.0
        %2467 = vmatpush1.msra.mxu0 %v2443
        %2468 = vmatprep.subr.mxu0 0.0
        %2469 = vmatpush1.msra.mxu0 0.0
        %2470 = vmatprep.subr.mxu0 0.0
        %2471 = vmatpush1.msra.mxu0 0.0
        %2472 = vmatprep.subr.mxu0 0.0
        %2473 = vmatpush1.msra.mxu0 0.0
        %2474 = vmatprep.subr.mxu0 0.0
        %2475 = vmatpush1.msra.mxu0 0.0
        %2476 = vmatprep.subr.mxu0 0.0
        %2477 = vmatpush1.msra.mxu0 0.0
        %2478 = vmatprep.subr.mxu0 0.0
        %2479 = vmatpush1.msra.mxu0 0.0
        %2480 = vmatprep.subr.mxu0 0.0
        %2481 = vmatpush1.msra.mxu0 0.0
        %2482 = vmatprep.subr.mxu0 0.0
        %2483 = vmatpush1.msra.mxu0 0.0
        %2484 = vmatprep.subr.mxu0 0.0
        %2485 = vmatpush1.msra.mxu0 0.0
        %2486 = vmatprep.subr.mxu0 0.0
        %2487 = vmatpush1.msra.mxu0 0.0
        %2488 = vmatprep.subr.mxu0 0.0
        %2489 = vmatpush1.msra.mxu0 0.0
        %2490 = vmatprep.subr.mxu0 0.0
        %2491 = vmatpush1.msra.mxu0 0.0
        %2492 = vmatprep.subr.mxu0 0.0
        %2493 = vmatpush1.msra.mxu0 0.0
        %2494 = vmatprep.subr.mxu0 0.0
        %2495 = vmatpush1.msra.mxu0 0.0
        %2496 = vmatprep.subr.mxu0 0.0
        %2497 = vmatpush1.msra.mxu0 0.0
        %2498 = vmatprep.subr.mxu0 0.0
        %2499 = vmatpush1.msra.mxu0 0.0
        %2500 = vmatprep.subr.mxu0 0.0
        %2501 = vmatpush1.msra.mxu0 0.0
        %2502 = vmatprep.subr.mxu0 0.0
        %2503 = vmatpush1.msra.mxu0 0.0
        %2504 = vmatprep.subr.mxu0 0.0
        %2505 = vmatpush1.msra.mxu0 0.0
        %2506 = vmatprep.subr.mxu0 0.0
        %2507 = vmatpush1.msra.mxu0 0.0
        %2508 = vmatprep.subr.mxu0 0.0
        %2509 = vmatpush1.msra.mxu0 0.0
        %2510 = vmatprep.subr.mxu0 0.0
        %2511 = vmatpush1.msra.mxu0 0.0
        %2512 = vmatprep.subr.mxu0 0.0
        %2513 = vmatpush1.msra.mxu0 0.0
        %2514 = vmatprep.subr.mxu0 0.0
        %2515 = vmatpush1.msra.mxu0 0.0
        %2516 = vmatprep.subr.mxu0 0.0
        %2517 = vmatpush1.msra.mxu0 0.0
        %2518 = vmatprep.subr.mxu0 0.0
        %2519 = vmatpush1.msra.mxu0 0.0
        %2520 = vmatprep.subr.mxu0 0.0
        %2521 = vmatpush1.msra.mxu0 0.0
        %2522 = vmatprep.subr.mxu0 0.0
        %2523 = vmatpush1.msra.mxu0 0.0
        %2524 = vmatprep.mubr.f32.mxu0 0.0
        %2525 = vmatmul.mubr.f32.gmra.mrb[0].mxu0 %v2452
        %v2526 = vpop.f32.mrb[0].mxu0
        %v2527 = vadd.f32 %v2449, %v2526
        %v2528 = vpop.f32.mrb[0].mxu0
        %2529 = vmatprep.mubr.f32.mxu0 0.0
        %2530 = vmatmul.mubr.f32.gmra.mrb[0].mxu0 %v2455
        %v2531 = vpop.f32.mrb[0].mxu0
        %v2532 = vadd.f32 %v2449, %v2531
        %v2533 = vpop.f32.mrb[0].mxu0
        %2534 = vmatprep.mubr.f32.mxu0 0.0
        %2535 = vmatmul.mubr.f32.gmra.mrb[0].mxu0 %v2458
        %v2536 = vpop.f32.mrb[0].mxu0
        %v2537 = vadd.f32 %v2449, %v2536
        %v2538 = vpop.f32.mrb[0].mxu0
        %2539 = vdwg.mxu0
        %v2540 = vld [vmem:[%s29] sm:$0x1]
        %v2541 = vld [vmem:[%s31] sm:$0x1]
        %v2542 = vsel %vm1212, %v2527, 0.0
        %2543 = vadd.xlane.f32.xlu0 %v2542
        %v2544 = vpop.xlane.xlu0 %2543
        %v2545 = vsel %vm1212, %v2532, 0.0
        %2546 = vadd.xlane.f32.xlu0 %v2545
        %v2547 = vpop.xlane.xlu0 %2546
        %v2548 = vsel %vm1212, %v2537, 0.0
        %2549 = vadd.xlane.f32.xlu0 %v2548
        %v2550 = vpop.xlane.xlu0 %2549
        %v2551 = vmul.f32 %v2544, %v1219
        %v2552 = vmul.f32 %v2547, %v1219
        %v2553 = vmul.f32 %v2550, %v1219
        %v2554 = vsub.f32 %v2527, %v2551
        %v2555 = vsub.f32 %v2532, %v2552
        %v2556 = vsub.f32 %v2537, %v2553
        %v2557 = vmul.f32 %v2554, %v2554
        %v2558 = vmul.f32 %v2555, %v2555
        %v2559 = vmul.f32 %v2556, %v2556
        %v2560 = vsel %vm1212, %v2557, 0.0
        %2561 = vadd.xlane.f32.xlu0 %v2560
        %v2562 = vpop.xlane.xlu0 %2561
        %v2563 = vsel %vm1212, %v2558, 0.0
        %2564 = vadd.xlane.f32.xlu0 %v2563
        %v2565 = vpop.xlane.xlu0 %2564
        %v2566 = vsel %vm1212, %v2559, 0.0
        %2567 = vadd.xlane.f32.xlu0 %v2566
        %v2568 = vpop.xlane.xlu0 %2567
        %v2569 = vmul.f32 %v2562, %v1219
        %v2570 = vmul.f32 %v2565, %v1219
        %v2571 = vmul.f32 %v2568, %v1219
        %v2572 = vadd.f32 %v2569, 64.0
        %v2573 = vadd.f32 %v2570, 64.0
        %v2574 = vadd.f32 %v2571, 64.0
        %v2575 = vrsqrt.pop %v2572
        %v2576 = vrsqrt.pop %v2573
        %v2577 = vrsqrt.pop %v2574
        %v2578 = vmul.f32 %v2554, %v2575
        %v2579 = vmul.f32 %v2555, %v2576
        %v2580 = vmul.f32 %v2556, %v2577
        %v2582 = vlaneseq
        %v2583 = vshrl.u32 %v2582, 7
        %v2584 = vsub.s32 0, %v2583
        %v2585 = vrot.slane %v2540, %v2584
        %v2587 = vmul.f32 %v2578, %v2585
        %v2588 = vmul.f32 %v2579, %v2585
        %v2589 = vmul.f32 %v2580, %v2585
        %v2591 = vlaneseq
        %v2592 = vshrl.u32 %v2591, 7
        %v2593 = vsub.s32 0, %v2592
        %v2594 = vrot.slane %v2541, %v2593
        %v2596 = vadd.f32 %v2587, %v2594
        %v2597 = vadd.f32 %v2588, %v2594
        %v2598 = vadd.f32 %v2589, %v2594
        %v2599 = vld [vmem:[%s33] sm:$0xff]
        %v2600 = vld [vmem:[%s33 + $0x8] sm:$0xff]
        %v2601 = vld [vmem:[%s33 + $0x10] sm:$0xff]
        %v2602 = vld [vmem:[%s33 + $0x18] sm:$0xff]
        %v2603 = vld [vmem:[%s35] sm:$0x1]
        %v2605 = vlaneseq
        %v2606 = vshrl.u32 %v2605, 7
        %v2607 = vsub.s32 0, %v2606
        %v2608 = vrot.slane %v2603, %v2607
        %v2611 = vsel %vm1212, %v2596, 0
        %v2614 = vsel %vm1212, %v2597, 0
        %v2617 = vsel %vm1212, %v2598, 0
        %2619 = vmatprep.subr.mxu0 0.0
        %2620 = vmatpush1.msra.mxu0 %v2599
        %2621 = vmatprep.subr.mxu0 0.0
        %2622 = vmatpush1.msra.mxu0 %v2600
        %2623 = vmatprep.subr.mxu0 0.0
        %2624 = vmatpush1.msra.mxu0 %v2601
        %2625 = vmatprep.subr.mxu0 0.0
        %2626 = vmatpush1.msra.mxu0 %v2602
        %2627 = vmatprep.subr.mxu0 0.0
        %2628 = vmatpush1.msra.mxu0 0.0
        %2629 = vmatprep.subr.mxu0 0.0
        %2630 = vmatpush1.msra.mxu0 0.0
        %2631 = vmatprep.subr.mxu0 0.0
        %2632 = vmatpush1.msra.mxu0 0.0
        %2633 = vmatprep.subr.mxu0 0.0
        %2634 = vmatpush1.msra.mxu0 0.0
        %2635 = vmatprep.subr.mxu0 0.0
        %2636 = vmatpush1.msra.mxu0 0.0
        %2637 = vmatprep.subr.mxu0 0.0
        %2638 = vmatpush1.msra.mxu0 0.0
        %2639 = vmatprep.subr.mxu0 0.0
        %2640 = vmatpush1.msra.mxu0 0.0
        %2641 = vmatprep.subr.mxu0 0.0
        %2642 = vmatpush1.msra.mxu0 0.0
        %2643 = vmatprep.subr.mxu0 0.0
        %2644 = vmatpush1.msra.mxu0 0.0
        %2645 = vmatprep.subr.mxu0 0.0
        %2646 = vmatpush1.msra.mxu0 0.0
        %2647 = vmatprep.subr.mxu0 0.0
        %2648 = vmatpush1.msra.mxu0 0.0
        %2649 = vmatprep.subr.mxu0 0.0
        %2650 = vmatpush1.msra.mxu0 0.0
        %2651 = vmatprep.subr.mxu0 0.0
        %2652 = vmatpush1.msra.mxu0 0.0
        %2653 = vmatprep.subr.mxu0 0.0
        %2654 = vmatpush1.msra.mxu0 0.0
        %2655 = vmatprep.subr.mxu0 0.0
        %2656 = vmatpush1.msra.mxu0 0.0
        %2657 = vmatprep.subr.mxu0 0.0
        %2658 = vmatpush1.msra.mxu0 0.0
        %2659 = vmatprep.subr.mxu0 0.0
        %2660 = vmatpush1.msra.mxu0 0.0
        %2661 = vmatprep.subr.mxu0 0.0
        %2662 = vmatpush1.msra.mxu0 0.0
        %2663 = vmatprep.subr.mxu0 0.0
        %2664 = vmatpush1.msra.mxu0 0.0
        %2665 = vmatprep.subr.mxu0 0.0
        %2666 = vmatpush1.msra.mxu0 0.0
        %2667 = vmatprep.subr.mxu0 0.0
        %2668 = vmatpush1.msra.mxu0 0.0
        %2669 = vmatprep.subr.mxu0 0.0
        %2670 = vmatpush1.msra.mxu0 0.0
        %2671 = vmatprep.subr.mxu0 0.0
        %2672 = vmatpush1.msra.mxu0 0.0
        %2673 = vmatprep.subr.mxu0 0.0
        %2674 = vmatpush1.msra.mxu0 0.0
        %2675 = vmatprep.subr.mxu0 0.0
        %2676 = vmatpush1.msra.mxu0 0.0
        %2677 = vmatprep.subr.mxu0 0.0
        %2678 = vmatpush1.msra.mxu0 0.0
        %2679 = vmatprep.subr.mxu0 0.0
        %2680 = vmatpush1.msra.mxu0 0.0
        %2681 = vmatprep.subr.mxu0 0.0
        %2682 = vmatpush1.msra.mxu0 0.0
        %2683 = vmatprep.mubr.f32.mxu0 0.0
        %2684 = vmatmul.mubr.f32.gmra.mrb[0].mxu0 %v2611
        %v2685 = vpop.f32.mrb[0].mxu0
        %v2686 = vadd.f32 %v2608, %v2685
        %v2687 = vpop.f32.mrb[0].mxu0
        %2688 = vmatprep.mubr.f32.mxu0 0.0
        %2689 = vmatmul.mubr.f32.gmra.mrb[0].mxu0 %v2614
        %v2690 = vpop.f32.mrb[0].mxu0
        %v2691 = vadd.f32 %v2608, %v2690
        %v2692 = vpop.f32.mrb[0].mxu0
        %2693 = vmatprep.mubr.f32.mxu0 0.0
        %2694 = vmatmul.mubr.f32.gmra.mrb[0].mxu0 %v2617
        %v2695 = vpop.f32.mrb[0].mxu0
        %v2696 = vadd.f32 %v2608, %v2695
        %v2697 = vpop.f32.mrb[0].mxu0
        %2698 = vdwg.mxu0
        %v2699 = vmul.f32 %v2686, 0.5
        %v2700 = vmul.f32 %v2691, 0.5
        %v2701 = vmul.f32 %v2696, 0.5
        %v2702 = vmul.f32 %v2686, 0.70710677
        %v2703 = vmul.f32 %v2691, 0.70710677
        %v2704 = vmul.f32 %v2696, 0.70710677
        %v2705 = verf.f32.pop %v2702
        %v2706 = verf.f32.pop %v2703
        %v2707 = verf.f32.pop %v2704
        %v2708 = vadd.f32 %v2705, 1.0
        %v2709 = vadd.f32 %v2706, 1.0
        %v2710 = vadd.f32 %v2707, 1.0
        %v2711 = vmul.f32 %v2699, %v2708
        %v2712 = vmul.f32 %v2700, %v2709
        %v2713 = vmul.f32 %v2701, %v2710
        %v2714 = vld [vmem:[%s37] sm:$0xff]
        %v2715 = vld [vmem:[%s37 + $0x8] sm:$0xff]
        %v2716 = vld [vmem:[%s37 + $0x10] sm:$0xff]
        %v2717 = vld [vmem:[%s37 + $0x18] sm:$0xff]
        %v2718 = vld [vmem:[%s37 + $0x20] sm:$0xff]
        %v2719 = vld [vmem:[%s37 + $0x28] sm:$0xff]
        %v2720 = vld [vmem:[%s37 + $0x30] sm:$0xff]
        %v2721 = vld [vmem:[%s37 + $0x38] sm:$0xff]
        %v2722 = vld [vmem:[%s39] sm:$0x1]
        %v2724 = vlaneseq
        %v2725 = vshrl.u32 %v2724, 7
        %v2726 = vsub.s32 0, %v2725
        %v2727 = vrot.slane %v2722, %v2726
        %vm2729 = vcmask 523264
        %v2731 = vsel %vm2729, %v2711, 0
        %v2734 = vsel %vm2729, %v2712, 0
        %v2737 = vsel %vm2729, %v2713, 0
        %2739 = vmatprep.subr.mxu0 0.0
        %2740 = vmatpush1.msra.mxu0 %v2714
        %2741 = vmatprep.subr.mxu0 0.0
        %2742 = vmatpush1.msra.mxu0 %v2715
        %2743 = vmatprep.subr.mxu0 0.0
        %2744 = vmatpush1.msra.mxu0 %v2716
        %2745 = vmatprep.subr.mxu0 0.0
        %2746 = vmatpush1.msra.mxu0 %v2717
        %2747 = vmatprep.subr.mxu0 0.0
        %2748 = vmatpush1.msra.mxu0 %v2718
        %2749 = vmatprep.subr.mxu0 0.0
        %2750 = vmatpush1.msra.mxu0 %v2719
        %2751 = vmatprep.subr.mxu0 0.0
        %2752 = vmatpush1.msra.mxu0 %v2720
        %2753 = vmatprep.subr.mxu0 0.0
        %2754 = vmatpush1.msra.mxu0 %v2721
        %2755 = vmatprep.subr.mxu0 0.0
        %2756 = vmatpush1.msra.mxu0 0.0
        %2757 = vmatprep.subr.mxu0 0.0
        %2758 = vmatpush1.msra.mxu0 0.0
        %2759 = vmatprep.subr.mxu0 0.0
        %2760 = vmatpush1.msra.mxu0 0.0
        %2761 = vmatprep.subr.mxu0 0.0
        %2762 = vmatpush1.msra.mxu0 0.0
        %2763 = vmatprep.subr.mxu0 0.0
        %2764 = vmatpush1.msra.mxu0 0.0
        %2765 = vmatprep.subr.mxu0 0.0
        %2766 = vmatpush1.msra.mxu0 0.0
        %2767 = vmatprep.subr.mxu0 0.0
        %2768 = vmatpush1.msra.mxu0 0.0
        %2769 = vmatprep.subr.mxu0 0.0
        %2770 = vmatpush1.msra.mxu0 0.0
        %2771 = vmatprep.subr.mxu0 0.0
        %2772 = vmatpush1.msra.mxu0 0.0
        %2773 = vmatprep.subr.mxu0 0.0
        %2774 = vmatpush1.msra.mxu0 0.0
        %2775 = vmatprep.subr.mxu0 0.0
        %2776 = vmatpush1.msra.mxu0 0.0
        %2777 = vmatprep.subr.mxu0 0.0
        %2778 = vmatpush1.msra.mxu0 0.0
        %2779 = vmatprep.subr.mxu0 0.0
        %2780 = vmatpush1.msra.mxu0 0.0
        %2781 = vmatprep.subr.mxu0 0.0
        %2782 = vmatpush1.msra.mxu0 0.0
        %2783 = vmatprep.subr.mxu0 0.0
        %2784 = vmatpush1.msra.mxu0 0.0
        %2785 = vmatprep.subr.mxu0 0.0
        %2786 = vmatpush1.msra.mxu0 0.0
        %2787 = vmatprep.subr.mxu0 0.0
        %2788 = vmatpush1.msra.mxu0 0.0
        %2789 = vmatprep.subr.mxu0 0.0
        %2790 = vmatpush1.msra.mxu0 0.0
        %2791 = vmatprep.subr.mxu0 0.0
        %2792 = vmatpush1.msra.mxu0 0.0
        %2793 = vmatprep.subr.mxu0 0.0
        %2794 = vmatpush1.msra.mxu0 0.0
        %2795 = vmatprep.subr.mxu0 0.0
        %2796 = vmatpush1.msra.mxu0 0.0
        %2797 = vmatprep.subr.mxu0 0.0
        %2798 = vmatpush1.msra.mxu0 0.0
        %2799 = vmatprep.subr.mxu0 0.0
        %2800 = vmatpush1.msra.mxu0 0.0
        %2801 = vmatprep.subr.mxu0 0.0
        %2802 = vmatpush1.msra.mxu0 0.0
        %2803 = vmatprep.mubr.f32.mxu0 0.0
        %2804 = vmatmul.mubr.f32.gmra.mrb[0].mxu0 %v2731
        %v2805 = vpop.f32.mrb[0].mxu0
        %v2806 = vadd.f32 %v2727, %v2805
        %v2807 = vpop.f32.mrb[0].mxu0
        %2808 = vmatprep.mubr.f32.mxu0 0.0
        %2809 = vmatmul.mubr.f32.gmra.mrb[0].mxu0 %v2734
        %v2810 = vpop.f32.mrb[0].mxu0
        %v2811 = vadd.f32 %v2727, %v2810
        %v2812 = vpop.f32.mrb[0].mxu0
        %2813 = vmatprep.mubr.f32.mxu0 0.0
        %2814 = vmatmul.mubr.f32.gmra.mrb[0].mxu0 %v2737
        %v2815 = vpop.f32.mrb[0].mxu0
        %v2816 = vadd.f32 %v2727, %v2815
        %v2817 = vpop.f32.mrb[0].mxu0
        %2818 = vdwg.mxu0
        %v2819 = vadd.f32 %v2806, %v2527
        %v2820 = vadd.f32 %v2811, %v2532
        %v2821 = vadd.f32 %v2816, %v2537
        %v2822 = vld [vmem:[%s41] sm:$0x1]
        %v2823 = vld [vmem:[%s43] sm:$0x1]
        %v2824 = vsel %vm1212, %v2819, 0.0
        %2825 = vadd.xlane.f32.xlu0 %v2824
        %v2826 = vpop.xlane.xlu0 %2825
        %v2827 = vsel %vm1212, %v2820, 0.0
        %2828 = vadd.xlane.f32.xlu0 %v2827
        %v2829 = vpop.xlane.xlu0 %2828
        %v2830 = vsel %vm1212, %v2821, 0.0
        %2831 = vadd.xlane.f32.xlu0 %v2830
        %v2832 = vpop.xlane.xlu0 %2831
        %v2833 = vmul.f32 %v2826, %v1219
        %v2834 = vmul.f32 %v2829, %v1219
        %v2835 = vmul.f32 %v2832, %v1219
        %v2836 = vsub.f32 %v2819, %v2833
        %v2837 = vsub.f32 %v2820, %v2834
        %v2838 = vsub.f32 %v2821, %v2835
        %v2839 = vmul.f32 %v2836, %v2836
        %v2840 = vmul.f32 %v2837, %v2837
        %v2841 = vmul.f32 %v2838, %v2838
        %v2842 = vsel %vm1212, %v2839, 0.0
        %2843 = vadd.xlane.f32.xlu0 %v2842
        %v2844 = vpop.xlane.xlu0 %2843
        %v2845 = vsel %vm1212, %v2840, 0.0
        %2846 = vadd.xlane.f32.xlu0 %v2845
        %v2847 = vpop.xlane.xlu0 %2846
        %v2848 = vsel %vm1212, %v2841, 0.0
        %2849 = vadd.xlane.f32.xlu0 %v2848
        %v2850 = vpop.xlane.xlu0 %2849
        %v2851 = vmul.f32 %v2844, %v1219
        %v2852 = vmul.f32 %v2847, %v1219
        %v2853 = vmul.f32 %v2850, %v1219
        %v2854 = vadd.f32 %v2851, 1e-05
        %v2855 = vadd.f32 %v2852, 1e-05
        %v2856 = vadd.f32 %v2853, 1e-05
        %v2857 = vrsqrt.pop %v2854
        %v2858 = vrsqrt.pop %v2855
        %v2859 = vrsqrt.pop %v2856
        %v2860 = vmul.f32 %v2836, %v2857
        %v2861 = vmul.f32 %v2837, %v2858
        %v2862 = vmul.f32 %v2838, %v2859
        %v2864 = vlaneseq
        %v2865 = vshrl.u32 %v2864, 7
        %v2866 = vsub.s32 0, %v2865
        %v2867 = vrot.slane %v2822, %v2866
        %v2869 = vmul.f32 %v2860, %v2867
        %v2870 = vmul.f32 %v2861, %v2867
        %v2871 = vmul.f32 %v2862, %v2867
        %v2873 = vlaneseq
        %v2874 = vshrl.u32 %v2873, 7
        %v2875 = vsub.s32 0, %v2874
        %v2876 = vrot.slane %v2823, %v2875
        %v2878 = vadd.f32 %v2869, %v2876
        %v2879 = vadd.f32 %v2870, %v2876
        %v2880 = vadd.f32 %v2871, %v2876
        %v2881 = vld [vmem:[%s45] sm:$0xff]
        %v2882 = vld [vmem:[%s45 + $0x8] sm:$0xff]
        %v2883 = vld [vmem:[%s45 + $0x10] sm:$0xff]
        %v2884 = vld [vmem:[%s45 + $0x18] sm:$0xff]
        %v2886 = vsel %vm1212, %v2878, 0
        %v2889 = vsel %vm1212, %v2879, 0
        %v2892 = vsel %vm1212, %v2880, 0
        %2894 = vmatprep.subr.mxu0 0.0
        %2895 = vmatpush1.msra.mxu0 %v2881
        %2896 = vmatprep.subr.mxu0 0.0
        %2897 = vmatpush1.msra.mxu0 %v2882
        %2898 = vmatprep.subr.mxu0 0.0
        %2899 = vmatpush1.msra.mxu0 %v2883
        %2900 = vmatprep.subr.mxu0 0.0
        %2901 = vmatpush1.msra.mxu0 %v2884
        %2902 = vmatprep.subr.mxu0 0.0
        %2903 = vmatpush1.msra.mxu0 0.0
        %2904 = vmatprep.subr.mxu0 0.0
        %2905 = vmatpush1.msra.mxu0 0.0
        %2906 = vmatprep.subr.mxu0 0.0
        %2907 = vmatpush1.msra.mxu0 0.0
        %2908 = vmatprep.subr.mxu0 0.0
        %2909 = vmatpush1.msra.mxu0 0.0
        %2910 = vmatprep.subr.mxu0 0.0
        %2911 = vmatpush1.msra.mxu0 0.0
        %2912 = vmatprep.subr.mxu0 0.0
        %2913 = vmatpush1.msra.mxu0 0.0
        %2914 = vmatprep.subr.mxu0 0.0
        %2915 = vmatpush1.msra.mxu0 0.0
        %2916 = vmatprep.subr.mxu0 0.0
        %2917 = vmatpush1.msra.mxu0 0.0
        %2918 = vmatprep.subr.mxu0 0.0
        %2919 = vmatpush1.msra.mxu0 0.0
        %2920 = vmatprep.subr.mxu0 0.0
        %2921 = vmatpush1.msra.mxu0 0.0
        %2922 = vmatprep.subr.mxu0 0.0
        %2923 = vmatpush1.msra.mxu0 0.0
        %2924 = vmatprep.subr.mxu0 0.0
        %2925 = vmatpush1.msra.mxu0 0.0
        %2926 = vmatprep.subr.mxu0 0.0
        %2927 = vmatpush1.msra.mxu0 0.0
        %2928 = vmatprep.subr.mxu0 0.0
        %2929 = vmatpush1.msra.mxu0 0.0
        %2930 = vmatprep.subr.mxu0 0.0
        %2931 = vmatpush1.msra.mxu0 0.0
        %2932 = vmatprep.subr.mxu0 0.0
        %2933 = vmatpush1.msra.mxu0 0.0
        %2934 = vmatprep.subr.mxu0 0.0
        %2935 = vmatpush1.msra.mxu0 0.0
        %2936 = vmatprep.subr.mxu0 0.0
        %2937 = vmatpush1.msra.mxu0 0.0
        %2938 = vmatprep.subr.mxu0 0.0
        %2939 = vmatpush1.msra.mxu0 0.0
        %2940 = vmatprep.subr.mxu0 0.0
        %2941 = vmatpush1.msra.mxu0 0.0
        %2942 = vmatprep.subr.mxu0 0.0
        %2943 = vmatpush1.msra.mxu0 0.0
        %2944 = vmatprep.subr.mxu0 0.0
        %2945 = vmatpush1.msra.mxu0 0.0
        %2946 = vmatprep.subr.mxu0 0.0
        %2947 = vmatpush1.msra.mxu0 0.0
        %2948 = vmatprep.subr.mxu0 0.0
        %2949 = vmatpush1.msra.mxu0 0.0
        %2950 = vmatprep.subr.mxu0 0.0
        %2951 = vmatpush1.msra.mxu0 0.0
        %2952 = vmatprep.subr.mxu0 0.0
        %2953 = vmatpush1.msra.mxu0 0.0
        %2954 = vmatprep.subr.mxu0 0.0
        %2955 = vmatpush1.msra.mxu0 0.0
        %2956 = vmatprep.subr.mxu0 0.0
        %2957 = vmatpush1.msra.mxu0 0.0
        %2958 = vmatprep.mubr.f32.mxu0 0.0
        %2959 = vmatmul.mubr.f32.gmra.mrb[0].mxu0 %v2886
        %v2960 = vpop.f32.mrb[0].mxu0
        %v2961 = vadd.f32 0.0, %v2960
        %v2962 = vpop.f32.mrb[0].mxu0
        %2963 = vmatprep.mubr.f32.mxu0 0.0
        %2964 = vmatmul.mubr.f32.gmra.mrb[0].mxu0 %v2889
        %v2965 = vpop.f32.mrb[0].mxu0
        %v2966 = vadd.f32 0.0, %v2965
        %v2967 = vpop.f32.mrb[0].mxu0
        %2968 = vmatprep.mubr.f32.mxu0 0.0
        %2969 = vmatmul.mubr.f32.gmra.mrb[0].mxu0 %v2892
        %v2970 = vpop.f32.mrb[0].mxu0
        %v2971 = vadd.f32 0.0, %v2970
        %v2972 = vpop.f32.mrb[0].mxu0
        %2973 = vdwg.mxu0
        %2977 = vrot.lane.b32.xlu0 %v2961, 120
        %v2978 = vpop.permute.xlu0 %2977
        %2979 = vrot.lane.b32.xlu0 %v2966, 120
        %v2980 = vpop.permute.xlu0 %2979
        %2981 = vrot.lane.b32.xlu0 %v2971, 120
        %v2982 = vpop.permute.xlu0 %2981
        %2983 = vrot.lane.b32.xlu0 %v2961, 112
        %v2984 = vpop.permute.xlu0 %2983
        %2985 = vrot.lane.b32.xlu0 %v2966, 112
        %v2986 = vpop.permute.xlu0 %2985
        %2987 = vrot.lane.b32.xlu0 %v2971, 112
        %v2988 = vpop.permute.xlu0 %2987
        %2989 = vrot.lane.b32.xlu0 %v2961, 104
        %v2990 = vpop.permute.xlu0 %2989
        %2991 = vrot.lane.b32.xlu0 %v2966, 104
        %v2992 = vpop.permute.xlu0 %2991
        %2993 = vrot.lane.b32.xlu0 %v2971, 104
        %v2994 = vpop.permute.xlu0 %2993
        %2995 = vrot.lane.b32.xlu0 %v2961, 96
        %v2996 = vpop.permute.xlu0 %2995
        %2997 = vrot.lane.b32.xlu0 %v2966, 96
        %v2998 = vpop.permute.xlu0 %2997
        %2999 = vrot.lane.b32.xlu0 %v2971, 96
        %v3000 = vpop.permute.xlu0 %2999
        %v3001 = vsel %vm1456, %v2961, 0
        %v3003 = vsel %vm1456, %v2966, 0
        %v3005 = vsel %vm1456, %v2971, 0
        %v3007 = vsel %vm1456, %v2996, 0
        %v3009 = vsel %vm1456, %v2998, 0
        %v3011 = vsel %vm1456, %v3000, 0
        %3013 = vmatprep.subr.mxu0 0.0
        %3014 = vmatpush1.xpose.msra.mxu0 %v3007
        %3015 = vmatprep.subr.mxu0 0.0
        %3016 = vmatpush1.xpose.msra.mxu0 %v3009
        %3017 = vmatprep.subr.mxu0 0.0
        %3018 = vmatpush1.xpose.msra.mxu0 %v3011
        %3019 = vmatprep.subr.mxu0 0.0
        %3020 = vmatpush1.xpose.msra.mxu0 0.0
        %3021 = vmatprep.subr.mxu0 0.0
        %3022 = vmatpush1.xpose.msra.mxu0 0.0
        %3023 = vmatprep.subr.mxu0 0.0
        %3024 = vmatpush1.xpose.msra.mxu0 0.0
        %3025 = vmatprep.subr.mxu0 0.0
        %3026 = vmatpush1.xpose.msra.mxu0 0.0
        %3027 = vmatprep.subr.mxu0 0.0
        %3028 = vmatpush1.xpose.msra.mxu0 0.0
        %3029 = vmatprep.subr.mxu0 0.0
        %3030 = vmatpush1.xpose.msra.mxu0 0.0
        %3031 = vmatprep.subr.mxu0 0.0
        %3032 = vmatpush1.xpose.msra.mxu0 0.0
        %3033 = vmatprep.subr.mxu0 0.0
        %3034 = vmatpush1.xpose.msra.mxu0 0.0
        %3035 = vmatprep.subr.mxu0 0.0
        %3036 = vmatpush1.xpose.msra.mxu0 0.0
        %3037 = vmatprep.subr.mxu0 0.0
        %3038 = vmatpush1.xpose.msra.mxu0 0.0
        %3039 = vmatprep.subr.mxu0 0.0
        %3040 = vmatpush1.xpose.msra.mxu0 0.0
        %3041 = vmatprep.subr.mxu0 0.0
        %3042 = vmatpush1.xpose.msra.mxu0 0.0
        %3043 = vmatprep.subr.mxu0 0.0
        %3044 = vmatpush1.xpose.msra.mxu0 0.0
        %3045 = vmatprep.subr.mxu0 0.0
        %3046 = vmatpush1.xpose.msra.mxu0 0.0
        %3047 = vmatprep.subr.mxu0 0.0
        %3048 = vmatpush1.xpose.msra.mxu0 0.0
        %3049 = vmatprep.subr.mxu0 0.0
        %3050 = vmatpush1.xpose.msra.mxu0 0.0
        %3051 = vmatprep.subr.mxu0 0.0
        %3052 = vmatpush1.xpose.msra.mxu0 0.0
        %3053 = vmatprep.subr.mxu0 0.0
        %3054 = vmatpush1.xpose.msra.mxu0 0.0
        %3055 = vmatprep.subr.mxu0 0.0
        %3056 = vmatpush1.xpose.msra.mxu0 0.0
        %3057 = vmatprep.subr.mxu0 0.0
        %3058 = vmatpush1.xpose.msra.mxu0 0.0
        %3059 = vmatprep.subr.mxu0 0.0
        %3060 = vmatpush1.xpose.msra.mxu0 0.0
        %3061 = vmatprep.subr.mxu0 0.0
        %3062 = vmatpush1.xpose.msra.mxu0 0.0
        %3063 = vmatprep.subr.mxu0 0.0
        %3064 = vmatpush1.xpose.msra.mxu0 0.0
        %3065 = vmatprep.subr.mxu0 0.0
        %3066 = vmatpush1.xpose.msra.mxu0 0.0
        %3067 = vmatprep.subr.mxu0 0.0
        %3068 = vmatpush1.xpose.msra.mxu0 0.0
        %3069 = vmatprep.subr.mxu0 0.0
        %3070 = vmatpush1.xpose.msra.mxu0 0.0
        %3071 = vmatprep.subr.mxu0 0.0
        %3072 = vmatpush1.xpose.msra.mxu0 0.0
        %3073 = vmatprep.subr.mxu0 0.0
        %3074 = vmatpush1.xpose.msra.mxu0 0.0
        %3075 = vmatprep.subr.mxu0 0.0
        %3076 = vmatpush1.xpose.msra.mxu0 0.0
        %3077 = vmatprep.mubr.f32.mxu0 0.0
        %3078 = vmatmul.mubr.f32.gmra.mrb[0].mxu0 %v3001
        %v3079 = vpop.f32.mrb[0].mxu0
        %v3080 = vadd.f32 0.0, %v3079
        %v3081 = vpop.f32.mrb[0].mxu0
        %3082 = vmatprep.mubr.f32.mxu0 0.0
        %3083 = vmatmul.mubr.f32.gmra.mrb[0].mxu0 %v3003
        %v3084 = vpop.f32.mrb[0].mxu0
        %v3085 = vadd.f32 0.0, %v3084
        %v3086 = vpop.f32.mrb[0].mxu0
        %3087 = vmatprep.mubr.f32.mxu0 0.0
        %3088 = vmatmul.mubr.f32.gmra.mrb[0].mxu0 %v3005
        %v3089 = vpop.f32.mrb[0].mxu0
        %v3090 = vadd.f32 0.0, %v3089
        %v3091 = vpop.f32.mrb[0].mxu0
        %3092 = vdwg.mxu0
        %3093 = vrot.lane.b32.xlu0 %v2978, 96
        %v3094 = vpop.permute.xlu0 %3093
        %3095 = vrot.lane.b32.xlu0 %v2980, 96
        %v3096 = vpop.permute.xlu0 %3095
        %3097 = vrot.lane.b32.xlu0 %v2982, 96
        %v3098 = vpop.permute.xlu0 %3097
        %v3099 = vsel %vm1456, %v2978, 0
        %v3101 = vsel %vm1456, %v2980, 0
        %v3103 = vsel %vm1456, %v2982, 0
        %v3105 = vsel %vm1456, %v3094, 0
        %v3107 = vsel %vm1456, %v3096, 0
        %v3109 = vsel %vm1456, %v3098, 0
        %3111 = vmatprep.subr.mxu0 0.0
        %3112 = vmatpush1.xpose.msra.mxu0 %v3105
        %3113 = vmatprep.subr.mxu0 0.0
        %3114 = vmatpush1.xpose.msra.mxu0 %v3107
        %3115 = vmatprep.subr.mxu0 0.0
        %3116 = vmatpush1.xpose.msra.mxu0 %v3109
        %3117 = vmatprep.subr.mxu0 0.0
        %3118 = vmatpush1.xpose.msra.mxu0 0.0
        %3119 = vmatprep.subr.mxu0 0.0
        %3120 = vmatpush1.xpose.msra.mxu0 0.0
        %3121 = vmatprep.subr.mxu0 0.0
        %3122 = vmatpush1.xpose.msra.mxu0 0.0
        %3123 = vmatprep.subr.mxu0 0.0
        %3124 = vmatpush1.xpose.msra.mxu0 0.0
        %3125 = vmatprep.subr.mxu0 0.0
        %3126 = vmatpush1.xpose.msra.mxu0 0.0
        %3127 = vmatprep.subr.mxu0 0.0
        %3128 = vmatpush1.xpose.msra.mxu0 0.0
        %3129 = vmatprep.subr.mxu0 0.0
        %3130 = vmatpush1.xpose.msra.mxu0 0.0
        %3131 = vmatprep.subr.mxu0 0.0
        %3132 = vmatpush1.xpose.msra.mxu0 0.0
        %3133 = vmatprep.subr.mxu0 0.0
        %3134 = vmatpush1.xpose.msra.mxu0 0.0
        %3135 = vmatprep.subr.mxu0 0.0
        %3136 = vmatpush1.xpose.msra.mxu0 0.0
        %3137 = vmatprep.subr.mxu0 0.0
        %3138 = vmatpush1.xpose.msra.mxu0 0.0
        %3139 = vmatprep.subr.mxu0 0.0
        %3140 = vmatpush1.xpose.msra.mxu0 0.0
        %3141 = vmatprep.subr.mxu0 0.0
        %3142 = vmatpush1.xpose.msra.mxu0 0.0
        %3143 = vmatprep.subr.mxu0 0.0
        %3144 = vmatpush1.xpose.msra.mxu0 0.0
        %3145 = vmatprep.subr.mxu0 0.0
        %3146 = vmatpush1.xpose.msra.mxu0 0.0
        %3147 = vmatprep.subr.mxu0 0.0
        %3148 = vmatpush1.xpose.msra.mxu0 0.0
        %3149 = vmatprep.subr.mxu0 0.0
        %3150 = vmatpush1.xpose.msra.mxu0 0.0
        %3151 = vmatprep.subr.mxu0 0.0
        %3152 = vmatpush1.xpose.msra.mxu0 0.0
        %3153 = vmatprep.subr.mxu0 0.0
        %3154 = vmatpush1.xpose.msra.mxu0 0.0
        %3155 = vmatprep.subr.mxu0 0.0
        %3156 = vmatpush1.xpose.msra.mxu0 0.0
        %3157 = vmatprep.subr.mxu0 0.0
        %3158 = vmatpush1.xpose.msra.mxu0 0.0
        %3159 = vmatprep.subr.mxu0 0.0
        %3160 = vmatpush1.xpose.msra.mxu0 0.0
        %3161 = vmatprep.subr.mxu0 0.0
        %3162 = vmatpush1.xpose.msra.mxu0 0.0
        %3163 = vmatprep.subr.mxu0 0.0
        %3164 = vmatpush1.xpose.msra.mxu0 0.0
        %3165 = vmatprep.subr.mxu0 0.0
        %3166 = vmatpush1.xpose.msra.mxu0 0.0
        %3167 = vmatprep.subr.mxu0 0.0
        %3168 = vmatpush1.xpose.msra.mxu0 0.0
        %3169 = vmatprep.subr.mxu0 0.0
        %3170 = vmatpush1.xpose.msra.mxu0 0.0
        %3171 = vmatprep.subr.mxu0 0.0
        %3172 = vmatpush1.xpose.msra.mxu0 0.0
        %3173 = vmatprep.subr.mxu0 0.0
        %3174 = vmatpush1.xpose.msra.mxu0 0.0
        %3175 = vmatprep.mubr.f32.mxu0 0.0
        %3176 = vmatmul.mubr.f32.gmra.mrb[0].mxu0 %v3099
        %v3177 = vpop.f32.mrb[0].mxu0
        %v3178 = vadd.f32 0.0, %v3177
        %v3179 = vpop.f32.mrb[0].mxu0
        %3180 = vmatprep.mubr.f32.mxu0 0.0
        %3181 = vmatmul.mubr.f32.gmra.mrb[0].mxu0 %v3101
        %v3182 = vpop.f32.mrb[0].mxu0
        %v3183 = vadd.f32 0.0, %v3182
        %v3184 = vpop.f32.mrb[0].mxu0
        %3185 = vmatprep.mubr.f32.mxu0 0.0
        %3186 = vmatmul.mubr.f32.gmra.mrb[0].mxu0 %v3103
        %v3187 = vpop.f32.mrb[0].mxu0
        %v3188 = vadd.f32 0.0, %v3187
        %v3189 = vpop.f32.mrb[0].mxu0
        %3190 = vdwg.mxu0
        %3191 = vrot.lane.b32.xlu0 %v2984, 96
        %v3192 = vpop.permute.xlu0 %3191
        %3193 = vrot.lane.b32.xlu0 %v2986, 96
        %v3194 = vpop.permute.xlu0 %3193
        %3195 = vrot.lane.b32.xlu0 %v2988, 96
        %v3196 = vpop.permute.xlu0 %3195
        %v3197 = vsel %vm1456, %v2984, 0
        %v3199 = vsel %vm1456, %v2986, 0
        %v3201 = vsel %vm1456, %v2988, 0
        %v3203 = vsel %vm1456, %v3192, 0
        %v3205 = vsel %vm1456, %v3194, 0
        %v3207 = vsel %vm1456, %v3196, 0
        %3209 = vmatprep.subr.mxu0 0.0
        %3210 = vmatpush1.xpose.msra.mxu0 %v3203
        %3211 = vmatprep.subr.mxu0 0.0
        %3212 = vmatpush1.xpose.msra.mxu0 %v3205
        %3213 = vmatprep.subr.mxu0 0.0
        %3214 = vmatpush1.xpose.msra.mxu0 %v3207
        %3215 = vmatprep.subr.mxu0 0.0
        %3216 = vmatpush1.xpose.msra.mxu0 0.0
        %3217 = vmatprep.subr.mxu0 0.0
        %3218 = vmatpush1.xpose.msra.mxu0 0.0
        %3219 = vmatprep.subr.mxu0 0.0
        %3220 = vmatpush1.xpose.msra.mxu0 0.0
        %3221 = vmatprep.subr.mxu0 0.0
        %3222 = vmatpush1.xpose.msra.mxu0 0.0
        %3223 = vmatprep.subr.mxu0 0.0
        %3224 = vmatpush1.xpose.msra.mxu0 0.0
        %3225 = vmatprep.subr.mxu0 0.0
        %3226 = vmatpush1.xpose.msra.mxu0 0.0
        %3227 = vmatprep.subr.mxu0 0.0
        %3228 = vmatpush1.xpose.msra.mxu0 0.0
        %3229 = vmatprep.subr.mxu0 0.0
        %3230 = vmatpush1.xpose.msra.mxu0 0.0
        %3231 = vmatprep.subr.mxu0 0.0
        %3232 = vmatpush1.xpose.msra.mxu0 0.0
        %3233 = vmatprep.subr.mxu0 0.0
        %3234 = vmatpush1.xpose.msra.mxu0 0.0
        %3235 = vmatprep.subr.mxu0 0.0
        %3236 = vmatpush1.xpose.msra.mxu0 0.0
        %3237 = vmatprep.subr.mxu0 0.0
        %3238 = vmatpush1.xpose.msra.mxu0 0.0
        %3239 = vmatprep.subr.mxu0 0.0
        %3240 = vmatpush1.xpose.msra.mxu0 0.0
        %3241 = vmatprep.subr.mxu0 0.0
        %3242 = vmatpush1.xpose.msra.mxu0 0.0
        %3243 = vmatprep.subr.mxu0 0.0
        %3244 = vmatpush1.xpose.msra.mxu0 0.0
        %3245 = vmatprep.subr.mxu0 0.0
        %3246 = vmatpush1.xpose.msra.mxu0 0.0
        %3247 = vmatprep.subr.mxu0 0.0
        %3248 = vmatpush1.xpose.msra.mxu0 0.0
        %3249 = vmatprep.subr.mxu0 0.0
        %3250 = vmatpush1.xpose.msra.mxu0 0.0
        %3251 = vmatprep.subr.mxu0 0.0
        %3252 = vmatpush1.xpose.msra.mxu0 0.0
        %3253 = vmatprep.subr.mxu0 0.0
        %3254 = vmatpush1.xpose.msra.mxu0 0.0
        %3255 = vmatprep.subr.mxu0 0.0
        %3256 = vmatpush1.xpose.msra.mxu0 0.0
        %3257 = vmatprep.subr.mxu0 0.0
        %3258 = vmatpush1.xpose.msra.mxu0 0.0
        %3259 = vmatprep.subr.mxu0 0.0
        %3260 = vmatpush1.xpose.msra.mxu0 0.0
        %3261 = vmatprep.subr.mxu0 0.0
        %3262 = vmatpush1.xpose.msra.mxu0 0.0
        %3263 = vmatprep.subr.mxu0 0.0
        %3264 = vmatpush1.xpose.msra.mxu0 0.0
        %3265 = vmatprep.subr.mxu0 0.0
        %3266 = vmatpush1.xpose.msra.mxu0 0.0
        %3267 = vmatprep.subr.mxu0 0.0
        %3268 = vmatpush1.xpose.msra.mxu0 0.0
        %3269 = vmatprep.subr.mxu0 0.0
        %3270 = vmatpush1.xpose.msra.mxu0 0.0
        %3271 = vmatprep.subr.mxu0 0.0
        %3272 = vmatpush1.xpose.msra.mxu0 0.0
        %3273 = vmatprep.mubr.f32.mxu0 0.0
        %3274 = vmatmul.mubr.f32.gmra.mrb[0].mxu0 %v3197
        %v3275 = vpop.f32.mrb[0].mxu0
        %v3276 = vadd.f32 0.0, %v3275
        %v3277 = vpop.f32.mrb[0].mxu0
        %3278 = vmatprep.mubr.f32.mxu0 0.0
        %3279 = vmatmul.mubr.f32.gmra.mrb[0].mxu0 %v3199
        %v3280 = vpop.f32.mrb[0].mxu0
        %v3281 = vadd.f32 0.0, %v3280
        %v3282 = vpop.f32.mrb[0].mxu0
        %3283 = vmatprep.mubr.f32.mxu0 0.0
        %3284 = vmatmul.mubr.f32.gmra.mrb[0].mxu0 %v3201
        %v3285 = vpop.f32.mrb[0].mxu0
        %v3286 = vadd.f32 0.0, %v3285
        %v3287 = vpop.f32.mrb[0].mxu0
        %3288 = vdwg.mxu0
        %3289 = vrot.lane.b32.xlu0 %v2990, 96
        %v3290 = vpop.permute.xlu0 %3289
        %3291 = vrot.lane.b32.xlu0 %v2992, 96
        %v3292 = vpop.permute.xlu0 %3291
        %3293 = vrot.lane.b32.xlu0 %v2994, 96
        %v3294 = vpop.permute.xlu0 %3293
        %v3295 = vsel %vm1456, %v2990, 0
        %v3297 = vsel %vm1456, %v2992, 0
        %v3299 = vsel %vm1456, %v2994, 0
        %v3301 = vsel %vm1456, %v3290, 0
        %v3303 = vsel %vm1456, %v3292, 0
        %v3305 = vsel %vm1456, %v3294, 0
        %3307 = vmatprep.subr.mxu0 0.0
        %3308 = vmatpush1.xpose.msra.mxu0 %v3301
        %3309 = vmatprep.subr.mxu0 0.0
        %3310 = vmatpush1.xpose.msra.mxu0 %v3303
        %3311 = vmatprep.subr.mxu0 0.0
        %3312 = vmatpush1.xpose.msra.mxu0 %v3305
        %3313 = vmatprep.subr.mxu0 0.0
        %3314 = vmatpush1.xpose.msra.mxu0 0.0
        %3315 = vmatprep.subr.mxu0 0.0
        %3316 = vmatpush1.xpose.msra.mxu0 0.0
        %3317 = vmatprep.subr.mxu0 0.0
        %3318 = vmatpush1.xpose.msra.mxu0 0.0
        %3319 = vmatprep.subr.mxu0 0.0
        %3320 = vmatpush1.xpose.msra.mxu0 0.0
        %3321 = vmatprep.subr.mxu0 0.0
        %3322 = vmatpush1.xpose.msra.mxu0 0.0
        %3323 = vmatprep.subr.mxu0 0.0
        %3324 = vmatpush1.xpose.msra.mxu0 0.0
        %3325 = vmatprep.subr.mxu0 0.0
        %3326 = vmatpush1.xpose.msra.mxu0 0.0
        %3327 = vmatprep.subr.mxu0 0.0
        %3328 = vmatpush1.xpose.msra.mxu0 0.0
        %3329 = vmatprep.subr.mxu0 0.0
        %3330 = vmatpush1.xpose.msra.mxu0 0.0
        %3331 = vmatprep.subr.mxu0 0.0
        %3332 = vmatpush1.xpose.msra.mxu0 0.0
        %3333 = vmatprep.subr.mxu0 0.0
        %3334 = vmatpush1.xpose.msra.mxu0 0.0
        %3335 = vmatprep.subr.mxu0 0.0
        %3336 = vmatpush1.xpose.msra.mxu0 0.0
        %3337 = vmatprep.subr.mxu0 0.0
        %3338 = vmatpush1.xpose.msra.mxu0 0.0
        %3339 = vmatprep.subr.mxu0 0.0
        %3340 = vmatpush1.xpose.msra.mxu0 0.0
        %3341 = vmatprep.subr.mxu0 0.0
        %3342 = vmatpush1.xpose.msra.mxu0 0.0
        %3343 = vmatprep.subr.mxu0 0.0
        %3344 = vmatpush1.xpose.msra.mxu0 0.0
        %3345 = vmatprep.subr.mxu0 0.0
        %3346 = vmatpush1.xpose.msra.mxu0 0.0
        %3347 = vmatprep.subr.mxu0 0.0
        %3348 = vmatpush1.xpose.msra.mxu0 0.0
        %3349 = vmatprep.subr.mxu0 0.0
        %3350 = vmatpush1.xpose.msra.mxu0 0.0
        %3351 = vmatprep.subr.mxu0 0.0
        %3352 = vmatpush1.xpose.msra.mxu0 0.0
        %3353 = vmatprep.subr.mxu0 0.0
        %3354 = vmatpush1.xpose.msra.mxu0 0.0
        %3355 = vmatprep.subr.mxu0 0.0
        %3356 = vmatpush1.xpose.msra.mxu0 0.0
        %3357 = vmatprep.subr.mxu0 0.0
        %3358 = vmatpush1.xpose.msra.mxu0 0.0
        %3359 = vmatprep.subr.mxu0 0.0
        %3360 = vmatpush1.xpose.msra.mxu0 0.0
        %3361 = vmatprep.subr.mxu0 0.0
        %3362 = vmatpush1.xpose.msra.mxu0 0.0
        %3363 = vmatprep.subr.mxu0 0.0
        %3364 = vmatpush1.xpose.msra.mxu0 0.0
        %3365 = vmatprep.subr.mxu0 0.0
        %3366 = vmatpush1.xpose.msra.mxu0 0.0
        %3367 = vmatprep.subr.mxu0 0.0
        %3368 = vmatpush1.xpose.msra.mxu0 0.0
        %3369 = vmatprep.subr.mxu0 0.0
        %3370 = vmatpush1.xpose.msra.mxu0 0.0
        %3371 = vmatprep.mubr.f32.mxu0 0.0
        %3372 = vmatmul.mubr.f32.gmra.mrb[0].mxu0 %v3295
        %v3373 = vpop.f32.mrb[0].mxu0
        %v3374 = vadd.f32 0.0, %v3373
        %v3375 = vpop.f32.mrb[0].mxu0
        %3376 = vmatprep.mubr.f32.mxu0 0.0
        %3377 = vmatmul.mubr.f32.gmra.mrb[0].mxu0 %v3297
        %v3378 = vpop.f32.mrb[0].mxu0
        %v3379 = vadd.f32 0.0, %v3378
        %v3380 = vpop.f32.mrb[0].mxu0
        %3381 = vmatprep.mubr.f32.mxu0 0.0
        %3382 = vmatmul.mubr.f32.gmra.mrb[0].mxu0 %v3299
        %v3383 = vpop.f32.mrb[0].mxu0
        %v3384 = vadd.f32 0.0, %v3383
        %v3385 = vpop.f32.mrb[0].mxu0
        %3386 = vdwg.mxu0
        %v3387 = vmul.f32 %v3080, 0.35355338
        %v3388 = vmul.f32 %v3085, 0.35355338
        %v3389 = vmul.f32 %v3090, 0.35355338
        %v3390 = vmul.f32 %v3178, 0.35355338
        %v3391 = vmul.f32 %v3183, 0.35355338
        %v3392 = vmul.f32 %v3188, 0.35355338
        %v3393 = vmul.f32 %v3276, 0.35355338
        %v3394 = vmul.f32 %v3281, 0.35355338
        %v3395 = vmul.f32 %v3286, 0.35355338
        %v3396 = vmul.f32 %v3374, 0.35355338
        %v3397 = vmul.f32 %v3379, 0.35355338
        %v3398 = vmul.f32 %v3384, 0.35355338
        %v3399 = vsel %vm1856, %v3387, -1e+30
        %v3400 = vsel %vm1856, %v3388, -1e+30
        %v3401 = vsel %vm1856, %v3389, -1e+30
        %v3402 = vsel %vm1856, %v3390, -1e+30
        %v3403 = vsel %vm1856, %v3391, -1e+30
        %v3404 = vsel %vm1856, %v3392, -1e+30
        %v3405 = vsel %vm1856, %v3393, -1e+30
        %v3406 = vsel %vm1856, %v3394, -1e+30
        %v3407 = vsel %vm1856, %v3395, -1e+30
        %v3408 = vsel %vm1856, %v3396, -1e+30
        %v3409 = vsel %vm1856, %v3397, -1e+30
        %v3410 = vsel %vm1856, %v3398, -1e+30
        %v3411 = vsel %vm1869, %v3399, -inf
        %3412 = vmax.xlane.f32.xlu0 %v3411
        %v3413 = vpop.xlane.xlu0 %3412
        %v3414 = vsel %vm1869, %v3400, -inf
        %3415 = vmax.xlane.f32.xlu0 %v3414
        %v3416 = vpop.xlane.xlu0 %3415
        %v3417 = vsel %vm1869, %v3401, -inf
        %3418 = vmax.xlane.f32.xlu0 %v3417
        %v3419 = vpop.xlane.xlu0 %3418
        %v3420 = vsel %vm1869, %v3402, -inf
        %3421 = vmax.xlane.f32.xlu0 %v3420
        %v3422 = vpop.xlane.xlu0 %3421
        %v3423 = vsel %vm1869, %v3403, -inf
        %3424 = vmax.xlane.f32.xlu0 %v3423
        %v3425 = vpop.xlane.xlu0 %3424
        %v3426 = vsel %vm1869, %v3404, -inf
        %3427 = vmax.xlane.f32.xlu0 %v3426
        %v3428 = vpop.xlane.xlu0 %3427
        %v3429 = vsel %vm1869, %v3405, -inf
        %3430 = vmax.xlane.f32.xlu0 %v3429
        %v3431 = vpop.xlane.xlu0 %3430
        %v3432 = vsel %vm1869, %v3406, -inf
        %3433 = vmax.xlane.f32.xlu0 %v3432
        %v3434 = vpop.xlane.xlu0 %3433
        %v3435 = vsel %vm1869, %v3407, -inf
        %3436 = vmax.xlane.f32.xlu0 %v3435
        %v3437 = vpop.xlane.xlu0 %3436
        %v3438 = vsel %vm1869, %v3408, -inf
        %3439 = vmax.xlane.f32.xlu0 %v3438
        %v3440 = vpop.xlane.xlu0 %3439
        %v3441 = vsel %vm1869, %v3409, -inf
        %3442 = vmax.xlane.f32.xlu0 %v3441
        %v3443 = vpop.xlane.xlu0 %3442
        %v3444 = vsel %vm1869, %v3410, -inf
        %3445 = vmax.xlane.f32.xlu0 %v3444
        %v3446 = vpop.xlane.xlu0 %3445
        %v3447 = vsub.f32 %v3399, %v3413
        %v3448 = vsub.f32 %v3400, %v3416
        %v3449 = vsub.f32 %v3401, %v3419
        %v3450 = vsub.f32 %v3402, %v3422
        %v3451 = vsub.f32 %v3403, %v3425
        %v3452 = vsub.f32 %v3404, %v3428
        %v3453 = vsub.f32 %v3405, %v3431
        %v3454 = vsub.f32 %v3406, %v3434
        %v3455 = vsub.f32 %v3407, %v3437
        %v3456 = vsub.f32 %v3408, %v3440
        %v3457 = vsub.f32 %v3409, %v3443
        %v3458 = vsub.f32 %v3410, %v3446
        %v3459 = vmul.f32 %v3447, 1.442695
        %v3460 = vpow.pop %v3459
        %v3461 = vmul.f32 %v3448, 1.442695
        %v3462 = vpow.pop %v3461
        %v3463 = vmul.f32 %v3449, 1.442695
        %v3464 = vpow.pop %v3463
        %v3465 = vmul.f32 %v3450, 1.442695
        %v3466 = vpow.pop %v3465
        %v3467 = vmul.f32 %v3451, 1.442695
        %v3468 = vpow.pop %v3467
        %v3469 = vmul.f32 %v3452, 1.442695
        %v3470 = vpow.pop %v3469
        %v3471 = vmul.f32 %v3453, 1.442695
        %v3472 = vpow.pop %v3471
        %v3473 = vmul.f32 %v3454, 1.442695
        %v3474 = vpow.pop %v3473
        %v3475 = vmul.f32 %v3455, 1.442695
        %v3476 = vpow.pop %v3475
        %v3477 = vmul.f32 %v3456, 1.442695
        %v3478 = vpow.pop %v3477
        %v3479 = vmul.f32 %v3457, 1.442695
        %v3480 = vpow.pop %v3479
        %v3481 = vmul.f32 %v3458, 1.442695
        %v3482 = vpow.pop %v3481
        %v3483 = vsel %vm1869, %v3460, 0.0
        %3484 = vadd.xlane.f32.xlu0 %v3483
        %v3485 = vpop.xlane.xlu0 %3484
        %v3486 = vsel %vm1869, %v3462, 0.0
        %3487 = vadd.xlane.f32.xlu0 %v3486
        %v3488 = vpop.xlane.xlu0 %3487
        %v3489 = vsel %vm1869, %v3464, 0.0
        %3490 = vadd.xlane.f32.xlu0 %v3489
        %v3491 = vpop.xlane.xlu0 %3490
        %v3492 = vsel %vm1869, %v3466, 0.0
        %3493 = vadd.xlane.f32.xlu0 %v3492
        %v3494 = vpop.xlane.xlu0 %3493
        %v3495 = vsel %vm1869, %v3468, 0.0
        %3496 = vadd.xlane.f32.xlu0 %v3495
        %v3497 = vpop.xlane.xlu0 %3496
        %v3498 = vsel %vm1869, %v3470, 0.0
        %3499 = vadd.xlane.f32.xlu0 %v3498
        %v3500 = vpop.xlane.xlu0 %3499
        %v3501 = vsel %vm1869, %v3472, 0.0
        %3502 = vadd.xlane.f32.xlu0 %v3501
        %v3503 = vpop.xlane.xlu0 %3502
        %v3504 = vsel %vm1869, %v3474, 0.0
        %3505 = vadd.xlane.f32.xlu0 %v3504
        %v3506 = vpop.xlane.xlu0 %3505
        %v3507 = vsel %vm1869, %v3476, 0.0
        %3508 = vadd.xlane.f32.xlu0 %v3507
        %v3509 = vpop.xlane.xlu0 %3508
        %v3510 = vsel %vm1869, %v3478, 0.0
        %3511 = vadd.xlane.f32.xlu0 %v3510
        %v3512 = vpop.xlane.xlu0 %3511
        %v3513 = vsel %vm1869, %v3480, 0.0
        %3514 = vadd.xlane.f32.xlu0 %v3513
        %v3515 = vpop.xlane.xlu0 %3514
        %v3516 = vsel %vm1869, %v3482, 0.0
        %3517 = vadd.xlane.f32.xlu0 %v3516
        %v3518 = vpop.xlane.xlu0 %3517
        %v3519 = vrcp.pop %v3485
        %v3520 = vrcp.pop %v3488
        %v3521 = vrcp.pop %v3491
        %v3522 = vrcp.pop %v3494
        %v3523 = vrcp.pop %v3497
        %v3524 = vrcp.pop %v3500
        %v3525 = vrcp.pop %v3503
        %v3526 = vrcp.pop %v3506
        %v3527 = vrcp.pop %v3509
        %v3528 = vrcp.pop %v3512
        %v3529 = vrcp.pop %v3515
        %v3530 = vrcp.pop %v3518
        %v3531 = vmul.f32 %v3460, %v3519
        %v3532 = vmul.f32 %v3462, %v3520
        %v3533 = vmul.f32 %v3464, %v3521
        %v3534 = vmul.f32 %v3466, %v3522
        %v3535 = vmul.f32 %v3468, %v3523
        %v3536 = vmul.f32 %v3470, %v3524
        %v3537 = vmul.f32 %v3472, %v3525
        %v3538 = vmul.f32 %v3474, %v3526
        %v3539 = vmul.f32 %v3476, %v3527
        %v3540 = vmul.f32 %v3478, %v3528
        %v3541 = vmul.f32 %v3480, %v3529
        %v3542 = vmul.f32 %v3482, %v3530
        %3543 = vrot.lane.b32.xlu0 %v2961, 64
        %v3544 = vpop.permute.xlu0 %3543
        %3545 = vrot.lane.b32.xlu0 %v2966, 64
        %v3546 = vpop.permute.xlu0 %3545
        %3547 = vrot.lane.b32.xlu0 %v2971, 64
        %v3548 = vpop.permute.xlu0 %3547
        %v3553 = vsel %vm1869, %v3531, 0
        %v3556 = vsel %vm1869, %v3532, 0
        %v3559 = vsel %vm1869, %v3533, 0
        %3561 = vmatprep.subr.mxu0 0.0
        %3562 = vmatpush1.msra.mxu0 %v3544
        %3563 = vmatprep.subr.mxu0 0.0
        %3564 = vmatpush1.msra.mxu0 %v3546
        %3565 = vmatprep.subr.mxu0 0.0
        %3566 = vmatpush1.msra.mxu0 %v3548
        %3567 = vmatprep.subr.mxu0 0.0
        %3568 = vmatpush1.msra.mxu0 0.0
        %3569 = vmatprep.subr.mxu0 0.0
        %3570 = vmatpush1.msra.mxu0 0.0
        %3571 = vmatprep.subr.mxu0 0.0
        %3572 = vmatpush1.msra.mxu0 0.0
        %3573 = vmatprep.subr.mxu0 0.0
        %3574 = vmatpush1.msra.mxu0 0.0
        %3575 = vmatprep.subr.mxu0 0.0
        %3576 = vmatpush1.msra.mxu0 0.0
        %3577 = vmatprep.subr.mxu0 0.0
        %3578 = vmatpush1.msra.mxu0 0.0
        %3579 = vmatprep.subr.mxu0 0.0
        %3580 = vmatpush1.msra.mxu0 0.0
        %3581 = vmatprep.subr.mxu0 0.0
        %3582 = vmatpush1.msra.mxu0 0.0
        %3583 = vmatprep.subr.mxu0 0.0
        %3584 = vmatpush1.msra.mxu0 0.0
        %3585 = vmatprep.subr.mxu0 0.0
        %3586 = vmatpush1.msra.mxu0 0.0
        %3587 = vmatprep.subr.mxu0 0.0
        %3588 = vmatpush1.msra.mxu0 0.0
        %3589 = vmatprep.subr.mxu0 0.0
        %3590 = vmatpush1.msra.mxu0 0.0
        %3591 = vmatprep.subr.mxu0 0.0
        %3592 = vmatpush1.msra.mxu0 0.0
        %3593 = vmatprep.subr.mxu0 0.0
        %3594 = vmatpush1.msra.mxu0 0.0
        %3595 = vmatprep.subr.mxu0 0.0
        %3596 = vmatpush1.msra.mxu0 0.0
        %3597 = vmatprep.subr.mxu0 0.0
        %3598 = vmatpush1.msra.mxu0 0.0
        %3599 = vmatprep.subr.mxu0 0.0
        %3600 = vmatpush1.msra.mxu0 0.0
        %3601 = vmatprep.subr.mxu0 0.0
        %3602 = vmatpush1.msra.mxu0 0.0
        %3603 = vmatprep.subr.mxu0 0.0
        %3604 = vmatpush1.msra.mxu0 0.0
        %3605 = vmatprep.subr.mxu0 0.0
        %3606 = vmatpush1.msra.mxu0 0.0
        %3607 = vmatprep.subr.mxu0 0.0
        %3608 = vmatpush1.msra.mxu0 0.0
        %3609 = vmatprep.subr.mxu0 0.0
        %3610 = vmatpush1.msra.mxu0 0.0
        %3611 = vmatprep.subr.mxu0 0.0
        %3612 = vmatpush1.msra.mxu0 0.0
        %3613 = vmatprep.subr.mxu0 0.0
        %3614 = vmatpush1.msra.mxu0 0.0
        %3615 = vmatprep.subr.mxu0 0.0
        %3616 = vmatpush1.msra.mxu0 0.0
        %3617 = vmatprep.subr.mxu0 0.0
        %3618 = vmatpush1.msra.mxu0 0.0
        %3619 = vmatprep.subr.mxu0 0.0
        %3620 = vmatpush1.msra.mxu0 0.0
        %3621 = vmatprep.subr.mxu0 0.0
        %3622 = vmatpush1.msra.mxu0 0.0
        %3623 = vmatprep.subr.mxu0 0.0
        %3624 = vmatpush1.msra.mxu0 0.0
        %3625 = vmatprep.mubr.f32.mxu0 0.0
        %3626 = vmatmul.mubr.f32.gmra.mrb[0].mxu0 %v3553
        %v3627 = vpop.f32.mrb[0].mxu0
        %v3628 = vadd.f32 0.0, %v3627
        %v3629 = vpop.f32.mrb[0].mxu0
        %3630 = vmatprep.mubr.f32.mxu0 0.0
        %3631 = vmatmul.mubr.f32.gmra.mrb[0].mxu0 %v3556
        %v3632 = vpop.f32.mrb[0].mxu0
        %v3633 = vadd.f32 0.0, %v3632
        %v3634 = vpop.f32.mrb[0].mxu0
        %3635 = vmatprep.mubr.f32.mxu0 0.0
        %3636 = vmatmul.mubr.f32.gmra.mrb[0].mxu0 %v3559
        %v3637 = vpop.f32.mrb[0].mxu0
        %v3638 = vadd.f32 0.0, %v3637
        %v3639 = vpop.f32.mrb[0].mxu0
        %3640 = vdwg.mxu0
        %3641 = vrot.lane.b32.xlu0 %v2978, 64
        %v3642 = vpop.permute.xlu0 %3641
        %3643 = vrot.lane.b32.xlu0 %v2980, 64
        %v3644 = vpop.permute.xlu0 %3643
        %3645 = vrot.lane.b32.xlu0 %v2982, 64
        %v3646 = vpop.permute.xlu0 %3645
        %v3651 = vsel %vm1869, %v3534, 0
        %v3654 = vsel %vm1869, %v3535, 0
        %v3657 = vsel %vm1869, %v3536, 0
        %3659 = vmatprep.subr.mxu0 0.0
        %3660 = vmatpush1.msra.mxu0 %v3642
        %3661 = vmatprep.subr.mxu0 0.0
        %3662 = vmatpush1.msra.mxu0 %v3644
        %3663 = vmatprep.subr.mxu0 0.0
        %3664 = vmatpush1.msra.mxu0 %v3646
        %3665 = vmatprep.subr.mxu0 0.0
        %3666 = vmatpush1.msra.mxu0 0.0
        %3667 = vmatprep.subr.mxu0 0.0
        %3668 = vmatpush1.msra.mxu0 0.0
        %3669 = vmatprep.subr.mxu0 0.0
        %3670 = vmatpush1.msra.mxu0 0.0
        %3671 = vmatprep.subr.mxu0 0.0
        %3672 = vmatpush1.msra.mxu0 0.0
        %3673 = vmatprep.subr.mxu0 0.0
        %3674 = vmatpush1.msra.mxu0 0.0
        %3675 = vmatprep.subr.mxu0 0.0
        %3676 = vmatpush1.msra.mxu0 0.0
        %3677 = vmatprep.subr.mxu0 0.0
        %3678 = vmatpush1.msra.mxu0 0.0
        %3679 = vmatprep.subr.mxu0 0.0
        %3680 = vmatpush1.msra.mxu0 0.0
        %3681 = vmatprep.subr.mxu0 0.0
        %3682 = vmatpush1.msra.mxu0 0.0
        %3683 = vmatprep.subr.mxu0 0.0
        %3684 = vmatpush1.msra.mxu0 0.0
        %3685 = vmatprep.subr.mxu0 0.0
        %3686 = vmatpush1.msra.mxu0 0.0
        %3687 = vmatprep.subr.mxu0 0.0
        %3688 = vmatpush1.msra.mxu0 0.0
        %3689 = vmatprep.subr.mxu0 0.0
        %3690 = vmatpush1.msra.mxu0 0.0
        %3691 = vmatprep.subr.mxu0 0.0
        %3692 = vmatpush1.msra.mxu0 0.0
        %3693 = vmatprep.subr.mxu0 0.0
        %3694 = vmatpush1.msra.mxu0 0.0
        %3695 = vmatprep.subr.mxu0 0.0
        %3696 = vmatpush1.msra.mxu0 0.0
        %3697 = vmatprep.subr.mxu0 0.0
        %3698 = vmatpush1.msra.mxu0 0.0
        %3699 = vmatprep.subr.mxu0 0.0
        %3700 = vmatpush1.msra.mxu0 0.0
        %3701 = vmatprep.subr.mxu0 0.0
        %3702 = vmatpush1.msra.mxu0 0.0
        %3703 = vmatprep.subr.mxu0 0.0
        %3704 = vmatpush1.msra.mxu0 0.0
        %3705 = vmatprep.subr.mxu0 0.0
        %3706 = vmatpush1.msra.mxu0 0.0
        %3707 = vmatprep.subr.mxu0 0.0
        %3708 = vmatpush1.msra.mxu0 0.0
        %3709 = vmatprep.subr.mxu0 0.0
        %3710 = vmatpush1.msra.mxu0 0.0
        %3711 = vmatprep.subr.mxu0 0.0
        %3712 = vmatpush1.msra.mxu0 0.0
        %3713 = vmatprep.subr.mxu0 0.0
        %3714 = vmatpush1.msra.mxu0 0.0
        %3715 = vmatprep.subr.mxu0 0.0
        %3716 = vmatpush1.msra.mxu0 0.0
        %3717 = vmatprep.subr.mxu0 0.0
        %3718 = vmatpush1.msra.mxu0 0.0
        %3719 = vmatprep.subr.mxu0 0.0
        %3720 = vmatpush1.msra.mxu0 0.0
        %3721 = vmatprep.subr.mxu0 0.0
        %3722 = vmatpush1.msra.mxu0 0.0
        %3723 = vmatprep.mubr.f32.mxu0 0.0
        %3724 = vmatmul.mubr.f32.gmra.mrb[0].mxu0 %v3651
        %v3725 = vpop.f32.mrb[0].mxu0
        %v3726 = vadd.f32 0.0, %v3725
        %v3727 = vpop.f32.mrb[0].mxu0
        %3728 = vmatprep.mubr.f32.mxu0 0.0
        %3729 = vmatmul.mubr.f32.gmra.mrb[0].mxu0 %v3654
        %v3730 = vpop.f32.mrb[0].mxu0
        %v3731 = vadd.f32 0.0, %v3730
        %v3732 = vpop.f32.mrb[0].mxu0
        %3733 = vmatprep.mubr.f32.mxu0 0.0
        %3734 = vmatmul.mubr.f32.gmra.mrb[0].mxu0 %v3657
        %v3735 = vpop.f32.mrb[0].mxu0
        %v3736 = vadd.f32 0.0, %v3735
        %v3737 = vpop.f32.mrb[0].mxu0
        %3738 = vdwg.mxu0
        %3739 = vrot.lane.b32.xlu0 %v2984, 64
        %v3740 = vpop.permute.xlu0 %3739
        %3741 = vrot.lane.b32.xlu0 %v2986, 64
        %v3742 = vpop.permute.xlu0 %3741
        %3743 = vrot.lane.b32.xlu0 %v2988, 64
        %v3744 = vpop.permute.xlu0 %3743
        %v3749 = vsel %vm1869, %v3537, 0
        %v3752 = vsel %vm1869, %v3538, 0
        %v3755 = vsel %vm1869, %v3539, 0
        %3757 = vmatprep.subr.mxu0 0.0
        %3758 = vmatpush1.msra.mxu0 %v3740
        %3759 = vmatprep.subr.mxu0 0.0
        %3760 = vmatpush1.msra.mxu0 %v3742
        %3761 = vmatprep.subr.mxu0 0.0
        %3762 = vmatpush1.msra.mxu0 %v3744
        %3763 = vmatprep.subr.mxu0 0.0
        %3764 = vmatpush1.msra.mxu0 0.0
        %3765 = vmatprep.subr.mxu0 0.0
        %3766 = vmatpush1.msra.mxu0 0.0
        %3767 = vmatprep.subr.mxu0 0.0
        %3768 = vmatpush1.msra.mxu0 0.0
        %3769 = vmatprep.subr.mxu0 0.0
        %3770 = vmatpush1.msra.mxu0 0.0
        %3771 = vmatprep.subr.mxu0 0.0
        %3772 = vmatpush1.msra.mxu0 0.0
        %3773 = vmatprep.subr.mxu0 0.0
        %3774 = vmatpush1.msra.mxu0 0.0
        %3775 = vmatprep.subr.mxu0 0.0
        %3776 = vmatpush1.msra.mxu0 0.0
        %3777 = vmatprep.subr.mxu0 0.0
        %3778 = vmatpush1.msra.mxu0 0.0
        %3779 = vmatprep.subr.mxu0 0.0
        %3780 = vmatpush1.msra.mxu0 0.0
        %3781 = vmatprep.subr.mxu0 0.0
        %3782 = vmatpush1.msra.mxu0 0.0
        %3783 = vmatprep.subr.mxu0 0.0
        %3784 = vmatpush1.msra.mxu0 0.0
        %3785 = vmatprep.subr.mxu0 0.0
        %3786 = vmatpush1.msra.mxu0 0.0
        %3787 = vmatprep.subr.mxu0 0.0
        %3788 = vmatpush1.msra.mxu0 0.0
        %3789 = vmatprep.subr.mxu0 0.0
        %3790 = vmatpush1.msra.mxu0 0.0
        %3791 = vmatprep.subr.mxu0 0.0
        %3792 = vmatpush1.msra.mxu0 0.0
        %3793 = vmatprep.subr.mxu0 0.0
        %3794 = vmatpush1.msra.mxu0 0.0
        %3795 = vmatprep.subr.mxu0 0.0
        %3796 = vmatpush1.msra.mxu0 0.0
        %3797 = vmatprep.subr.mxu0 0.0
        %3798 = vmatpush1.msra.mxu0 0.0
        %3799 = vmatprep.subr.mxu0 0.0
        %3800 = vmatpush1.msra.mxu0 0.0
        %3801 = vmatprep.subr.mxu0 0.0
        %3802 = vmatpush1.msra.mxu0 0.0
        %3803 = vmatprep.subr.mxu0 0.0
        %3804 = vmatpush1.msra.mxu0 0.0
        %3805 = vmatprep.subr.mxu0 0.0
        %3806 = vmatpush1.msra.mxu0 0.0
        %3807 = vmatprep.subr.mxu0 0.0
        %3808 = vmatpush1.msra.mxu0 0.0
        %3809 = vmatprep.subr.mxu0 0.0
        %3810 = vmatpush1.msra.mxu0 0.0
        %3811 = vmatprep.subr.mxu0 0.0
        %3812 = vmatpush1.msra.mxu0 0.0
        %3813 = vmatprep.subr.mxu0 0.0
        %3814 = vmatpush1.msra.mxu0 0.0
        %3815 = vmatprep.subr.mxu0 0.0
        %3816 = vmatpush1.msra.mxu0 0.0
        %3817 = vmatprep.subr.mxu0 0.0
        %3818 = vmatpush1.msra.mxu0 0.0
        %3819 = vmatprep.subr.mxu0 0.0
        %3820 = vmatpush1.msra.mxu0 0.0
        %3821 = vmatprep.mubr.f32.mxu0 0.0
        %3822 = vmatmul.mubr.f32.gmra.mrb[0].mxu0 %v3749
        %v3823 = vpop.f32.mrb[0].mxu0
        %v3824 = vadd.f32 0.0, %v3823
        %v3825 = vpop.f32.mrb[0].mxu0
        %3826 = vmatprep.mubr.f32.mxu0 0.0
        %3827 = vmatmul.mubr.f32.gmra.mrb[0].mxu0 %v3752
        %v3828 = vpop.f32.mrb[0].mxu0
        %v3829 = vadd.f32 0.0, %v3828
        %v3830 = vpop.f32.mrb[0].mxu0
        %3831 = vmatprep.mubr.f32.mxu0 0.0
        %3832 = vmatmul.mubr.f32.gmra.mrb[0].mxu0 %v3755
        %v3833 = vpop.f32.mrb[0].mxu0
        %v3834 = vadd.f32 0.0, %v3833
        %v3835 = vpop.f32.mrb[0].mxu0
        %3836 = vdwg.mxu0
        %3837 = vrot.lane.b32.xlu0 %v2990, 64
        %v3838 = vpop.permute.xlu0 %3837
        %3839 = vrot.lane.b32.xlu0 %v2992, 64
        %v3840 = vpop.permute.xlu0 %3839
        %3841 = vrot.lane.b32.xlu0 %v2994, 64
        %v3842 = vpop.permute.xlu0 %3841
        %v3847 = vsel %vm1869, %v3540, 0
        %v3850 = vsel %vm1869, %v3541, 0
        %v3853 = vsel %vm1869, %v3542, 0
        %3855 = vmatprep.subr.mxu0 0.0
        %3856 = vmatpush1.msra.mxu0 %v3838
        %3857 = vmatprep.subr.mxu0 0.0
        %3858 = vmatpush1.msra.mxu0 %v3840
        %3859 = vmatprep.subr.mxu0 0.0
        %3860 = vmatpush1.msra.mxu0 %v3842
        %3861 = vmatprep.subr.mxu0 0.0
        %3862 = vmatpush1.msra.mxu0 0.0
        %3863 = vmatprep.subr.mxu0 0.0
        %3864 = vmatpush1.msra.mxu0 0.0
        %3865 = vmatprep.subr.mxu0 0.0
        %3866 = vmatpush1.msra.mxu0 0.0
        %3867 = vmatprep.subr.mxu0 0.0
        %3868 = vmatpush1.msra.mxu0 0.0
        %3869 = vmatprep.subr.mxu0 0.0
        %3870 = vmatpush1.msra.mxu0 0.0
        %3871 = vmatprep.subr.mxu0 0.0
        %3872 = vmatpush1.msra.mxu0 0.0
        %3873 = vmatprep.subr.mxu0 0.0
        %3874 = vmatpush1.msra.mxu0 0.0
        %3875 = vmatprep.subr.mxu0 0.0
        %3876 = vmatpush1.msra.mxu0 0.0
        %3877 = vmatprep.subr.mxu0 0.0
        %3878 = vmatpush1.msra.mxu0 0.0
        %3879 = vmatprep.subr.mxu0 0.0
        %3880 = vmatpush1.msra.mxu0 0.0
        %3881 = vmatprep.subr.mxu0 0.0
        %3882 = vmatpush1.msra.mxu0 0.0
        %3883 = vmatprep.subr.mxu0 0.0
        %3884 = vmatpush1.msra.mxu0 0.0
        %3885 = vmatprep.subr.mxu0 0.0
        %3886 = vmatpush1.msra.mxu0 0.0
        %3887 = vmatprep.subr.mxu0 0.0
        %3888 = vmatpush1.msra.mxu0 0.0
        %3889 = vmatprep.subr.mxu0 0.0
        %3890 = vmatpush1.msra.mxu0 0.0
        %3891 = vmatprep.subr.mxu0 0.0
        %3892 = vmatpush1.msra.mxu0 0.0
        %3893 = vmatprep.subr.mxu0 0.0
        %3894 = vmatpush1.msra.mxu0 0.0
        %3895 = vmatprep.subr.mxu0 0.0
        %3896 = vmatpush1.msra.mxu0 0.0
        %3897 = vmatprep.subr.mxu0 0.0
        %3898 = vmatpush1.msra.mxu0 0.0
        %3899 = vmatprep.subr.mxu0 0.0
        %3900 = vmatpush1.msra.mxu0 0.0
        %3901 = vmatprep.subr.mxu0 0.0
        %3902 = vmatpush1.msra.mxu0 0.0
        %3903 = vmatprep.subr.mxu0 0.0
        %3904 = vmatpush1.msra.mxu0 0.0
        %3905 = vmatprep.subr.mxu0 0.0
        %3906 = vmatpush1.msra.mxu0 0.0
        %3907 = vmatprep.subr.mxu0 0.0
        %3908 = vmatpush1.msra.mxu0 0.0
        %3909 = vmatprep.subr.mxu0 0.0
        %3910 = vmatpush1.msra.mxu0 0.0
        %3911 = vmatprep.subr.mxu0 0.0
        %3912 = vmatpush1.msra.mxu0 0.0
        %3913 = vmatprep.subr.mxu0 0.0
        %3914 = vmatpush1.msra.mxu0 0.0
        %3915 = vmatprep.subr.mxu0 0.0
        %3916 = vmatpush1.msra.mxu0 0.0
        %3917 = vmatprep.subr.mxu0 0.0
        %3918 = vmatpush1.msra.mxu0 0.0
        %3919 = vmatprep.mubr.f32.mxu0 0.0
        %3920 = vmatmul.mubr.f32.gmra.mrb[0].mxu0 %v3847
        %v3921 = vpop.f32.mrb[0].mxu0
        %v3922 = vadd.f32 0.0, %v3921
        %v3923 = vpop.f32.mrb[0].mxu0
        %3924 = vmatprep.mubr.f32.mxu0 0.0
        %3925 = vmatmul.mubr.f32.gmra.mrb[0].mxu0 %v3850
        %v3926 = vpop.f32.mrb[0].mxu0
        %v3927 = vadd.f32 0.0, %v3926
        %v3928 = vpop.f32.mrb[0].mxu0
        %3929 = vmatprep.mubr.f32.mxu0 0.0
        %3930 = vmatmul.mubr.f32.gmra.mrb[0].mxu0 %v3853
        %v3931 = vpop.f32.mrb[0].mxu0
        %v3932 = vadd.f32 0.0, %v3931
        %v3933 = vpop.f32.mrb[0].mxu0
        %3934 = vdwg.mxu0
        %3938 = vrot.lane.b32.xlu0 %v3726, 8
        %v3939 = vpop.permute.xlu0 %3938
        %3940 = vrot.lane.b32.xlu0 %v3731, 8
        %v3941 = vpop.permute.xlu0 %3940
        %3942 = vrot.lane.b32.xlu0 %v3736, 8
        %v3943 = vpop.permute.xlu0 %3942
        %3950 = vrot.lane.b32.xlu0 %v3824, 16
        %v3951 = vpop.permute.xlu0 %3950
        %3952 = vrot.lane.b32.xlu0 %v3829, 16
        %v3953 = vpop.permute.xlu0 %3952
        %3954 = vrot.lane.b32.xlu0 %v3834, 16
        %v3955 = vpop.permute.xlu0 %3954
        %3962 = vrot.lane.b32.xlu0 %v3922, 24
        %v3963 = vpop.permute.xlu0 %3962
        %3964 = vrot.lane.b32.xlu0 %v3927, 24
        %v3965 = vpop.permute.xlu0 %3964
        %3966 = vrot.lane.b32.xlu0 %v3932, 24
        %v3967 = vpop.permute.xlu0 %3966
        %v3971 = vsel %vm1456, %v3628, %v3939
        %v3972 = vsel %vm1456, %v3633, %v3941
        %v3973 = vsel %vm1456, %v3638, %v3943
        %v3974 = vsel %vm2433, %v3971, %v3951
        %v3975 = vsel %vm2433, %v3972, %v3953
        %v3976 = vsel %vm2433, %v3973, %v3955
        %v3977 = vsel %vm1869, %v3974, %v3963
        %v3978 = vsel %vm1869, %v3975, %v3965
        %v3979 = vsel %vm1869, %v3976, %v3967
        %v3980 = vld [vmem:[%s47] sm:$0xff]
        %v3981 = vld [vmem:[%s47 + $0x8] sm:$0xff]
        %v3982 = vld [vmem:[%s47 + $0x10] sm:$0xff]
        %v3983 = vld [vmem:[%s47 + $0x18] sm:$0xff]
        %v3984 = vld [vmem:[%s49] sm:$0x1]
        %v3986 = vlaneseq
        %v3987 = vshrl.u32 %v3986, 7
        %v3988 = vsub.s32 0, %v3987
        %v3989 = vrot.slane %v3984, %v3988
        %v3992 = vsel %vm1212, %v3977, 0
        %v3995 = vsel %vm1212, %v3978, 0
        %v3998 = vsel %vm1212, %v3979, 0
        %4000 = vmatprep.subr.mxu0 0.0
        %4001 = vmatpush1.msra.mxu0 %v3980
        %4002 = vmatprep.subr.mxu0 0.0
        %4003 = vmatpush1.msra.mxu0 %v3981
        %4004 = vmatprep.subr.mxu0 0.0
        %4005 = vmatpush1.msra.mxu0 %v3982
        %4006 = vmatprep.subr.mxu0 0.0
        %4007 = vmatpush1.msra.mxu0 %v3983
        %4008 = vmatprep.subr.mxu0 0.0
        %4009 = vmatpush1.msra.mxu0 0.0
        %4010 = vmatprep.subr.mxu0 0.0
        %4011 = vmatpush1.msra.mxu0 0.0
        %4012 = vmatprep.subr.mxu0 0.0
        %4013 = vmatpush1.msra.mxu0 0.0
        %4014 = vmatprep.subr.mxu0 0.0
        %4015 = vmatpush1.msra.mxu0 0.0
        %4016 = vmatprep.subr.mxu0 0.0
        %4017 = vmatpush1.msra.mxu0 0.0
        %4018 = vmatprep.subr.mxu0 0.0
        %4019 = vmatpush1.msra.mxu0 0.0
        %4020 = vmatprep.subr.mxu0 0.0
        %4021 = vmatpush1.msra.mxu0 0.0
        %4022 = vmatprep.subr.mxu0 0.0
        %4023 = vmatpush1.msra.mxu0 0.0
        %4024 = vmatprep.subr.mxu0 0.0
        %4025 = vmatpush1.msra.mxu0 0.0
        %4026 = vmatprep.subr.mxu0 0.0
        %4027 = vmatpush1.msra.mxu0 0.0
        %4028 = vmatprep.subr.mxu0 0.0
        %4029 = vmatpush1.msra.mxu0 0.0
        %4030 = vmatprep.subr.mxu0 0.0
        %4031 = vmatpush1.msra.mxu0 0.0
        %4032 = vmatprep.subr.mxu0 0.0
        %4033 = vmatpush1.msra.mxu0 0.0
        %4034 = vmatprep.subr.mxu0 0.0
        %4035 = vmatpush1.msra.mxu0 0.0
        %4036 = vmatprep.subr.mxu0 0.0
        %4037 = vmatpush1.msra.mxu0 0.0
        %4038 = vmatprep.subr.mxu0 0.0
        %4039 = vmatpush1.msra.mxu0 0.0
        %4040 = vmatprep.subr.mxu0 0.0
        %4041 = vmatpush1.msra.mxu0 0.0
        %4042 = vmatprep.subr.mxu0 0.0
        %4043 = vmatpush1.msra.mxu0 0.0
        %4044 = vmatprep.subr.mxu0 0.0
        %4045 = vmatpush1.msra.mxu0 0.0
        %4046 = vmatprep.subr.mxu0 0.0
        %4047 = vmatpush1.msra.mxu0 0.0
        %4048 = vmatprep.subr.mxu0 0.0
        %4049 = vmatpush1.msra.mxu0 0.0
        %4050 = vmatprep.subr.mxu0 0.0
        %4051 = vmatpush1.msra.mxu0 0.0
        %4052 = vmatprep.subr.mxu0 0.0
        %4053 = vmatpush1.msra.mxu0 0.0
        %4054 = vmatprep.subr.mxu0 0.0
        %4055 = vmatpush1.msra.mxu0 0.0
        %4056 = vmatprep.subr.mxu0 0.0
        %4057 = vmatpush1.msra.mxu0 0.0
        %4058 = vmatprep.subr.mxu0 0.0
        %4059 = vmatpush1.msra.mxu0 0.0
        %4060 = vmatprep.subr.mxu0 0.0
        %4061 = vmatpush1.msra.mxu0 0.0
        %4062 = vmatprep.subr.mxu0 0.0
        %4063 = vmatpush1.msra.mxu0 0.0
        %4064 = vmatprep.mubr.f32.mxu0 0.0
        %4065 = vmatmul.mubr.f32.gmra.mrb[0].mxu0 %v3992
        %v4066 = vpop.f32.mrb[0].mxu0
        %v4067 = vadd.f32 %v3989, %v4066
        %v4068 = vpop.f32.mrb[0].mxu0
        %4069 = vmatprep.mubr.f32.mxu0 0.0
        %4070 = vmatmul.mubr.f32.gmra.mrb[0].mxu0 %v3995
        %v4071 = vpop.f32.mrb[0].mxu0
        %v4072 = vadd.f32 %v3989, %v4071
        %v4073 = vpop.f32.mrb[0].mxu0
        %4074 = vmatprep.mubr.f32.mxu0 0.0
        %4075 = vmatmul.mubr.f32.gmra.mrb[0].mxu0 %v3998
        %v4076 = vpop.f32.mrb[0].mxu0
        %v4077 = vadd.f32 %v3989, %v4076
        %v4078 = vpop.f32.mrb[0].mxu0
        %4079 = vdwg.mxu0
        %v4080 = vld [vmem:[%s51] sm:$0x1]
        %v4081 = vld [vmem:[%s53] sm:$0x1]
        %v4082 = vsel %vm1212, %v4067, 0.0
        %4083 = vadd.xlane.f32.xlu0 %v4082
        %v4084 = vpop.xlane.xlu0 %4083
        %v4085 = vsel %vm1212, %v4072, 0.0
        %4086 = vadd.xlane.f32.xlu0 %v4085
        %v4087 = vpop.xlane.xlu0 %4086
        %v4088 = vsel %vm1212, %v4077, 0.0
        %4089 = vadd.xlane.f32.xlu0 %v4088
        %v4090 = vpop.xlane.xlu0 %4089
        %v4091 = vmul.f32 %v4084, %v1219
        %v4092 = vmul.f32 %v4087, %v1219
        %v4093 = vmul.f32 %v4090, %v1219
        %v4094 = vsub.f32 %v4067, %v4091
        %v4095 = vsub.f32 %v4072, %v4092
        %v4096 = vsub.f32 %v4077, %v4093
        %v4097 = vmul.f32 %v4094, %v4094
        %v4098 = vmul.f32 %v4095, %v4095
        %v4099 = vmul.f32 %v4096, %v4096
        %v4100 = vsel %vm1212, %v4097, 0.0
        %4101 = vadd.xlane.f32.xlu0 %v4100
        %v4102 = vpop.xlane.xlu0 %4101
        %v4103 = vsel %vm1212, %v4098, 0.0
        %4104 = vadd.xlane.f32.xlu0 %v4103
        %v4105 = vpop.xlane.xlu0 %4104
        %v4106 = vsel %vm1212, %v4099, 0.0
        %4107 = vadd.xlane.f32.xlu0 %v4106
        %v4108 = vpop.xlane.xlu0 %4107
        %v4109 = vmul.f32 %v4102, %v1219
        %v4110 = vmul.f32 %v4105, %v1219
        %v4111 = vmul.f32 %v4108, %v1219
        %v4112 = vadd.f32 %v4109, 64.0
        %v4113 = vadd.f32 %v4110, 64.0
        %v4114 = vadd.f32 %v4111, 64.0
        %v4115 = vrsqrt.pop %v4112
        %v4116 = vrsqrt.pop %v4113
        %v4117 = vrsqrt.pop %v4114
        %v4118 = vmul.f32 %v4094, %v4115
        %v4119 = vmul.f32 %v4095, %v4116
        %v4120 = vmul.f32 %v4096, %v4117
        %v4122 = vlaneseq
        %v4123 = vshrl.u32 %v4122, 7
        %v4124 = vsub.s32 0, %v4123
        %v4125 = vrot.slane %v4080, %v4124
        %v4127 = vmul.f32 %v4118, %v4125
        %v4128 = vmul.f32 %v4119, %v4125
        %v4129 = vmul.f32 %v4120, %v4125
        %v4131 = vlaneseq
        %v4132 = vshrl.u32 %v4131, 7
        %v4133 = vsub.s32 0, %v4132
        %v4134 = vrot.slane %v4081, %v4133
        %v4136 = vadd.f32 %v4127, %v4134
        %v4137 = vadd.f32 %v4128, %v4134
        %v4138 = vadd.f32 %v4129, %v4134
        %v4139 = vld [vmem:[%s55] sm:$0xff]
        %v4140 = vld [vmem:[%s55 + $0x8] sm:$0xff]
        %v4141 = vld [vmem:[%s55 + $0x10] sm:$0xff]
        %v4142 = vld [vmem:[%s55 + $0x18] sm:$0xff]
        %v4143 = vld [vmem:[%s57] sm:$0x1]
        %v4145 = vlaneseq
        %v4146 = vshrl.u32 %v4145, 7
        %v4147 = vsub.s32 0, %v4146
        %v4148 = vrot.slane %v4143, %v4147
        %v4151 = vsel %vm1212, %v4136, 0
        %v4154 = vsel %vm1212, %v4137, 0
        %v4157 = vsel %vm1212, %v4138, 0
        %4159 = vmatprep.subr.mxu0 0.0
        %4160 = vmatpush1.msra.mxu0 %v4139
        %4161 = vmatprep.subr.mxu0 0.0
        %4162 = vmatpush1.msra.mxu0 %v4140
        %4163 = vmatprep.subr.mxu0 0.0
        %4164 = vmatpush1.msra.mxu0 %v4141
        %4165 = vmatprep.subr.mxu0 0.0
        %4166 = vmatpush1.msra.mxu0 %v4142
        %4167 = vmatprep.subr.mxu0 0.0
        %4168 = vmatpush1.msra.mxu0 0.0
        %4169 = vmatprep.subr.mxu0 0.0
        %4170 = vmatpush1.msra.mxu0 0.0
        %4171 = vmatprep.subr.mxu0 0.0
        %4172 = vmatpush1.msra.mxu0 0.0
        %4173 = vmatprep.subr.mxu0 0.0
        %4174 = vmatpush1.msra.mxu0 0.0
        %4175 = vmatprep.subr.mxu0 0.0
        %4176 = vmatpush1.msra.mxu0 0.0
        %4177 = vmatprep.subr.mxu0 0.0
        %4178 = vmatpush1.msra.mxu0 0.0
        %4179 = vmatprep.subr.mxu0 0.0
        %4180 = vmatpush1.msra.mxu0 0.0
        %4181 = vmatprep.subr.mxu0 0.0
        %4182 = vmatpush1.msra.mxu0 0.0
        %4183 = vmatprep.subr.mxu0 0.0
        %4184 = vmatpush1.msra.mxu0 0.0
        %4185 = vmatprep.subr.mxu0 0.0
        %4186 = vmatpush1.msra.mxu0 0.0
        %4187 = vmatprep.subr.mxu0 0.0
        %4188 = vmatpush1.msra.mxu0 0.0
        %4189 = vmatprep.subr.mxu0 0.0
        %4190 = vmatpush1.msra.mxu0 0.0
        %4191 = vmatprep.subr.mxu0 0.0
        %4192 = vmatpush1.msra.mxu0 0.0
        %4193 = vmatprep.subr.mxu0 0.0
        %4194 = vmatpush1.msra.mxu0 0.0
        %4195 = vmatprep.subr.mxu0 0.0
        %4196 = vmatpush1.msra.mxu0 0.0
        %4197 = vmatprep.subr.mxu0 0.0
        %4198 = vmatpush1.msra.mxu0 0.0
        %4199 = vmatprep.subr.mxu0 0.0
        %4200 = vmatpush1.msra.mxu0 0.0
        %4201 = vmatprep.subr.mxu0 0.0
        %4202 = vmatpush1.msra.mxu0 0.0
        %4203 = vmatprep.subr.mxu0 0.0
        %4204 = vmatpush1.msra.mxu0 0.0
        %4205 = vmatprep.subr.mxu0 0.0
        %4206 = vmatpush1.msra.mxu0 0.0
        %4207 = vmatprep.subr.mxu0 0.0
        %4208 = vmatpush1.msra.mxu0 0.0
        %4209 = vmatprep.subr.mxu0 0.0
        %4210 = vmatpush1.msra.mxu0 0.0
        %4211 = vmatprep.subr.mxu0 0.0
        %4212 = vmatpush1.msra.mxu0 0.0
        %4213 = vmatprep.subr.mxu0 0.0
        %4214 = vmatpush1.msra.mxu0 0.0
        %4215 = vmatprep.subr.mxu0 0.0
        %4216 = vmatpush1.msra.mxu0 0.0
        %4217 = vmatprep.subr.mxu0 0.0
        %4218 = vmatpush1.msra.mxu0 0.0
        %4219 = vmatprep.subr.mxu0 0.0
        %4220 = vmatpush1.msra.mxu0 0.0
        %4221 = vmatprep.subr.mxu0 0.0
        %4222 = vmatpush1.msra.mxu0 0.0
        %4223 = vmatprep.mubr.f32.mxu0 0.0
        %4224 = vmatmul.mubr.f32.gmra.mrb[0].mxu0 %v4151
        %v4225 = vpop.f32.mrb[0].mxu0
        %v4226 = vadd.f32 %v4148, %v4225
        %v4227 = vpop.f32.mrb[0].mxu0
        %4228 = vmatprep.mubr.f32.mxu0 0.0
        %4229 = vmatmul.mubr.f32.gmra.mrb[0].mxu0 %v4154
        %v4230 = vpop.f32.mrb[0].mxu0
        %v4231 = vadd.f32 %v4148, %v4230
        %v4232 = vpop.f32.mrb[0].mxu0
        %4233 = vmatprep.mubr.f32.mxu0 0.0
        %4234 = vmatmul.mubr.f32.gmra.mrb[0].mxu0 %v4157
        %v4235 = vpop.f32.mrb[0].mxu0
        %v4236 = vadd.f32 %v4148, %v4235
        %v4237 = vpop.f32.mrb[0].mxu0
        %4238 = vdwg.mxu0
        %v4239 = vmul.f32 %v4226, 0.5
        %v4240 = vmul.f32 %v4231, 0.5
        %v4241 = vmul.f32 %v4236, 0.5
        %v4242 = vmul.f32 %v4226, 0.70710677
        %v4243 = vmul.f32 %v4231, 0.70710677
        %v4244 = vmul.f32 %v4236, 0.70710677
        %v4245 = verf.f32.pop %v4242
        %v4246 = verf.f32.pop %v4243
        %v4247 = verf.f32.pop %v4244
        %v4248 = vadd.f32 %v4245, 1.0
        %v4249 = vadd.f32 %v4246, 1.0
        %v4250 = vadd.f32 %v4247, 1.0
        %v4251 = vmul.f32 %v4239, %v4248
        %v4252 = vmul.f32 %v4240, %v4249
        %v4253 = vmul.f32 %v4241, %v4250
        %v4254 = vld [vmem:[%s59] sm:$0xff]
        %v4255 = vld [vmem:[%s59 + $0x8] sm:$0xff]
        %v4256 = vld [vmem:[%s59 + $0x10] sm:$0xff]
        %v4257 = vld [vmem:[%s59 + $0x18] sm:$0xff]
        %v4258 = vld [vmem:[%s59 + $0x20] sm:$0xff]
        %v4259 = vld [vmem:[%s59 + $0x28] sm:$0xff]
        %v4260 = vld [vmem:[%s59 + $0x30] sm:$0xff]
        %v4261 = vld [vmem:[%s59 + $0x38] sm:$0xff]
        %v4262 = vld [vmem:[%s61] sm:$0x1]
        %v4264 = vlaneseq
        %v4265 = vshrl.u32 %v4264, 7
        %v4266 = vsub.s32 0, %v4265
        %v4267 = vrot.slane %v4262, %v4266
        %v4270 = vsel %vm2729, %v4251, 0
        %v4273 = vsel %vm2729, %v4252, 0
        %v4276 = vsel %vm2729, %v4253, 0
        %4278 = vmatprep.subr.mxu0 0.0
        %4279 = vmatpush1.msra.mxu0 %v4254
        %4280 = vmatprep.subr.mxu0 0.0
        %4281 = vmatpush1.msra.mxu0 %v4255
        %4282 = vmatprep.subr.mxu0 0.0
        %4283 = vmatpush1.msra.mxu0 %v4256
        %4284 = vmatprep.subr.mxu0 0.0
        %4285 = vmatpush1.msra.mxu0 %v4257
        %4286 = vmatprep.subr.mxu0 0.0
        %4287 = vmatpush1.msra.mxu0 %v4258
        %4288 = vmatprep.subr.mxu0 0.0
        %4289 = vmatpush1.msra.mxu0 %v4259
        %4290 = vmatprep.subr.mxu0 0.0
        %4291 = vmatpush1.msra.mxu0 %v4260
        %4292 = vmatprep.subr.mxu0 0.0
        %4293 = vmatpush1.msra.mxu0 %v4261
        %4294 = vmatprep.subr.mxu0 0.0
        %4295 = vmatpush1.msra.mxu0 0.0
        %4296 = vmatprep.subr.mxu0 0.0
        %4297 = vmatpush1.msra.mxu0 0.0
        %4298 = vmatprep.subr.mxu0 0.0
        %4299 = vmatpush1.msra.mxu0 0.0
        %4300 = vmatprep.subr.mxu0 0.0
        %4301 = vmatpush1.msra.mxu0 0.0
        %4302 = vmatprep.subr.mxu0 0.0
        %4303 = vmatpush1.msra.mxu0 0.0
        %4304 = vmatprep.subr.mxu0 0.0
        %4305 = vmatpush1.msra.mxu0 0.0
        %4306 = vmatprep.subr.mxu0 0.0
        %4307 = vmatpush1.msra.mxu0 0.0
        %4308 = vmatprep.subr.mxu0 0.0
        %4309 = vmatpush1.msra.mxu0 0.0
        %4310 = vmatprep.subr.mxu0 0.0
        %4311 = vmatpush1.msra.mxu0 0.0
        %4312 = vmatprep.subr.mxu0 0.0
        %4313 = vmatpush1.msra.mxu0 0.0
        %4314 = vmatprep.subr.mxu0 0.0
        %4315 = vmatpush1.msra.mxu0 0.0
        %4316 = vmatprep.subr.mxu0 0.0
        %4317 = vmatpush1.msra.mxu0 0.0
        %4318 = vmatprep.subr.mxu0 0.0
        %4319 = vmatpush1.msra.mxu0 0.0
        %4320 = vmatprep.subr.mxu0 0.0
        %4321 = vmatpush1.msra.mxu0 0.0
        %4322 = vmatprep.subr.mxu0 0.0
        %4323 = vmatpush1.msra.mxu0 0.0
        %4324 = vmatprep.subr.mxu0 0.0
        %4325 = vmatpush1.msra.mxu0 0.0
        %4326 = vmatprep.subr.mxu0 0.0
        %4327 = vmatpush1.msra.mxu0 0.0
        %4328 = vmatprep.subr.mxu0 0.0
        %4329 = vmatpush1.msra.mxu0 0.0
        %4330 = vmatprep.subr.mxu0 0.0
        %4331 = vmatpush1.msra.mxu0 0.0
        %4332 = vmatprep.subr.mxu0 0.0
        %4333 = vmatpush1.msra.mxu0 0.0
        %4334 = vmatprep.subr.mxu0 0.0
        %4335 = vmatpush1.msra.mxu0 0.0
        %4336 = vmatprep.subr.mxu0 0.0
        %4337 = vmatpush1.msra.mxu0 0.0
        %4338 = vmatprep.subr.mxu0 0.0
        %4339 = vmatpush1.msra.mxu0 0.0
        %4340 = vmatprep.subr.mxu0 0.0
        %4341 = vmatpush1.msra.mxu0 0.0
        %4342 = vmatprep.mubr.f32.mxu0 0.0
        %4343 = vmatmul.mubr.f32.gmra.mrb[0].mxu0 %v4270
        %v4344 = vpop.f32.mrb[0].mxu0
        %v4345 = vadd.f32 %v4267, %v4344
        %v4346 = vpop.f32.mrb[0].mxu0
        %4347 = vmatprep.mubr.f32.mxu0 0.0
        %4348 = vmatmul.mubr.f32.gmra.mrb[0].mxu0 %v4273
        %v4349 = vpop.f32.mrb[0].mxu0
        %v4350 = vpop.f32.mrb[0].mxu0
        %4351 = vmatprep.mubr.f32.mxu0 0.0
        %4352 = vmatmul.mubr.f32.gmra.mrb[0].mxu0 %v4276
        %v4353 = vpop.f32.mrb[0].mxu0
        %v4354 = vpop.f32.mrb[0].mxu0
        %4355 = vdwg.mxu0
        %v4356 = vadd.f32 %v4345, %v4067
        %v4357 = vld [vmem:[%s63] sm:$0x1]
        %v4358 = vld [vmem:[%s65] sm:$0x1]
        %vm4359 = vcmask 253952
        %v4360 = vsel %vm4359, %v4356, 0.0
        %4361 = vadd.xlane.f32.xlu0 %v4360
        %v4362 = vpop.xlane.xlu0 %4361
        %v4363 = vmul.f32 %v4362, %v1219
        %v4364 = vsub.f32 %v4356, %v4363
        %v4365 = vmul.f32 %v4364, %v4364
        %v4366 = vsel %vm4359, %v4365, 0.0
        %4367 = vadd.xlane.f32.xlu0 %v4366
        %v4368 = vpop.xlane.xlu0 %4367
        %v4369 = vmul.f32 %v4368, %v1219
        %v4370 = vadd.f32 %v4369, 1e-05
        %v4371 = vrsqrt.pop %v4370
        %v4372 = vmul.f32 %v4364, %v4371
        %v4373 = vmul.f32 %v4372, %v4357
        %v4374 = vadd.f32 %v4373, %v4358
        %v4375 = vld [vmem:[%s67] sm:$0xff]
        %v4376 = vld [vmem:[%s67 + $0x8] sm:$0xff]
        %v4377 = vld [vmem:[%s67 + $0x10] sm:$0xff]
        %v4378 = vld [vmem:[%s67 + $0x18] sm:$0xff]
        %v4379 = vld [vmem:[%s69] sm:$0x1]
        %v4381 = vsel %vm1212, %v4374, 0
        %4383 = vmatprep.subr.mxu0 0.0
        %4384 = vmatpush1.msra.mxu0 %v4375
        %4385 = vmatprep.subr.mxu0 0.0
        %4386 = vmatpush1.msra.mxu0 %v4376
        %4387 = vmatprep.subr.mxu0 0.0
        %4388 = vmatpush1.msra.mxu0 %v4377
        %4389 = vmatprep.subr.mxu0 0.0
        %4390 = vmatpush1.msra.mxu0 %v4378
        %4391 = vmatprep.subr.mxu0 0.0
        %4392 = vmatpush1.msra.mxu0 0.0
        %4393 = vmatprep.subr.mxu0 0.0
        %4394 = vmatpush1.msra.mxu0 0.0
        %4395 = vmatprep.subr.mxu0 0.0
        %4396 = vmatpush1.msra.mxu0 0.0
        %4397 = vmatprep.subr.mxu0 0.0
        %4398 = vmatpush1.msra.mxu0 0.0
        %4399 = vmatprep.subr.mxu0 0.0
        %4400 = vmatpush1.msra.mxu0 0.0
        %4401 = vmatprep.subr.mxu0 0.0
        %4402 = vmatpush1.msra.mxu0 0.0
        %4403 = vmatprep.subr.mxu0 0.0
        %4404 = vmatpush1.msra.mxu0 0.0
        %4405 = vmatprep.subr.mxu0 0.0
        %4406 = vmatpush1.msra.mxu0 0.0
        %4407 = vmatprep.subr.mxu0 0.0
        %4408 = vmatpush1.msra.mxu0 0.0
        %4409 = vmatprep.subr.mxu0 0.0
        %4410 = vmatpush1.msra.mxu0 0.0
        %4411 = vmatprep.subr.mxu0 0.0
        %4412 = vmatpush1.msra.mxu0 0.0
        %4413 = vmatprep.subr.mxu0 0.0
        %4414 = vmatpush1.msra.mxu0 0.0
        %4415 = vmatprep.subr.mxu0 0.0
        %4416 = vmatpush1.msra.mxu0 0.0
        %4417 = vmatprep.subr.mxu0 0.0
        %4418 = vmatpush1.msra.mxu0 0.0
        %4419 = vmatprep.subr.mxu0 0.0
        %4420 = vmatpush1.msra.mxu0 0.0
        %4421 = vmatprep.subr.mxu0 0.0
        %4422 = vmatpush1.msra.mxu0 0.0
        %4423 = vmatprep.subr.mxu0 0.0
        %4424 = vmatpush1.msra.mxu0 0.0
        %4425 = vmatprep.subr.mxu0 0.0
        %4426 = vmatpush1.msra.mxu0 0.0
        %4427 = vmatprep.subr.mxu0 0.0
        %4428 = vmatpush1.msra.mxu0 0.0
        %4429 = vmatprep.subr.mxu0 0.0
        %4430 = vmatpush1.msra.mxu0 0.0
        %4431 = vmatprep.subr.mxu0 0.0
        %4432 = vmatpush1.msra.mxu0 0.0
        %4433 = vmatprep.subr.mxu0 0.0
        %4434 = vmatpush1.msra.mxu0 0.0
        %4435 = vmatprep.subr.mxu0 0.0
        %4436 = vmatpush1.msra.mxu0 0.0
        %4437 = vmatprep.subr.mxu0 0.0
        %4438 = vmatpush1.msra.mxu0 0.0
        %4439 = vmatprep.subr.mxu0 0.0
        %4440 = vmatpush1.msra.mxu0 0.0
        %4441 = vmatprep.subr.mxu0 0.0
        %4442 = vmatpush1.msra.mxu0 0.0
        %4443 = vmatprep.subr.mxu0 0.0
        %4444 = vmatpush1.msra.mxu0 0.0
        %4445 = vmatprep.subr.mxu0 0.0
        %4446 = vmatpush1.msra.mxu0 0.0
        %4447 = vmatprep.mubr.f32.mxu0 0.0
        %4448 = vmatmul.mubr.f32.gmra.mrb[0].mxu0 %v4381
        %v4449 = vpop.f32.mrb[0].mxu0
        %v4450 = vadd.f32 %v4379, %v4449
        %v4451 = vpop.f32.mrb[0].mxu0
        %4452 = vdwg.mxu0
        %vm4453 = vcmask 73728
        %4454 = vst.msk [vmem:[%s1062] sm:$0x1] %vm4453, %v4450
        %s4455 = sand.u32 %s833, 1
        %s4456 = scalar_lea.sflag [#allocation3], %s4455
        %s4457 = sand.u32 %s833, 1
        %s4458 = scalar_lea.vmem [#allocation2], %s4457
        // Predicated region
        $region161: #{_lambda_.1} parent=159 // pred_check
          %p4459 = pneg %p843
        $region162: #{_lambda_.1} parent=159 // pred_check_branch
          %4461 = sbr.rel (%p4459) target = $region164
        $region163: #{_lambda_.1} parent=159 // pred_region
          %s4463 = ssub.s32 16, 16
          %4464 = vsyncadd %s4456, %s4463
          %s4465 = smul.addr %s85, 16
          %s4466 = scalar_lea.hbm %s71, %s4465
          %s4468 = sshll.u32 %s4458, 4
          %s4469 = int_to_ptr.vmem [resolvable:$true] %s4468
          %4471 = dma.vmem_to_hbm [thread:$0]  %s4469, 16, %s4466, %s4456
        $region164: #{_lambda_.1} parent=159 // pred_fallthru
          _
      $region160: #{_lambda_.1} parent=5 // pred_fallthru
        _
      %p4472 = scmp.le.s32.totalorder 2, %s80
      // Predicated region
      $region165: #{_lambda_.1} parent=5 // pred_check
        %p4473 = pneg %p4472
      $region166: #{_lambda_.1} parent=5 // pred_check_branch
        %4475 = sbr.rel (%p4473) target = $region168
      $region167: #{_lambda_.1} parent=5 // pred_region
        %s4476 = ssub.s32 %s80, 2
        // Predicated region
        $region169: #{_lambda_.1} parent=167 // pred_check
          %p4477 = pneg %p849
        $region170: #{_lambda_.1} parent=167 // pred_check_branch
          %4479 = sbr.rel (%p4477) target = $region172
        $region171: #{_lambda_.1} parent=167 // pred_region
          %s4480 = sand.u32 %s834, 1
          %s4481 = scalar_lea.sflag [#allocation3], %s4480
          %s4482 = sand.u32 %s834, 1
          %s4483 = scalar_lea.vmem [#allocation2], %s4482
          %4484 = dma.done %s4481, 16
        $region172: #{_lambda_.1} parent=167 // pred_fallthru
          _
      $region168: #{_lambda_.1} parent=5 // pred_fallthru
        _
    $region6: #{_lambda_.1} parent=1 // loop_footer
      %s84 = sadd.s32 1, %s80
    $region7: #{_lambda_.1} parent=1 // loop_footer_branch
      %79 = sbr.rel target = $region3
    $region8: #{_lambda_.1} parent=1 // loop_exit
      _
    %4485 = vsyncpa [#allocation3], 1
    %s4486 = scalar_lea.sflag [#allocation3], 1
    %4487 = vsyncpa %s4486, 1

</llo_original>
